<compile_context>
chip_gen: v7x
topology: tpu7x:2x2x1
jax: 0.10.0
libtpu: 0.0.40
codegen_flags: <defaults>
</compile_context>

<pallas_src>
import math
import functools

import numpy as np
import jax
import jax.numpy as jnp
from jax.experimental import pallas as pl
from jax.experimental.pallas import tpu as pltpu

D_MODEL = 32
N_HEADS = 4
RANK_U = 4
DK = D_MODEL // N_HEADS
LN_EPS = 1e-5
NEG_INF = -1e30
HIGH = jax.lax.Precision.HIGHEST


# ----------------------------- in-kernel helpers ----------------------------

def _bitlinear(x, w_codes_t, w_alpha, bias=None):
    """quant4(x) @ ternary(w).T (+ bias) with scales factored off the MXU.

    w_codes_t : (in, out) ternary signs {-1,0,+1}, bf16 (exact), pre-transposed.
    w_alpha   : (1, out)  per-output scale  mean(|w|, axis=in).
    The integer-code matmul is exact (codes in [-8,7], signs in {-1,0,+1},
    K <= 128 => f32 accumulation exact); the rank-1 scale is applied after.
    """
    max_abs = jnp.maximum(jnp.max(jnp.abs(x), axis=-1, keepdims=True), 1e-6)
    codes = jnp.clip(jnp.round(x / max_abs * 7.0), -8.0, 7.0)
    acc = jnp.dot(codes.astype(jnp.bfloat16), w_codes_t,
                  preferred_element_type=jnp.float32)
    y = acc * (max_abs * (1.0 / 7.0)) * w_alpha
    if bias is not None:
        y = y + bias
    return y


def _layernorm(x, g, b):
    mu = jnp.mean(x, axis=-1, keepdims=True)
    xc = x - mu
    var = jnp.mean(xc * xc, axis=-1, keepdims=True)
    return xc * jax.lax.rsqrt(var + LN_EPS) * g + b


def _gelu_exact(x):
    # nn.GELU() default == exact erf formulation (kept for strict parity).
    return 0.5 * x * (1.0 + jax.lax.erf(x * (1.0 / math.sqrt(2.0))))


# ------------------------------- fused kernel --------------------------------

def fused_block_kernel(x_ref, wqo_ref, w1_ref, w2_ref, pu_ref, trig_ref,
                       mask_ref, vec_ref, o_ref, y_scr, *, B, N, H, dk, r):
    D = H * dk
    x = x_ref[...]                                             # (B*N, D) f32

    def vec(row, width):                                       # packed vectors
        return vec_ref[row:row + 1, 0:width]                   # (1, width)

    # shared Wq = Wk = Wv BitLinear projection (q == k == v before rotary)
    qkv = _bitlinear(x, wqo_ref[0:D, :], vec(1, D), vec(0, D))

    # rotary + per-head low-rank U + 1/sqrt(dk) score scale, all folded into
    # two position-modulated block-diagonal matmuls (no permutation matmuls):
    #   qu = (qkv * cos) @ P1 + (qkv * sin) @ P2
    qkv3 = qkv.reshape(B, N, D)
    qc = (qkv3 * trig_ref[0:N, :]).reshape(B * N, D)           # cos table (N,D)
    qs = (qkv3 * trig_ref[N:2 * N, :]).reshape(B * N, D)       # sin table (N,D)
    qu = (jnp.dot(qc, pu_ref[0:D, :], precision=HIGH,
                  preferred_element_type=jnp.float32)
          + jnp.dot(qs, pu_ref[D:2 * D, :], precision=HIGH,
                    preferred_element_type=jnp.float32))       # (B*N, H*r)

    # attention: per head, one 2-D Gram matmul over the whole (B*N) slab;
    # the additive mask is block-diagonal over the batch (cross-batch entries
    # = -1e30 -> exp underflows to exactly 0), so no batched einsum is needed.
    mask = mask_ref[...]                                       # (B*N, B*N)
    for h in range(H):                                         # static, H = 4
        qh = qu[:, h * r:(h + 1) * r]                          # (B*N, r)
        att = jnp.einsum("nr,mr->nm", qh, qh, precision=HIGH,
                         preferred_element_type=jnp.float32) + mask
        att = att - jnp.max(att, axis=-1, keepdims=True)
        p = jnp.exp(att)
        p = p / jnp.sum(p, axis=-1, keepdims=True)             # exact divide
        vh = qkv[:, h * dk:(h + 1) * dk]                       # v = pre-rotary
        y_scr[:, h * dk:(h + 1) * dk] = jnp.dot(
            p, vh, precision=HIGH, preferred_element_type=jnp.float32)

    # output projection (no bias), residual, LN1
    att_out = _bitlinear(y_scr[...], wqo_ref[D:2 * D, :], vec(2, D))
    x1 = _layernorm(x + att_out, vec(3, D), vec(4, D))

    # FFN: BitLinear -> GELU -> BitLinear, residual, LN2
    hdn = _gelu_exact(_bitlinear(x1, w1_ref[...], vec(5, 4 * D), vec(6, 4 * D)))
    ff = _bitlinear(hdn, w2_ref[...], vec(7, D), vec(8, D))
    o_ref[...] = _layernorm(x1 + ff, vec(9, D), vec(10, D))


# --------------------------- one-time host-side prep -------------------------

def ternarize(w):
    """Hoisted ternary_weight(): (in, out) {-1,0,+1} codes (bf16, exact) and
    the per-output alpha = mean(|w|, axis=in)."""
    w = jnp.asarray(w, jnp.float32)
    aw = jnp.abs(w)
    thresh = 0.05 * jnp.mean(aw)
    sgn = jnp.where(aw < thresh, 0.0, jnp.sign(w))
    alpha = jnp.mean(aw, axis=1)
    return sgn.T.astype(jnp.bfloat16), alpha.astype(jnp.float32)


def prepare_block_params(p, *, seq_len):
    """Run ONCE per weight set: ternarize+transpose BitLinear weights, fold
    rotary/U/scale into constants, and pack small vectors into one operand."""
    D, H, dk, r = D_MODEL, N_HEADS, DK, RANK_U
    half = dk // 2

    wqkv_c, wqkv_a = ternarize(p["wqkv"])
    wo_c, wo_a = ternarize(p["wo"])
    w1_c, w1_a = ternarize(p["w1"])
    w2_c, w2_a = ternarize(p["w2"])
    wqo_c = jnp.concatenate([wqkv_c, wo_c], axis=0)             # (2D, D) bf16

    # rotary tables, duplicated per (even,odd) pair and tiled over heads
    inv = 1.0 / (10000.0 ** (jnp.arange(half) / half))
    ang = jnp.arange(seq_len)[:, None] * inv                    # (N, half)
    cosd = jnp.repeat(jnp.cos(ang), 2, axis=1)                  # (N, dk)
    sind = jnp.repeat(jnp.sin(ang), 2, axis=1)
    trig = jnp.concatenate([jnp.tile(cosd, (1, H)),
                            jnp.tile(sind, (1, H))], axis=0)    # (2N, D)

    # rotary pairing + U + 1/sqrt(dk) (valid since q == k) folded into P1, P2
    u = jnp.asarray(p["u"], jnp.float32) * (dk ** -0.25)
    p1 = jnp.stack([u[:half], u[half:]], axis=1).reshape(dk, r)
    p2 = jnp.stack([u[half:], -u[:half]], axis=1).reshape(dk, r)
    eye_h = jnp.eye(H, dtype=jnp.float32)
    pu = jnp.concatenate([jnp.kron(eye_h, p1), jnp.kron(eye_h, p2)], axis=0)

    # all small per-channel vectors packed into one (11, 4D) f32 operand
    def row(v):
        v = jnp.asarray(v, jnp.float32).reshape(-1)
        return jnp.pad(v, (0, 4 * D - v.shape[0]))
    vecs = jnp.stack([
        row(p["bqkv"]), row(wqkv_a), row(wo_a),
        row(p["g1"]), row(p["be1"]),
        row(w1_a), row(p["b1"]),
        row(w2_a), row(p["b2"]),
        row(p["g2"]), row(p["be2"]),
    ])

    return dict(wqo_c=wqo_c, w1_c=w1_c, w2_c=w2_c,
                pu=pu.astype(jnp.float32), trig=trig.astype(jnp.float32),
                vecs=vecs)


def build_attention_mask(b, n, mask=None):
    """(B*N, B*N) additive mask: user mask on the block diagonal, -1e30 on
    cross-batch blocks (lets per-head attention run as one 2-D matmul)."""
    blocks = np.kron(np.eye(b, dtype=np.float32), np.ones((n, n), np.float32))
    big = np.where(blocks > 0.0, 0.0, NEG_INF).astype(np.float32)
    if mask is not None:
        m = np.maximum(np.asarray(mask, np.float32).reshape(n, n), NEG_INF)
        big = big + np.kron(np.eye(b, dtype=np.float32), m).astype(np.float32)
    return jnp.asarray(big, jnp.float32)


# ------------------------------ jitted forward -------------------------------

@functools.partial(jax.jit, static_argnames=("b", "n"))
def _pallas_block_2d(x2d, wqo_c, w1_c, w2_c, pu, trig, mask_big, vecs, *, b, n):
    vmem = lambda: pl.BlockSpec(memory_space=pltpu.MemorySpace.VMEM)
    args = (x2d, wqo_c, w1_c, w2_c, pu, trig, mask_big, vecs)
    return pl.pallas_call(
        functools.partial(fused_block_kernel,
                          B=b, N=n, H=N_HEADS, dk=DK, r=RANK_U),
        out_shape=jax.ShapeDtypeStruct((b * n, D_MODEL), jnp.float32),
        in_specs=[vmem() for _ in args],
        out_specs=vmem(),
        scratch_shapes=[pltpu.VMEM((b * n, D_MODEL), jnp.float32)],
    )(*args)


def pallas_block(x, prepared, mask_big):
    B, N, D = x.shape
    out = _pallas_block_2d(x.reshape(B * N, D), prepared["wqo_c"],
                           prepared["w1_c"], prepared["w2_c"], prepared["pu"],
                           prepared["trig"], mask_big, prepared["vecs"],
                           b=B, n=N)
    return out.reshape(B, N, D)


# ---------------------------- pure-JAX reference ----------------------------

def ref_quant4(x):
    ma = jnp.maximum(jnp.max(jnp.abs(x), axis=-1, keepdims=True), 1e-6)
    q = jnp.clip(jnp.round(x / ma * 7.0), -8.0, 7.0)
    return q * ma / 7.0


def ref_ternary(w):
    aw = jnp.abs(w)
    thresh = 0.05 * jnp.mean(aw)
    sgn = jnp.where(aw < thresh, 0.0, jnp.sign(w))
    return sgn * jnp.mean(aw, axis=1, keepdims=True)


def ref_bitlinear(x, w, b=None):
    y = jnp.matmul(ref_quant4(x), ref_ternary(w).T, precision=HIGH)
    return y if b is None else y + b


def ref_rotary(t, n):
    half = t.shape[-1] // 2
    inv = 1.0 / (10000.0 ** (jnp.arange(half) / half))
    ang = jnp.arange(n)[:, None] * inv
    c, s = jnp.cos(ang), jnp.sin(ang)
    t1, t2 = t[..., ::2], t[..., 1::2]
    return jnp.concatenate([t1 * c - t2 * s, t1 * s + t2 * c], -1)


def ref_ln(x, g, b):
    mu = jnp.mean(x, axis=-1, keepdims=True)
    var = jnp.mean(jnp.square(x - mu), axis=-1, keepdims=True)
    return (x - mu) * jax.lax.rsqrt(var + LN_EPS) * g + b


def ref_block(x, p, mask=None):
    B, N, D = x.shape
    h, dk = N_HEADS, DK
    q = ref_bitlinear(x, p["wqkv"], p["bqkv"]).reshape(B, N, h, dk)
    q = q.transpose(0, 2, 1, 3)
    k, v = q, q                                      # shared BitLinear module
    qr, kr = ref_rotary(q, N), ref_rotary(k, N)
    qu = jnp.matmul(qr, p["u"], precision=HIGH)
    ku = jnp.matmul(kr, p["u"], precision=HIGH)
    att = jnp.matmul(qu, jnp.swapaxes(ku, -2, -1), precision=HIGH) / math.sqrt(dk)
    if mask is not None:
        att = att + mask
    att = jax.nn.softmax(att, axis=-1)
    y = jnp.matmul(att, v, precision=HIGH).transpose(0, 2, 1, 3).reshape(B, N, D)
    y = ref_bitlinear(y, p["wo"])
    x = ref_ln(x + y, p["g1"], p["be1"])
    ff = ref_bitlinear(x, p["w1"], p["b1"])
    ff = 0.5 * ff * (1.0 + jax.lax.erf(ff / math.sqrt(2.0)))
    ff = ref_bitlinear(ff, p["w2"], p["b2"])
    return ref_ln(x + ff, p["g2"], p["be2"])


# ------------------------------------ main -----------------------------------

if __name__ == "__main__":
    key = jax.random.PRNGKey(0)
    ks = jax.random.split(key, 8)
    B, N = 2, 8
    D, H4 = D_MODEL, 4 * D_MODEL

    params = {
        # shared BitLinear for Wq/Wk/Wv (bias init zeros per module __init__)
        "wqkv": jax.random.normal(ks[0], (D, D), jnp.float32) / math.sqrt(D),
        "bqkv": jnp.zeros((D,), jnp.float32),
        # orthogonal low-rank projection U (dk, r)
        "u": jnp.linalg.qr(jax.random.normal(ks[1], (DK, RANK_U), jnp.float32))[0],
        # Wo (no bias)
        "wo": jax.random.normal(ks[2], (D, D), jnp.float32) / math.sqrt(D),
        # LayerNorms (default init)
        "g1": jnp.ones((D,), jnp.float32), "be1": jnp.zeros((D,), jnp.float32),
        "g2": jnp.ones((D,), jnp.float32), "be2": jnp.zeros((D,), jnp.float32),
        # FFN
        "w1": jax.random.normal(ks[3], (H4, D), jnp.float32) / math.sqrt(D),
        "b1": jnp.zeros((H4,), jnp.float32),
        "w2": jax.random.normal(ks[4], (D, H4), jnp.float32) / math.sqrt(H4),
        "b2": jnp.zeros((D,), jnp.float32),
    }

    x = jax.random.normal(ks[5], (B, N, D), jnp.float32)

    # one-time prep (ternarization, constant folding, operand packing)
    prepared = prepare_block_params(params, seq_len=N)
    mask_big = build_attention_mask(B, N, mask=None)   # no causal mask

    out = jax.block_until_ready(pallas_block(x, prepared, mask_big))
    ref = jax.block_until_ready(ref_block(x, params, mask=None))

    assert out.shape == (B, N, D) and out.dtype == jnp.float32
    assert bool(jnp.all(jnp.isfinite(out)))
    np.testing.assert_allclose(np.asarray(out), np.asarray(ref),
                               atol=5e-2, rtol=5e-2)
    print("KERNEL_OK")
</pallas_src>

<mosaic_0001>
module attributes {stable_mosaic.version = 11 : i64} {
  func.func @fused_block_kernel(%arg0: memref<16x32xf32, #tpu.memory_space<vmem>>, %arg1: memref<64x32xbf16, #tpu.memory_space<vmem>>, %arg2: memref<32x128xbf16, #tpu.memory_space<vmem>>, %arg3: memref<128x32xbf16, #tpu.memory_space<vmem>>, %arg4: memref<64x16xf32, #tpu.memory_space<vmem>>, %arg5: memref<16x32xf32, #tpu.memory_space<vmem>>, %arg6: memref<16x16xf32, #tpu.memory_space<vmem>>, %arg7: memref<11x128xf32, #tpu.memory_space<vmem>>, %arg8: memref<16x32xf32, #tpu.memory_space<vmem>>, %arg9: memref<16x32xf32, #tpu.memory_space<vmem>>) attributes {dimension_semantics = [], scalar_prefetch = 0 : i64, scratch_operands = 1 : i64, tpu.core_type = #tpu.core_type<tc>} {
    %c0 = arith.constant 0 : index
    %c0_0 = arith.constant 0 : index
    %0 = vector.load %arg0[%c0, %c0_0] : memref<16x32xf32, #tpu.memory_space<vmem>>, vector<16x32xf32>
    %c0_1 = arith.constant 0 : index
    %c0_2 = arith.constant 0 : index
    %1 = vector.load %arg1[%c0_1, %c0_2] : memref<64x32xbf16, #tpu.memory_space<vmem>>, vector<32x32xbf16>
    %c1 = arith.constant 1 : index
    %c0_3 = arith.constant 0 : index
    %2 = vector.load %arg7[%c1, %c0_3] : memref<11x128xf32, #tpu.memory_space<vmem>>, vector<1x32xf32>
    %c0_4 = arith.constant 0 : index
    %c0_5 = arith.constant 0 : index
    %3 = vector.load %arg7[%c0_4, %c0_5] : memref<11x128xf32, #tpu.memory_space<vmem>>, vector<1x32xf32>
    %4 = math.absf %0 : vector<16x32xf32>
    %cst = arith.constant dense<0xFF800000> : vector<16xf32>
    %5 = vector.multi_reduction <maximumf>, %4, %cst [1] : vector<16x32xf32> to vector<16xf32>
    %6 = vector.shape_cast %5 : vector<16xf32> to vector<16x1xf32>
    %cst_6 = arith.constant 9.99999997E-7 : f32
    %7 = vector.broadcast %cst_6 : f32 to vector<16x1xf32>
    %8 = arith.maximumf %6, %7 : vector<16x1xf32>
    %9 = vector.broadcast %8 : vector<16x1xf32> to vector<16x32xf32>
    %10 = arith.divf %0, %9 : vector<16x32xf32>
    %cst_7 = arith.constant 7.000000e+00 : f32
    %11 = vector.broadcast %cst_7 : f32 to vector<16x32xf32>
    %12 = arith.mulf %10, %11 : vector<16x32xf32>
    %13 = math.roundeven %12 : vector<16x32xf32>
    %cst_8 = arith.constant -8.000000e+00 : f32
    %cst_9 = arith.constant 7.000000e+00 : f32
    %14 = vector.broadcast %cst_8 : f32 to vector<16x32xf32>
    %15 = arith.maximumf %14, %13 : vector<16x32xf32>
    %16 = vector.broadcast %cst_9 : f32 to vector<16x32xf32>
    %17 = arith.minimumf %16, %15 : vector<16x32xf32>
    %18 = arith.truncf %17 : vector<16x32xf32> to vector<16x32xbf16>
    %cst_10 = arith.constant dense<0.000000e+00> : vector<16x32xf32>
    %19 = tpu.matmul %18, %1, %cst_10 {dimension_numbers = #tpu.dot_dimension_numbers<[1], [0], [0], [1], [0, 0, 1, 1], [], []>} : vector<16x32xbf16>, vector<32x32xbf16>, vector<16x32xf32> -> vector<16x32xf32>
    %cst_11 = arith.constant 0.142857149 : f32
    %20 = vector.broadcast %cst_11 : f32 to vector<16x1xf32>
    %21 = arith.mulf %8, %20 : vector<16x1xf32>
    %22 = vector.broadcast %21 : vector<16x1xf32> to vector<16x32xf32>
    %23 = arith.mulf %19, %22 : vector<16x32xf32>
    %24 = vector.broadcast %2 : vector<1x32xf32> to vector<16x32xf32>
    %25 = arith.mulf %23, %24 : vector<16x32xf32>
    %26 = vector.broadcast %3 : vector<1x32xf32> to vector<16x32xf32>
    %27 = arith.addf %25, %26 : vector<16x32xf32>
    %28 = vector.shape_cast %27 : vector<16x32xf32> to vector<2x8x32xf32>
    %c0_12 = arith.constant 0 : index
    %c0_13 = arith.constant 0 : index
    %29 = vector.load %arg5[%c0_12, %c0_13] : memref<16x32xf32, #tpu.memory_space<vmem>>, vector<8x32xf32>
    %30 = vector.shape_cast %29 : vector<8x32xf32> to vector<1x8x32xf32>
    %31 = vector.broadcast %30 : vector<1x8x32xf32> to vector<2x8x32xf32>
    %32 = arith.mulf %28, %31 : vector<2x8x32xf32>
    %33 = vector.shape_cast %32 : vector<2x8x32xf32> to vector<16x32xf32>
    %c8 = arith.constant 8 : index
    %c0_14 = arith.constant 0 : index
    %34 = vector.load %arg5[%c8, %c0_14] : memref<16x32xf32, #tpu.memory_space<vmem>>, vector<8x32xf32>
    %35 = vector.shape_cast %34 : vector<8x32xf32> to vector<1x8x32xf32>
    %36 = vector.broadcast %35 : vector<1x8x32xf32> to vector<2x8x32xf32>
    %37 = arith.mulf %28, %36 : vector<2x8x32xf32>
    %38 = vector.shape_cast %37 : vector<2x8x32xf32> to vector<16x32xf32>
    %c0_15 = arith.constant 0 : index
    %c0_16 = arith.constant 0 : index
    %39 = vector.load %arg4[%c0_15, %c0_16] : memref<64x16xf32, #tpu.memory_space<vmem>>, vector<32x16xf32>
    %cst_17 = arith.constant dense<0.000000e+00> : vector<16x16xf32>
    %40 = tpu.matmul %33, %39, %cst_17 {dimension_numbers = #tpu.dot_dimension_numbers<[1], [0], [0], [1], [0, 0, 1, 1], [], []>, precision = #tpu.contract_precision<fp32>} : vector<16x32xf32>, vector<32x16xf32>, vector<16x16xf32> -> vector<16x16xf32>
    %c32 = arith.constant 32 : index
    %c0_18 = arith.constant 0 : index
    %41 = vector.load %arg4[%c32, %c0_18] : memref<64x16xf32, #tpu.memory_space<vmem>>, vector<32x16xf32>
    %cst_19 = arith.constant dense<0.000000e+00> : vector<16x16xf32>
    %42 = tpu.matmul %38, %41, %cst_19 {dimension_numbers = #tpu.dot_dimension_numbers<[1], [0], [0], [1], [0, 0, 1, 1], [], []>, precision = #tpu.contract_precision<fp32>} : vector<16x32xf32>, vector<32x16xf32>, vector<16x16xf32> -> vector<16x16xf32>
    %43 = arith.addf %40, %42 : vector<16x16xf32>
    %c0_20 = arith.constant 0 : index
    %c0_21 = arith.constant 0 : index
    %44 = vector.load %arg6[%c0_20, %c0_21] : memref<16x16xf32, #tpu.memory_space<vmem>>, vector<16x16xf32>
    %45 = vector.extract_strided_slice %43 {offsets = [0, 0], sizes = [16, 4], strides = [1, 1]} : vector<16x16xf32> to vector<16x4xf32>
    "tpu.trace_start"() <{level = 10 : i32, message = "nr,mr->nm"}> : () -> ()
    %cst_22 = arith.constant dense<0.000000e+00> : vector<16x16xf32>
    %46 = tpu.matmul %45, %45, %cst_22 {dimension_numbers = #tpu.dot_dimension_numbers<[1], [1], [0], [0], [0, 0, 1, 0], [], []>, precision = #tpu.contract_precision<fp32>} : vector<16x4xf32>, vector<16x4xf32>, vector<16x16xf32> -> vector<16x16xf32>
    "tpu.trace_stop"() : () -> ()
    %47 = arith.addf %46, %44 : vector<16x16xf32>
    %cst_23 = arith.constant dense<0xFF800000> : vector<16xf32>
    %48 = vector.multi_reduction <maximumf>, %47, %cst_23 [1] : vector<16x16xf32> to vector<16xf32>
    %49 = vector.shape_cast %48 : vector<16xf32> to vector<16x1xf32>
    %50 = vector.broadcast %49 : vector<16x1xf32> to vector<16x16xf32>
    %51 = arith.subf %47, %50 : vector<16x16xf32>
    %52 = math.exp %51 : vector<16x16xf32>
    %cst_24 = arith.constant dense<0.000000e+00> : vector<16xf32>
    %53 = vector.multi_reduction <add>, %52, %cst_24 [1] : vector<16x16xf32> to vector<16xf32>
    %54 = vector.shape_cast %53 : vector<16xf32> to vector<16x1xf32>
    %55 = vector.broadcast %54 : vector<16x1xf32> to vector<16x16xf32>
    %56 = arith.divf %52, %55 : vector<16x16xf32>
    %57 = vector.extract_strided_slice %27 {offsets = [0, 0], sizes = [16, 8], strides = [1, 1]} : vector<16x32xf32> to vector<16x8xf32>
    %cst_25 = arith.constant dense<0.000000e+00> : vector<16x8xf32>
    %58 = tpu.matmul %56, %57, %cst_25 {dimension_numbers = #tpu.dot_dimension_numbers<[1], [0], [0], [1], [0, 0, 1, 1], [], []>, precision = #tpu.contract_precision<fp32>} : vector<16x16xf32>, vector<16x8xf32>, vector<16x8xf32> -> vector<16x8xf32>
    %c0_26 = arith.constant 0 : index
    %c0_27 = arith.constant 0 : index
    %59 = vector.load %arg9[%c0_26, %c0_27] : memref<16x32xf32, #tpu.memory_space<vmem>>, vector<16x8xf32>
    tpu.vector_store %arg9[%c0_26, %c0_27], %58 {strides = array<i32>} : memref<16x32xf32, #tpu.memory_space<vmem>>, vector<16x8xf32>,
    %60 = vector.extract_strided_slice %43 {offsets = [0, 4], sizes = [16, 4], strides = [1, 1]} : vector<16x16xf32> to vector<16x4xf32>
    "tpu.trace_start"() <{level = 10 : i32, message = "nr,mr->nm"}> : () -> ()
    %cst_28 = arith.constant dense<0.000000e+00> : vector<16x16xf32>
    %61 = tpu.matmul %60, %60, %cst_28 {dimension_numbers = #tpu.dot_dimension_numbers<[1], [1], [0], [0], [0, 0, 1, 0], [], []>, precision = #tpu.contract_precision<fp32>} : vector<16x4xf32>, vector<16x4xf32>, vector<16x16xf32> -> vector<16x16xf32>
    "tpu.trace_stop"() : () -> ()
    %62 = arith.addf %61, %44 : vector<16x16xf32>
    %cst_29 = arith.constant dense<0xFF800000> : vector<16xf32>
    %63 = vector.multi_reduction <maximumf>, %62, %cst_29 [1] : vector<16x16xf32> to vector<16xf32>
    %64 = vector.shape_cast %63 : vector<16xf32> to vector<16x1xf32>
    %65 = vector.broadcast %64 : vector<16x1xf32> to vector<16x16xf32>
    %66 = arith.subf %62, %65 : vector<16x16xf32>
    %67 = math.exp %66 : vector<16x16xf32>
    %cst_30 = arith.constant dense<0.000000e+00> : vector<16xf32>
    %68 = vector.multi_reduction <add>, %67, %cst_30 [1] : vector<16x16xf32> to vector<16xf32>
    %69 = vector.shape_cast %68 : vector<16xf32> to vector<16x1xf32>
    %70 = vector.broadcast %69 : vector<16x1xf32> to vector<16x16xf32>
    %71 = arith.divf %67, %70 : vector<16x16xf32>
    %72 = vector.extract_strided_slice %27 {offsets = [0, 8], sizes = [16, 8], strides = [1, 1]} : vector<16x32xf32> to vector<16x8xf32>
    %cst_31 = arith.constant dense<0.000000e+00> : vector<16x8xf32>
    %73 = tpu.matmul %71, %72, %cst_31 {dimension_numbers = #tpu.dot_dimension_numbers<[1], [0], [0], [1], [0, 0, 1, 1], [], []>, precision = #tpu.contract_precision<fp32>} : vector<16x16xf32>, vector<16x8xf32>, vector<16x8xf32> -> vector<16x8xf32>
    %c0_32 = arith.constant 0 : index
    %c8_33 = arith.constant 8 : index
    %74 = vector.load %arg9[%c0_32, %c8_33] : memref<16x32xf32, #tpu.memory_space<vmem>>, vector<16x8xf32>
    tpu.vector_store %arg9[%c0_32, %c8_33], %73 {strides = array<i32>} : memref<16x32xf32, #tpu.memory_space<vmem>>, vector<16x8xf32>,
    %75 = vector.extract_strided_slice %43 {offsets = [0, 8], sizes = [16, 4], strides = [1, 1]} : vector<16x16xf32> to vector<16x4xf32>
    "tpu.trace_start"() <{level = 10 : i32, message = "nr,mr->nm"}> : () -> ()
    %cst_34 = arith.constant dense<0.000000e+00> : vector<16x16xf32>
    %76 = tpu.matmul %75, %75, %cst_34 {dimension_numbers = #tpu.dot_dimension_numbers<[1], [1], [0], [0], [0, 0, 1, 0], [], []>, precision = #tpu.contract_precision<fp32>} : vector<16x4xf32>, vector<16x4xf32>, vector<16x16xf32> -> vector<16x16xf32>
    "tpu.trace_stop"() : () -> ()
    %77 = arith.addf %76, %44 : vector<16x16xf32>
    %cst_35 = arith.constant dense<0xFF800000> : vector<16xf32>
    %78 = vector.multi_reduction <maximumf>, %77, %cst_35 [1] : vector<16x16xf32> to vector<16xf32>
    %79 = vector.shape_cast %78 : vector<16xf32> to vector<16x1xf32>
    %80 = vector.broadcast %79 : vector<16x1xf32> to vector<16x16xf32>
    %81 = arith.subf %77, %80 : vector<16x16xf32>
    %82 = math.exp %81 : vector<16x16xf32>
    %cst_36 = arith.constant dense<0.000000e+00> : vector<16xf32>
    %83 = vector.multi_reduction <add>, %82, %cst_36 [1] : vector<16x16xf32> to vector<16xf32>
    %84 = vector.shape_cast %83 : vector<16xf32> to vector<16x1xf32>
    %85 = vector.broadcast %84 : vector<16x1xf32> to vector<16x16xf32>
    %86 = arith.divf %82, %85 : vector<16x16xf32>
    %87 = vector.extract_strided_slice %27 {offsets = [0, 16], sizes = [16, 8], strides = [1, 1]} : vector<16x32xf32> to vector<16x8xf32>
    %cst_37 = arith.constant dense<0.000000e+00> : vector<16x8xf32>
    %88 = tpu.matmul %86, %87, %cst_37 {dimension_numbers = #tpu.dot_dimension_numbers<[1], [0], [0], [1], [0, 0, 1, 1], [], []>, precision = #tpu.contract_precision<fp32>} : vector<16x16xf32>, vector<16x8xf32>, vector<16x8xf32> -> vector<16x8xf32>
    %c0_38 = arith.constant 0 : index
    %c16 = arith.constant 16 : index
    %89 = vector.load %arg9[%c0_38, %c16] : memref<16x32xf32, #tpu.memory_space<vmem>>, vector<16x8xf32>
    tpu.vector_store %arg9[%c0_38, %c16], %88 {strides = array<i32>} : memref<16x32xf32, #tpu.memory_space<vmem>>, vector<16x8xf32>,
    %90 = vector.extract_strided_slice %43 {offsets = [0, 12], sizes = [16, 4], strides = [1, 1]} : vector<16x16xf32> to vector<16x4xf32>
    "tpu.trace_start"() <{level = 10 : i32, message = "nr,mr->nm"}> : () -> ()
    %cst_39 = arith.constant dense<0.000000e+00> : vector<16x16xf32>
    %91 = tpu.matmul %90, %90, %cst_39 {dimension_numbers = #tpu.dot_dimension_numbers<[1], [1], [0], [0], [0, 0, 1, 0], [], []>, precision = #tpu.contract_precision<fp32>} : vector<16x4xf32>, vector<16x4xf32>, vector<16x16xf32> -> vector<16x16xf32>
    "tpu.trace_stop"() : () -> ()
    %92 = arith.addf %91, %44 : vector<16x16xf32>
    %cst_40 = arith.constant dense<0xFF800000> : vector<16xf32>
    %93 = vector.multi_reduction <maximumf>, %92, %cst_40 [1] : vector<16x16xf32> to vector<16xf32>
    %94 = vector.shape_cast %93 : vector<16xf32> to vector<16x1xf32>
    %95 = vector.broadcast %94 : vector<16x1xf32> to vector<16x16xf32>
    %96 = arith.subf %92, %95 : vector<16x16xf32>
    %97 = math.exp %96 : vector<16x16xf32>
    %cst_41 = arith.constant dense<0.000000e+00> : vector<16xf32>
    %98 = vector.multi_reduction <add>, %97, %cst_41 [1] : vector<16x16xf32> to vector<16xf32>
    %99 = vector.shape_cast %98 : vector<16xf32> to vector<16x1xf32>
    %100 = vector.broadcast %99 : vector<16x1xf32> to vector<16x16xf32>
    %101 = arith.divf %97, %100 : vector<16x16xf32>
    %102 = vector.extract_strided_slice %27 {offsets = [0, 24], sizes = [16, 8], strides = [1, 1]} : vector<16x32xf32> to vector<16x8xf32>
    %cst_42 = arith.constant dense<0.000000e+00> : vector<16x8xf32>
    %103 = tpu.matmul %101, %102, %cst_42 {dimension_numbers = #tpu.dot_dimension_numbers<[1], [0], [0], [1], [0, 0, 1, 1], [], []>, precision = #tpu.contract_precision<fp32>} : vector<16x16xf32>, vector<16x8xf32>, vector<16x8xf32> -> vector<16x8xf32>
    %c0_43 = arith.constant 0 : index
    %c24 = arith.constant 24 : index
    %104 = vector.load %arg9[%c0_43, %c24] : memref<16x32xf32, #tpu.memory_space<vmem>>, vector<16x8xf32>
    tpu.vector_store %arg9[%c0_43, %c24], %103 {strides = array<i32>} : memref<16x32xf32, #tpu.memory_space<vmem>>, vector<16x8xf32>,
    %c0_44 = arith.constant 0 : index
    %c0_45 = arith.constant 0 : index
    %105 = vector.load %arg9[%c0_44, %c0_45] : memref<16x32xf32, #tpu.memory_space<vmem>>, vector<16x32xf32>
    %c32_46 = arith.constant 32 : index
    %c0_47 = arith.constant 0 : index
    %106 = vector.load %arg1[%c32_46, %c0_47] : memref<64x32xbf16, #tpu.memory_space<vmem>>, vector<32x32xbf16>
    %c2 = arith.constant 2 : index
    %c0_48 = arith.constant 0 : index
    %107 = vector.load %arg7[%c2, %c0_48] : memref<11x128xf32, #tpu.memory_space<vmem>>, vector<1x32xf32>
    %108 = math.absf %105 : vector<16x32xf32>
    %cst_49 = arith.constant dense<0xFF800000> : vector<16xf32>
    %109 = vector.multi_reduction <maximumf>, %108, %cst_49 [1] : vector<16x32xf32> to vector<16xf32>
    %110 = vector.shape_cast %109 : vector<16xf32> to vector<16x1xf32>
    %cst_50 = arith.constant 9.99999997E-7 : f32
    %111 = vector.broadcast %cst_50 : f32 to vector<16x1xf32>
    %112 = arith.maximumf %110, %111 : vector<16x1xf32>
    %113 = vector.broadcast %112 : vector<16x1xf32> to vector<16x32xf32>
    %114 = arith.divf %105, %113 : vector<16x32xf32>
    %cst_51 = arith.constant 7.000000e+00 : f32
    %115 = vector.broadcast %cst_51 : f32 to vector<16x32xf32>
    %116 = arith.mulf %114, %115 : vector<16x32xf32>
    %117 = math.roundeven %116 : vector<16x32xf32>
    %cst_52 = arith.constant -8.000000e+00 : f32
    %cst_53 = arith.constant 7.000000e+00 : f32
    %118 = vector.broadcast %cst_52 : f32 to vector<16x32xf32>
    %119 = arith.maximumf %118, %117 : vector<16x32xf32>
    %120 = vector.broadcast %cst_53 : f32 to vector<16x32xf32>
    %121 = arith.minimumf %120, %119 : vector<16x32xf32>
    %122 = arith.truncf %121 : vector<16x32xf32> to vector<16x32xbf16>
    %cst_54 = arith.constant dense<0.000000e+00> : vector<16x32xf32>
    %123 = tpu.matmul %122, %106, %cst_54 {dimension_numbers = #tpu.dot_dimension_numbers<[1], [0], [0], [1], [0, 0, 1, 1], [], []>} : vector<16x32xbf16>, vector<32x32xbf16>, vector<16x32xf32> -> vector<16x32xf32>
    %cst_55 = arith.constant 0.142857149 : f32
    %124 = vector.broadcast %cst_55 : f32 to vector<16x1xf32>
    %125 = arith.mulf %112, %124 : vector<16x1xf32>
    %126 = vector.broadcast %125 : vector<16x1xf32> to vector<16x32xf32>
    %127 = arith.mulf %123, %126 : vector<16x32xf32>
    %128 = vector.broadcast %107 : vector<1x32xf32> to vector<16x32xf32>
    %129 = arith.mulf %127, %128 : vector<16x32xf32>
    %130 = arith.addf %0, %129 : vector<16x32xf32>
    %c3 = arith.constant 3 : index
    %c0_56 = arith.constant 0 : index
    %131 = vector.load %arg7[%c3, %c0_56] : memref<11x128xf32, #tpu.memory_space<vmem>>, vector<1x32xf32>
    %c4 = arith.constant 4 : index
    %c0_57 = arith.constant 0 : index
    %132 = vector.load %arg7[%c4, %c0_57] : memref<11x128xf32, #tpu.memory_space<vmem>>, vector<1x32xf32>
    %cst_58 = arith.constant dense<0.000000e+00> : vector<16xf32>
    %133 = vector.multi_reduction <add>, %130, %cst_58 [1] : vector<16x32xf32> to vector<16xf32>
    %134 = vector.shape_cast %133 : vector<16xf32> to vector<16x1xf32>
    %cst_59 = arith.constant 3.200000e+01 : f32
    %135 = vector.broadcast %cst_59 : f32 to vector<16x1xf32>
    %136 = arith.divf %134, %135 : vector<16x1xf32>
    %137 = vector.broadcast %136 : vector<16x1xf32> to vector<16x32xf32>
    %138 = arith.subf %130, %137 : vector<16x32xf32>
    %139 = arith.mulf %138, %138 : vector<16x32xf32>
    %cst_60 = arith.constant dense<0.000000e+00> : vector<16xf32>
    %140 = vector.multi_reduction <add>, %139, %cst_60 [1] : vector<16x32xf32> to vector<16xf32>
    %141 = vector.shape_cast %140 : vector<16xf32> to vector<16x1xf32>
    %cst_61 = arith.constant 3.200000e+01 : f32
    %142 = vector.broadcast %cst_61 : f32 to vector<16x1xf32>
    %143 = arith.divf %141, %142 : vector<16x1xf32>
    %cst_62 = arith.constant 9.99999974E-6 : f32
    %144 = vector.broadcast %cst_62 : f32 to vector<16x1xf32>
    %145 = arith.addf %143, %144 : vector<16x1xf32>
    %146 = math.rsqrt %145 : vector<16x1xf32>
    %147 = vector.broadcast %146 : vector<16x1xf32> to vector<16x32xf32>
    %148 = arith.mulf %138, %147 : vector<16x32xf32>
    %149 = vector.broadcast %131 : vector<1x32xf32> to vector<16x32xf32>
    %150 = arith.mulf %148, %149 : vector<16x32xf32>
    %151 = vector.broadcast %132 : vector<1x32xf32> to vector<16x32xf32>
    %152 = arith.addf %150, %151 : vector<16x32xf32>
    %c0_63 = arith.constant 0 : index
    %c0_64 = arith.constant 0 : index
    %153 = vector.load %arg2[%c0_63, %c0_64] : memref<32x128xbf16, #tpu.memory_space<vmem>>, vector<32x128xbf16>
    %c5 = arith.constant 5 : index
    %c0_65 = arith.constant 0 : index
    %154 = vector.load %arg7[%c5, %c0_65] : memref<11x128xf32, #tpu.memory_space<vmem>>, vector<1x128xf32>
    %c6 = arith.constant 6 : index
    %c0_66 = arith.constant 0 : index
    %155 = vector.load %arg7[%c6, %c0_66] : memref<11x128xf32, #tpu.memory_space<vmem>>, vector<1x128xf32>
    %156 = math.absf %152 : vector<16x32xf32>
    %cst_67 = arith.constant dense<0xFF800000> : vector<16xf32>
    %157 = vector.multi_reduction <maximumf>, %156, %cst_67 [1] : vector<16x32xf32> to vector<16xf32>
    %158 = vector.shape_cast %157 : vector<16xf32> to vector<16x1xf32>
    %cst_68 = arith.constant 9.99999997E-7 : f32
    %159 = vector.broadcast %cst_68 : f32 to vector<16x1xf32>
    %160 = arith.maximumf %158, %159 : vector<16x1xf32>
    %161 = vector.broadcast %160 : vector<16x1xf32> to vector<16x32xf32>
    %162 = arith.divf %152, %161 : vector<16x32xf32>
    %cst_69 = arith.constant 7.000000e+00 : f32
    %163 = vector.broadcast %cst_69 : f32 to vector<16x32xf32>
    %164 = arith.mulf %162, %163 : vector<16x32xf32>
    %165 = math.roundeven %164 : vector<16x32xf32>
    %cst_70 = arith.constant -8.000000e+00 : f32
    %cst_71 = arith.constant 7.000000e+00 : f32
    %166 = vector.broadcast %cst_70 : f32 to vector<16x32xf32>
    %167 = arith.maximumf %166, %165 : vector<16x32xf32>
    %168 = vector.broadcast %cst_71 : f32 to vector<16x32xf32>
    %169 = arith.minimumf %168, %167 : vector<16x32xf32>
    %170 = arith.truncf %169 : vector<16x32xf32> to vector<16x32xbf16>
    %cst_72 = arith.constant dense<0.000000e+00> : vector<16x128xf32>
    %171 = tpu.matmul %170, %153, %cst_72 {dimension_numbers = #tpu.dot_dimension_numbers<[1], [0], [0], [1], [0, 0, 1, 1], [], []>} : vector<16x32xbf16>, vector<32x128xbf16>, vector<16x128xf32> -> vector<16x128xf32>
    %cst_73 = arith.constant 0.142857149 : f32
    %172 = vector.broadcast %cst_73 : f32 to vector<16x1xf32>
    %173 = arith.mulf %160, %172 : vector<16x1xf32>
    %174 = vector.broadcast %173 : vector<16x1xf32> to vector<16x128xf32>
    %175 = arith.mulf %171, %174 : vector<16x128xf32>
    %176 = vector.broadcast %154 : vector<1x128xf32> to vector<16x128xf32>
    %177 = arith.mulf %175, %176 : vector<16x128xf32>
    %178 = vector.broadcast %155 : vector<1x128xf32> to vector<16x128xf32>
    %179 = arith.addf %177, %178 : vector<16x128xf32>
    %cst_74 = arith.constant 5.000000e-01 : f32
    %180 = vector.broadcast %cst_74 : f32 to vector<16x128xf32>
    %181 = arith.mulf %180, %179 : vector<16x128xf32>
    %cst_75 = arith.constant 0.707106769 : f32
    %182 = vector.broadcast %cst_75 : f32 to vector<16x128xf32>
    %183 = arith.mulf %179, %182 : vector<16x128xf32>
    %184 = math.erf %183 : vector<16x128xf32>
    %cst_76 = arith.constant 1.000000e+00 : f32
    %185 = vector.broadcast %cst_76 : f32 to vector<16x128xf32>
    %186 = arith.addf %185, %184 : vector<16x128xf32>
    %187 = arith.mulf %181, %186 : vector<16x128xf32>
    %c0_77 = arith.constant 0 : index
    %c0_78 = arith.constant 0 : index
    %188 = vector.load %arg3[%c0_77, %c0_78] : memref<128x32xbf16, #tpu.memory_space<vmem>>, vector<128x32xbf16>
    %c7 = arith.constant 7 : index
    %c0_79 = arith.constant 0 : index
    %189 = vector.load %arg7[%c7, %c0_79] : memref<11x128xf32, #tpu.memory_space<vmem>>, vector<1x32xf32>
    %c8_80 = arith.constant 8 : index
    %c0_81 = arith.constant 0 : index
    %190 = vector.load %arg7[%c8_80, %c0_81] : memref<11x128xf32, #tpu.memory_space<vmem>>, vector<1x32xf32>
    %191 = math.absf %187 : vector<16x128xf32>
    %cst_82 = arith.constant dense<0xFF800000> : vector<16xf32>
    %192 = vector.multi_reduction <maximumf>, %191, %cst_82 [1] : vector<16x128xf32> to vector<16xf32>
    %193 = vector.shape_cast %192 : vector<16xf32> to vector<16x1xf32>
    %cst_83 = arith.constant 9.99999997E-7 : f32
    %194 = vector.broadcast %cst_83 : f32 to vector<16x1xf32>
    %195 = arith.maximumf %193, %194 : vector<16x1xf32>
    %196 = vector.broadcast %195 : vector<16x1xf32> to vector<16x128xf32>
    %197 = arith.divf %187, %196 : vector<16x128xf32>
    %cst_84 = arith.constant 7.000000e+00 : f32
    %198 = vector.broadcast %cst_84 : f32 to vector<16x128xf32>
    %199 = arith.mulf %197, %198 : vector<16x128xf32>
    %200 = math.roundeven %199 : vector<16x128xf32>
    %cst_85 = arith.constant -8.000000e+00 : f32
    %cst_86 = arith.constant 7.000000e+00 : f32
    %201 = vector.broadcast %cst_85 : f32 to vector<16x128xf32>
    %202 = arith.maximumf %201, %200 : vector<16x128xf32>
    %203 = vector.broadcast %cst_86 : f32 to vector<16x128xf32>
    %204 = arith.minimumf %203, %202 : vector<16x128xf32>
    %205 = arith.truncf %204 : vector<16x128xf32> to vector<16x128xbf16>
    %cst_87 = arith.constant dense<0.000000e+00> : vector<16x32xf32>
    %206 = tpu.matmul %205, %188, %cst_87 {dimension_numbers = #tpu.dot_dimension_numbers<[1], [0], [0], [1], [0, 0, 1, 1], [], []>} : vector<16x128xbf16>, vector<128x32xbf16>, vector<16x32xf32> -> vector<16x32xf32>
    %cst_88 = arith.constant 0.142857149 : f32
    %207 = vector.broadcast %cst_88 : f32 to vector<16x1xf32>
    %208 = arith.mulf %195, %207 : vector<16x1xf32>
    %209 = vector.broadcast %208 : vector<16x1xf32> to vector<16x32xf32>
    %210 = arith.mulf %206, %209 : vector<16x32xf32>
    %211 = vector.broadcast %189 : vector<1x32xf32> to vector<16x32xf32>
    %212 = arith.mulf %210, %211 : vector<16x32xf32>
    %213 = vector.broadcast %190 : vector<1x32xf32> to vector<16x32xf32>
    %214 = arith.addf %212, %213 : vector<16x32xf32>
    %215 = arith.addf %152, %214 : vector<16x32xf32>
    %c9 = arith.constant 9 : index
    %c0_89 = arith.constant 0 : index
    %216 = vector.load %arg7[%c9, %c0_89] : memref<11x128xf32, #tpu.memory_space<vmem>>, vector<1x32xf32>
    %c10 = arith.constant 10 : index
    %c0_90 = arith.constant 0 : index
    %217 = vector.load %arg7[%c10, %c0_90] : memref<11x128xf32, #tpu.memory_space<vmem>>, vector<1x32xf32>
    %cst_91 = arith.constant dense<0.000000e+00> : vector<16xf32>
    %218 = vector.multi_reduction <add>, %215, %cst_91 [1] : vector<16x32xf32> to vector<16xf32>
    %219 = vector.shape_cast %218 : vector<16xf32> to vector<16x1xf32>
    %cst_92 = arith.constant 3.200000e+01 : f32
    %220 = vector.broadcast %cst_92 : f32 to vector<16x1xf32>
    %221 = arith.divf %219, %220 : vector<16x1xf32>
    %222 = vector.broadcast %221 : vector<16x1xf32> to vector<16x32xf32>
    %223 = arith.subf %215, %222 : vector<16x32xf32>
    %224 = arith.mulf %223, %223 : vector<16x32xf32>
    %cst_93 = arith.constant dense<0.000000e+00> : vector<16xf32>
    %225 = vector.multi_reduction <add>, %224, %cst_93 [1] : vector<16x32xf32> to vector<16xf32>
    %226 = vector.shape_cast %225 : vector<16xf32> to vector<16x1xf32>
    %cst_94 = arith.constant 3.200000e+01 : f32
    %227 = vector.broadcast %cst_94 : f32 to vector<16x1xf32>
    %228 = arith.divf %226, %227 : vector<16x1xf32>
    %cst_95 = arith.constant 9.99999974E-6 : f32
    %229 = vector.broadcast %cst_95 : f32 to vector<16x1xf32>
    %230 = arith.addf %228, %229 : vector<16x1xf32>
    %231 = math.rsqrt %230 : vector<16x1xf32>
    %232 = vector.broadcast %231 : vector<16x1xf32> to vector<16x32xf32>
    %233 = arith.mulf %223, %232 : vector<16x32xf32>
    %234 = vector.broadcast %216 : vector<1x32xf32> to vector<16x32xf32>
    %235 = arith.mulf %233, %234 : vector<16x32xf32>
    %236 = vector.broadcast %217 : vector<1x32xf32> to vector<16x32xf32>
    %237 = arith.addf %235, %236 : vector<16x32xf32>
    %c0_96 = arith.constant 0 : index
    %c0_97 = arith.constant 0 : index
    %238 = vector.load %arg8[%c0_96, %c0_97] : memref<16x32xf32, #tpu.memory_space<vmem>>, vector<16x32xf32>
    tpu.vector_store %arg8[%c0_96, %c0_97], %237 {strides = array<i32>} : memref<16x32xf32, #tpu.memory_space<vmem>>, vector<16x32xf32>,
    return
  }
}

</mosaic_0001>

<llo_original>
// kernel: _pallas_block_2d.1
$region0: #{_pallas_block_2d.1}
  #allocation0 [shape = 'u32[]', space=smem, size = 0x4, offset = 0x4, fixed_abs, tag = 'smem constant byte address 0x4 - core index']
  #allocation1 [shape = 'u32[144,128]{1,0:T(1,128)}', space=vmem, size = 0x12000, scoped, tag = 'internal scratch']
  #allocation2 [shape = 'f32[16,32]{1,0:T(8,128)}', space=vmem, size = 0x2000, scoped, tag = 'scratch operand']
  %s0 = inlined_call_operand.vmem [shape: f32[16,32], index: 0, kind: input, shape index: {}]
  %s1 = inlined_call_operand.vmem [shape: bf16[64,32], index: 1, kind: input, shape index: {}]
  %s2 = inlined_call_operand.vmem [shape: bf16[32,128], index: 2, kind: input, shape index: {}]
  %s3 = inlined_call_operand.vmem [shape: bf16[128,32], index: 3, kind: input, shape index: {}]
  %s4 = inlined_call_operand.vmem [shape: f32[64,16], index: 4, kind: input, shape index: {}]
  %s5 = inlined_call_operand.vmem [shape: f32[16,32], index: 5, kind: input, shape index: {}]
  %s6 = inlined_call_operand.vmem [shape: f32[16,16], index: 6, kind: input, shape index: {}]
  %s7 = inlined_call_operand.vmem [shape: f32[11,128], index: 7, kind: input, shape index: {}]
  %s8 = inlined_call_operand.hbm [shape: f32[16,32], index: 8, kind: output, shape index: {}]
  %s9 = sld [smem:[#allocation0]]
  $region42: #{_pallas_block_2d.1} parent=0
    _
  %s11 = ssub.s32 1, %s9
  %s12 = scalar_select 0, %s11, %s9
  $region1: #{_pallas_block_2d.1} parent=0
    #allocation3 [shape = 'u8[8192]{0}', space=vmem, size = 0x2000, scoped, tag = 'output window, operand 0, single buffered']
    #allocation4 [shape = 's32[1]{0}', space=sflag, size = 0x4, scoped, tag = 'scoped memory for _pallas_block_2d.1']
    %13 = vsyncpa [#allocation4], 0
    // Predicated region
    $region2: #{_pallas_block_2d.1} parent=1 // pred_check
      _
    $region3: #{_pallas_block_2d.1} parent=1 // pred_check_branch
      %15 = sbr.rel (0) target = $region5
    $region4: #{_pallas_block_2d.1} parent=1 // pred_region
      _
    $region5: #{_pallas_block_2d.1} parent=1 // pred_fallthru
      _
    // Predicated region
    $region6: #{_pallas_block_2d.1} parent=1 // pred_check
      _
    $region7: #{_pallas_block_2d.1} parent=1 // pred_check_branch
      %17 = sbr.rel (0) target = $region9
    $region8: #{_pallas_block_2d.1} parent=1 // pred_region
      _
    $region9: #{_pallas_block_2d.1} parent=1 // pred_fallthru
      _
    // Predicated region
    $region10: #{_pallas_block_2d.1} parent=1 // pred_check
      _
    $region11: #{_pallas_block_2d.1} parent=1 // pred_check_branch
      %19 = sbr.rel (0) target = $region13
    $region12: #{_pallas_block_2d.1} parent=1 // pred_region
      _
    $region13: #{_pallas_block_2d.1} parent=1 // pred_fallthru
      _
    // Predicated region
    $region14: #{_pallas_block_2d.1} parent=1 // pred_check
      _
    $region15: #{_pallas_block_2d.1} parent=1 // pred_check_branch
      %21 = sbr.rel (0) target = $region17
    $region16: #{_pallas_block_2d.1} parent=1 // pred_region
      _
    $region17: #{_pallas_block_2d.1} parent=1 // pred_fallthru
      _
    // Predicated region
    $region18: #{_pallas_block_2d.1} parent=1 // pred_check
      _
    $region19: #{_pallas_block_2d.1} parent=1 // pred_check_branch
      %23 = sbr.rel (0) target = $region21
    $region20: #{_pallas_block_2d.1} parent=1 // pred_region
      _
    $region21: #{_pallas_block_2d.1} parent=1 // pred_fallthru
      _
    // Predicated region
    $region22: #{_pallas_block_2d.1} parent=1 // pred_check
      _
    $region23: #{_pallas_block_2d.1} parent=1 // pred_check_branch
      %25 = sbr.rel (0) target = $region25
    $region24: #{_pallas_block_2d.1} parent=1 // pred_region
      _
    $region25: #{_pallas_block_2d.1} parent=1 // pred_fallthru
      _
    // Predicated region
    $region26: #{_pallas_block_2d.1} parent=1 // pred_check
      _
    $region27: #{_pallas_block_2d.1} parent=1 // pred_check_branch
      %27 = sbr.rel (0) target = $region29
    $region28: #{_pallas_block_2d.1} parent=1 // pred_region
      _
    $region29: #{_pallas_block_2d.1} parent=1 // pred_fallthru
      _
    // Predicated region
    $region30: #{_pallas_block_2d.1} parent=1 // pred_check
      _
    $region31: #{_pallas_block_2d.1} parent=1 // pred_check_branch
      %29 = sbr.rel (0) target = $region33
    $region32: #{_pallas_block_2d.1} parent=1 // pred_region
      _
    $region33: #{_pallas_block_2d.1} parent=1 // pred_fallthru
      _
    %v31 = vld [vmem:[%s0] sm:$0xff]
    %v32 = vld [vmem:[%s0 + $0x8] sm:$0xff]
    %v33 = vld [vmem:[%s1] sm:$0xf]
    %v34 = vld [vmem:[%s1 + $0x4] sm:$0xf]
    %v35 = vld [vmem:[%s1 + $0x8] sm:$0xf]
    %v36 = vld [vmem:[%s1 + $0xc] sm:$0xf]
    %v37 = vld [vmem:[%s7 + $0x1] sm:$0x1]
    %v38 = vld [vmem:[%s7] sm:$0x1]
    %v39 = vand.u32 2147483647, %v31
    %v40 = vand.u32 2147483647, %v32
    %vm41 = vcmask 261120
    %v42 = vsel %vm41, %v39, -inf
    %43 = vmax.xlane.f32.xlu0 %v42
    %v44 = vpop.xlane.xlu0 %43
    %v45 = vsel %vm41, %v40, -inf
    %46 = vmax.xlane.f32.xlu0 %v45
    %v47 = vpop.xlane.xlu0 %46
    %v48 = vmax.f32 %v44, 1e-06
    %v49 = vmax.f32 %v47, 1e-06
    %v50 = vrcp.pop %v48
    %v51 = vmul.f32 %v31, %v50
    %v52 = vrcp.pop %v49
    %v53 = vmul.f32 %v32, %v52
    %v54 = vmul.f32 %v51, 7.0
    %v55 = vmul.f32 %v53, 7.0
    %v56 = vround.ne.pseudo %v54
    %v57 = vround.ne.pseudo %v55
    %v58 = vmax.f32 %v56, -8.0
    %v59 = vmax.f32 %v57, -8.0
    %v60 = vmin.f32 %v58, 7.0
    %v61 = vmin.f32 %v59, 7.0
    %v62 = vpack.c.bf16 %v61, %v60
    %v67 = vunpack.c.l.b16 %v33
    %v68 = vunpack.c.l.b16 %v34
    %v69 = vunpack.c.l.b16 %v35
    %v70 = vunpack.c.l.b16 %v36
    %v71 = vpack.c.b16 %v68, %v67
    %v72 = vpack.c.b16 %v70, %v69
    %v76 = vsel %vm41, %v62, 0
    %78 = vmatprep.subr.bf16.mxu0 0
    %79 = vmatpush1.bf16.msra.mxu0 %v71
    %80 = vmatprep.subr.bf16.mxu0 0
    %81 = vmatpush1.bf16.msra.mxu0 %v72
    %82 = vmatprep.subr.bf16.mxu0 0
    %83 = vmatpush1.bf16.msra.mxu0 0
    %84 = vmatprep.subr.bf16.mxu0 0
    %85 = vmatpush1.bf16.msra.mxu0 0
    %86 = vmatprep.subr.bf16.mxu0 0
    %87 = vmatpush1.bf16.msra.mxu0 0
    %88 = vmatprep.subr.bf16.mxu0 0
    %89 = vmatpush1.bf16.msra.mxu0 0
    %90 = vmatprep.subr.bf16.mxu0 0
    %91 = vmatpush1.bf16.msra.mxu0 0
    %92 = vmatprep.subr.bf16.mxu0 0
    %93 = vmatpush1.bf16.msra.mxu0 0
    %94 = vmatprep.subr.bf16.mxu0 0
    %95 = vmatpush1.bf16.msra.mxu0 0
    %96 = vmatprep.subr.bf16.mxu0 0
    %97 = vmatpush1.bf16.msra.mxu0 0
    %98 = vmatprep.subr.bf16.mxu0 0
    %99 = vmatpush1.bf16.msra.mxu0 0
    %100 = vmatprep.subr.bf16.mxu0 0
    %101 = vmatpush1.bf16.msra.mxu0 0
    %102 = vmatprep.subr.bf16.mxu0 0
    %103 = vmatpush1.bf16.msra.mxu0 0
    %104 = vmatprep.subr.bf16.mxu0 0
    %105 = vmatpush1.bf16.msra.mxu0 0
    %106 = vmatprep.subr.bf16.mxu0 0
    %107 = vmatpush1.bf16.msra.mxu0 0
    %108 = vmatprep.subr.bf16.mxu0 0
    %109 = vmatpush1.bf16.msra.mxu0 0
    %110 = vmatprep.mubr.bf16.mxu0 0
    %111 = vmatmul.mubr.bf16.gmra.mrb[0].mxu0 %v76
    %v112 = vpop.f32.mrb[0].mxu0
    %v113 = vadd.f32 0.0, %v112
    %v114 = vpop.f32.mrb[0].mxu0
    %v115 = vpop.f32.mrb[0].mxu0
    %v116 = vadd.f32 0.0, %v115
    %v117 = vpop.f32.mrb[0].mxu0
    %118 = vdwg.mxu0
    %v119 = vmul.f32 %v48, 0.14285715
    %v120 = vmul.f32 %v49, 0.14285715
    %v121 = vmul.f32 %v113, %v119
    %v122 = vmul.f32 %v116, %v120
    %v123 = vlaneseq
    %v124 = vshrl.u32 %v123, 7
    %v125 = vsub.s32 0, %v124
    %v126 = vrot.slane %v37, %v125
    %v127 = vmul.f32 %v121, %v126
    %v128 = vmul.f32 %v122, %v126
    %v129 = vlaneseq
    %v130 = vshrl.u32 %v129, 7
    %v131 = vsub.s32 0, %v130
    %v132 = vrot.slane %v38, %v131
    %v133 = vadd.f32 %v127, %v132
    %v134 = vadd.f32 %v128, %v132
    %v135 = vld [vmem:[%s5] sm:$0xff]
    %v136 = vmul.f32 %v133, %v135
    %v137 = vmul.f32 %v134, %v135
    %v138 = vld [vmem:[%s5 + $0x8] sm:$0xff]
    %v139 = vmul.f32 %v133, %v138
    %v140 = vmul.f32 %v134, %v138
    %v141 = vld [vmem:[%s4] sm:$0xff]
    %v142 = vld [vmem:[%s4 + $0x8] sm:$0xff]
    %v143 = vld [vmem:[%s4 + $0x10] sm:$0xff]
    %v144 = vld [vmem:[%s4 + $0x18] sm:$0xff]
    %v145 = vld [vmem:[%s4 + $0x20] sm:$0xff]
    %v146 = vld [vmem:[%s4 + $0x28] sm:$0xff]
    %v147 = vld [vmem:[%s4 + $0x30] sm:$0xff]
    %v148 = vld [vmem:[%s4 + $0x38] sm:$0xff]
    %v150 = vsel %vm41, %v139, 0
    %v153 = vsel %vm41, %v140, 0
    %155 = vmatprep.subr.mxu0 0.0
    %v156 = vand.u32 %v145, 4294901760
    %157 = vmatpush1.msra.mxu0 %v156
    %158 = vmatprep.subr.mxu0 0.0
    %v159 = vand.u32 %v146, 4294901760
    %160 = vmatpush1.msra.mxu0 %v159
    %161 = vmatprep.subr.mxu0 0.0
    %v162 = vand.u32 %v147, 4294901760
    %163 = vmatpush1.msra.mxu0 %v162
    %164 = vmatprep.subr.mxu0 0.0
    %v165 = vand.u32 %v148, 4294901760
    %166 = vmatpush1.msra.mxu0 %v165
    %167 = vmatprep.subr.mxu0 0.0
    %168 = vmatpush1.msra.mxu0 0.0
    %169 = vmatprep.subr.mxu0 0.0
    %170 = vmatpush1.msra.mxu0 0.0
    %171 = vmatprep.subr.mxu0 0.0
    %172 = vmatpush1.msra.mxu0 0.0
    %173 = vmatprep.subr.mxu0 0.0
    %174 = vmatpush1.msra.mxu0 0.0
    %175 = vmatprep.subr.mxu0 0.0
    %176 = vmatpush1.msra.mxu0 0.0
    %177 = vmatprep.subr.mxu0 0.0
    %178 = vmatpush1.msra.mxu0 0.0
    %179 = vmatprep.subr.mxu0 0.0
    %180 = vmatpush1.msra.mxu0 0.0
    %181 = vmatprep.subr.mxu0 0.0
    %182 = vmatpush1.msra.mxu0 0.0
    %183 = vmatprep.subr.mxu0 0.0
    %184 = vmatpush1.msra.mxu0 0.0
    %185 = vmatprep.subr.mxu0 0.0
    %186 = vmatpush1.msra.mxu0 0.0
    %187 = vmatprep.subr.mxu0 0.0
    %188 = vmatpush1.msra.mxu0 0.0
    %189 = vmatprep.subr.mxu0 0.0
    %190 = vmatpush1.msra.mxu0 0.0
    %191 = vmatprep.subr.mxu0 0.0
    %192 = vmatpush1.msra.mxu0 0.0
    %193 = vmatprep.subr.mxu0 0.0
    %194 = vmatpush1.msra.mxu0 0.0
    %195 = vmatprep.subr.mxu0 0.0
    %196 = vmatpush1.msra.mxu0 0.0
    %197 = vmatprep.subr.mxu0 0.0
    %198 = vmatpush1.msra.mxu0 0.0
    %199 = vmatprep.subr.mxu0 0.0
    %200 = vmatpush1.msra.mxu0 0.0
    %201 = vmatprep.subr.mxu0 0.0
    %202 = vmatpush1.msra.mxu0 0.0
    %203 = vmatprep.subr.mxu0 0.0
    %204 = vmatpush1.msra.mxu0 0.0
    %205 = vmatprep.subr.mxu0 0.0
    %206 = vmatpush1.msra.mxu0 0.0
    %207 = vmatprep.subr.mxu0 0.0
    %208 = vmatpush1.msra.mxu0 0.0
    %209 = vmatprep.subr.mxu0 0.0
    %210 = vmatpush1.msra.mxu0 0.0
    %211 = vmatprep.subr.mxu0 0.0
    %212 = vmatpush1.msra.mxu0 0.0
    %213 = vmatprep.subr.mxu0 0.0
    %214 = vmatpush1.msra.mxu0 0.0
    %215 = vmatprep.subr.mxu0 0.0
    %216 = vmatpush1.msra.mxu0 0.0
    %217 = vmatprep.subr.mxu0 0.0
    %218 = vmatpush1.msra.mxu0 0.0
    %219 = vmatprep.subr.mxu0 0.0
    %220 = vmatpush1.msra.mxu0 0.0
    %221 = vmatprep.subr.mxu0 0.0
    %222 = vmatpush1.msra.mxu0 0.0
    %223 = vmatprep.mubr.f32.mxu0 0.0
    %v224 = vand.u32 %v150, 4294901760
    %v225 = vsub.f32 %v150, %v224
    %v226 = vand.u32 %v225, 4294901760
    %v227 = vsub.f32 %v225, %v226
    %v228 = vand.u32 %v227, 4294901760
    %229 = vmatmul.mubr.f32.gmra.mrb[0].mxu0 %v228
    %v230 = vpop.f32.mrb[0].mxu0
    %v231 = vadd.f32 0.0, %v230
    %v232 = vpop.f32.mrb[0].mxu0
    %233 = vmatprep.mubr.f32.mxu0 0.0
    %v234 = vand.u32 %v153, 4294901760
    %v235 = vsub.f32 %v153, %v234
    %v236 = vand.u32 %v235, 4294901760
    %v237 = vsub.f32 %v235, %v236
    %v238 = vand.u32 %v237, 4294901760
    %239 = vmatmul.mubr.f32.gmra.mrb[0].mxu0 %v238
    %v240 = vpop.f32.mrb[0].mxu0
    %v241 = vadd.f32 0.0, %v240
    %v242 = vpop.f32.mrb[0].mxu0
    %243 = vdwg.mxu0
    %244 = vmatprep.subr.mxu0 0.0
    %v245 = vand.u32 %v145, 4294901760
    %v246 = vsub.f32 %v145, %v245
    %v247 = vand.u32 %v246, 4294901760
    %v248 = vsub.f32 %v246, %v247
    %v249 = vand.u32 %v248, 4294901760
    %250 = vmatpush1.msra.mxu0 %v249
    %251 = vmatprep.subr.mxu0 0.0
    %v252 = vand.u32 %v146, 4294901760
    %v253 = vsub.f32 %v146, %v252
    %v254 = vand.u32 %v253, 4294901760
    %v255 = vsub.f32 %v253, %v254
    %v256 = vand.u32 %v255, 4294901760
    %257 = vmatpush1.msra.mxu0 %v256
    %258 = vmatprep.subr.mxu0 0.0
    %v259 = vand.u32 %v147, 4294901760
    %v260 = vsub.f32 %v147, %v259
    %v261 = vand.u32 %v260, 4294901760
    %v262 = vsub.f32 %v260, %v261
    %v263 = vand.u32 %v262, 4294901760
    %264 = vmatpush1.msra.mxu0 %v263
    %265 = vmatprep.subr.mxu0 0.0
    %v266 = vand.u32 %v148, 4294901760
    %v267 = vsub.f32 %v148, %v266
    %v268 = vand.u32 %v267, 4294901760
    %v269 = vsub.f32 %v267, %v268
    %v270 = vand.u32 %v269, 4294901760
    %271 = vmatpush1.msra.mxu0 %v270
    %272 = vmatprep.subr.mxu0 0.0
    %273 = vmatpush1.msra.mxu0 0.0
    %274 = vmatprep.subr.mxu0 0.0
    %275 = vmatpush1.msra.mxu0 0.0
    %276 = vmatprep.subr.mxu0 0.0
    %277 = vmatpush1.msra.mxu0 0.0
    %278 = vmatprep.subr.mxu0 0.0
    %279 = vmatpush1.msra.mxu0 0.0
    %280 = vmatprep.subr.mxu0 0.0
    %281 = vmatpush1.msra.mxu0 0.0
    %282 = vmatprep.subr.mxu0 0.0
    %283 = vmatpush1.msra.mxu0 0.0
    %284 = vmatprep.subr.mxu0 0.0
    %285 = vmatpush1.msra.mxu0 0.0
    %286 = vmatprep.subr.mxu0 0.0
    %287 = vmatpush1.msra.mxu0 0.0
    %288 = vmatprep.subr.mxu0 0.0
    %289 = vmatpush1.msra.mxu0 0.0
    %290 = vmatprep.subr.mxu0 0.0
    %291 = vmatpush1.msra.mxu0 0.0
    %292 = vmatprep.subr.mxu0 0.0
    %293 = vmatpush1.msra.mxu0 0.0
    %294 = vmatprep.subr.mxu0 0.0
    %295 = vmatpush1.msra.mxu0 0.0
    %296 = vmatprep.subr.mxu0 0.0
    %297 = vmatpush1.msra.mxu0 0.0
    %298 = vmatprep.subr.mxu0 0.0
    %299 = vmatpush1.msra.mxu0 0.0
    %300 = vmatprep.subr.mxu0 0.0
    %301 = vmatpush1.msra.mxu0 0.0
    %302 = vmatprep.subr.mxu0 0.0
    %303 = vmatpush1.msra.mxu0 0.0
    %304 = vmatprep.subr.mxu0 0.0
    %305 = vmatpush1.msra.mxu0 0.0
    %306 = vmatprep.subr.mxu0 0.0
    %307 = vmatpush1.msra.mxu0 0.0
    %308 = vmatprep.subr.mxu0 0.0
    %309 = vmatpush1.msra.mxu0 0.0
    %310 = vmatprep.subr.mxu0 0.0
    %311 = vmatpush1.msra.mxu0 0.0
    %312 = vmatprep.subr.mxu0 0.0
    %313 = vmatpush1.msra.mxu0 0.0
    %314 = vmatprep.subr.mxu0 0.0
    %315 = vmatpush1.msra.mxu0 0.0
    %316 = vmatprep.subr.mxu0 0.0
    %317 = vmatpush1.msra.mxu0 0.0
    %318 = vmatprep.subr.mxu0 0.0
    %319 = vmatpush1.msra.mxu0 0.0
    %320 = vmatprep.subr.mxu0 0.0
    %321 = vmatpush1.msra.mxu0 0.0
    %322 = vmatprep.subr.mxu0 0.0
    %323 = vmatpush1.msra.mxu0 0.0
    %324 = vmatprep.subr.mxu0 0.0
    %325 = vmatpush1.msra.mxu0 0.0
    %326 = vmatprep.subr.mxu0 0.0
    %327 = vmatpush1.msra.mxu0 0.0
    %328 = vmatprep.mubr.f32.mxu0 0.0
    %v329 = vand.u32 %v150, 4294901760
    %330 = vmatmul.mubr.f32.gmra.mrb[0].mxu0 %v329
    %v331 = vpop.f32.mrb[0].mxu0
    %v332 = vadd.f32 %v231, %v331
    %v333 = vpop.f32.mrb[0].mxu0
    %334 = vmatprep.mubr.f32.mxu0 0.0
    %v335 = vand.u32 %v153, 4294901760
    %336 = vmatmul.mubr.f32.gmra.mrb[0].mxu0 %v335
    %v337 = vpop.f32.mrb[0].mxu0
    %v338 = vadd.f32 %v241, %v337
    %v339 = vpop.f32.mrb[0].mxu0
    %340 = vdwg.mxu0
    %341 = vmatprep.subr.mxu0 0.0
    %v342 = vand.u32 %v145, 4294901760
    %v343 = vsub.f32 %v145, %v342
    %344 = vmatpush1.msra.mxu0 %v343
    %345 = vmatprep.subr.mxu0 0.0
    %v346 = vand.u32 %v146, 4294901760
    %v347 = vsub.f32 %v146, %v346
    %348 = vmatpush1.msra.mxu0 %v347
    %349 = vmatprep.subr.mxu0 0.0
    %v350 = vand.u32 %v147, 4294901760
    %v351 = vsub.f32 %v147, %v350
    %352 = vmatpush1.msra.mxu0 %v351
    %353 = vmatprep.subr.mxu0 0.0
    %v354 = vand.u32 %v148, 4294901760
    %v355 = vsub.f32 %v148, %v354
    %356 = vmatpush1.msra.mxu0 %v355
    %357 = vmatprep.subr.mxu0 0.0
    %358 = vmatpush1.msra.mxu0 0.0
    %359 = vmatprep.subr.mxu0 0.0
    %360 = vmatpush1.msra.mxu0 0.0
    %361 = vmatprep.subr.mxu0 0.0
    %362 = vmatpush1.msra.mxu0 0.0
    %363 = vmatprep.subr.mxu0 0.0
    %364 = vmatpush1.msra.mxu0 0.0
    %365 = vmatprep.subr.mxu0 0.0
    %366 = vmatpush1.msra.mxu0 0.0
    %367 = vmatprep.subr.mxu0 0.0
    %368 = vmatpush1.msra.mxu0 0.0
    %369 = vmatprep.subr.mxu0 0.0
    %370 = vmatpush1.msra.mxu0 0.0
    %371 = vmatprep.subr.mxu0 0.0
    %372 = vmatpush1.msra.mxu0 0.0
    %373 = vmatprep.subr.mxu0 0.0
    %374 = vmatpush1.msra.mxu0 0.0
    %375 = vmatprep.subr.mxu0 0.0
    %376 = vmatpush1.msra.mxu0 0.0
    %377 = vmatprep.subr.mxu0 0.0
    %378 = vmatpush1.msra.mxu0 0.0
    %379 = vmatprep.subr.mxu0 0.0
    %380 = vmatpush1.msra.mxu0 0.0
    %381 = vmatprep.subr.mxu0 0.0
    %382 = vmatpush1.msra.mxu0 0.0
    %383 = vmatprep.subr.mxu0 0.0
    %384 = vmatpush1.msra.mxu0 0.0
    %385 = vmatprep.subr.mxu0 0.0
    %386 = vmatpush1.msra.mxu0 0.0
    %387 = vmatprep.subr.mxu0 0.0
    %388 = vmatpush1.msra.mxu0 0.0
    %389 = vmatprep.subr.mxu0 0.0
    %390 = vmatpush1.msra.mxu0 0.0
    %391 = vmatprep.subr.mxu0 0.0
    %392 = vmatpush1.msra.mxu0 0.0
    %393 = vmatprep.subr.mxu0 0.0
    %394 = vmatpush1.msra.mxu0 0.0
    %395 = vmatprep.subr.mxu0 0.0
    %396 = vmatpush1.msra.mxu0 0.0
    %397 = vmatprep.subr.mxu0 0.0
    %398 = vmatpush1.msra.mxu0 0.0
    %399 = vmatprep.subr.mxu0 0.0
    %400 = vmatpush1.msra.mxu0 0.0
    %401 = vmatprep.subr.mxu0 0.0
    %402 = vmatpush1.msra.mxu0 0.0
    %403 = vmatprep.subr.mxu0 0.0
    %404 = vmatpush1.msra.mxu0 0.0
    %405 = vmatprep.subr.mxu0 0.0
    %406 = vmatpush1.msra.mxu0 0.0
    %407 = vmatprep.subr.mxu0 0.0
    %408 = vmatpush1.msra.mxu0 0.0
    %409 = vmatprep.subr.mxu0 0.0
    %410 = vmatpush1.msra.mxu0 0.0
    %411 = vmatprep.subr.mxu0 0.0
    %412 = vmatpush1.msra.mxu0 0.0
    %413 = vmatprep.mubr.f32.mxu0 0.0
    %v414 = vand.u32 %v150, 4294901760
    %v415 = vsub.f32 %v150, %v414
    %416 = vmatmul.mubr.f32.gmra.mrb[0].mxu0 %v415
    %v417 = vpop.f32.mrb[0].mxu0
    %v418 = vadd.f32 %v332, %v417
    %v419 = vpop.f32.mrb[0].mxu0
    %420 = vmatprep.mubr.f32.mxu0 0.0
    %v421 = vand.u32 %v153, 4294901760
    %v422 = vsub.f32 %v153, %v421
    %423 = vmatmul.mubr.f32.gmra.mrb[0].mxu0 %v422
    %v424 = vpop.f32.mrb[0].mxu0
    %v425 = vadd.f32 %v338, %v424
    %v426 = vpop.f32.mrb[0].mxu0
    %427 = vdwg.mxu0
    %428 = vmatprep.subr.mxu0 0.0
    %v429 = vand.u32 %v145, 4294901760
    %430 = vmatpush1.msra.mxu0 %v429
    %431 = vmatprep.subr.mxu0 0.0
    %v432 = vand.u32 %v146, 4294901760
    %433 = vmatpush1.msra.mxu0 %v432
    %434 = vmatprep.subr.mxu0 0.0
    %v435 = vand.u32 %v147, 4294901760
    %436 = vmatpush1.msra.mxu0 %v435
    %437 = vmatprep.subr.mxu0 0.0
    %v438 = vand.u32 %v148, 4294901760
    %439 = vmatpush1.msra.mxu0 %v438
    %440 = vmatprep.subr.mxu0 0.0
    %441 = vmatpush1.msra.mxu0 0.0
    %442 = vmatprep.subr.mxu0 0.0
    %443 = vmatpush1.msra.mxu0 0.0
    %444 = vmatprep.subr.mxu0 0.0
    %445 = vmatpush1.msra.mxu0 0.0
    %446 = vmatprep.subr.mxu0 0.0
    %447 = vmatpush1.msra.mxu0 0.0
    %448 = vmatprep.subr.mxu0 0.0
    %449 = vmatpush1.msra.mxu0 0.0
    %450 = vmatprep.subr.mxu0 0.0
    %451 = vmatpush1.msra.mxu0 0.0
    %452 = vmatprep.subr.mxu0 0.0
    %453 = vmatpush1.msra.mxu0 0.0
    %454 = vmatprep.subr.mxu0 0.0
    %455 = vmatpush1.msra.mxu0 0.0
    %456 = vmatprep.subr.mxu0 0.0
    %457 = vmatpush1.msra.mxu0 0.0
    %458 = vmatprep.subr.mxu0 0.0
    %459 = vmatpush1.msra.mxu0 0.0
    %460 = vmatprep.subr.mxu0 0.0
    %461 = vmatpush1.msra.mxu0 0.0
    %462 = vmatprep.subr.mxu0 0.0
    %463 = vmatpush1.msra.mxu0 0.0
    %464 = vmatprep.subr.mxu0 0.0
    %465 = vmatpush1.msra.mxu0 0.0
    %466 = vmatprep.subr.mxu0 0.0
    %467 = vmatpush1.msra.mxu0 0.0
    %468 = vmatprep.subr.mxu0 0.0
    %469 = vmatpush1.msra.mxu0 0.0
    %470 = vmatprep.subr.mxu0 0.0
    %471 = vmatpush1.msra.mxu0 0.0
    %472 = vmatprep.subr.mxu0 0.0
    %473 = vmatpush1.msra.mxu0 0.0
    %474 = vmatprep.subr.mxu0 0.0
    %475 = vmatpush1.msra.mxu0 0.0
    %476 = vmatprep.subr.mxu0 0.0
    %477 = vmatpush1.msra.mxu0 0.0
    %478 = vmatprep.subr.mxu0 0.0
    %479 = vmatpush1.msra.mxu0 0.0
    %480 = vmatprep.subr.mxu0 0.0
    %481 = vmatpush1.msra.mxu0 0.0
    %482 = vmatprep.subr.mxu0 0.0
    %483 = vmatpush1.msra.mxu0 0.0
    %484 = vmatprep.subr.mxu0 0.0
    %485 = vmatpush1.msra.mxu0 0.0
    %486 = vmatprep.subr.mxu0 0.0
    %487 = vmatpush1.msra.mxu0 0.0
    %488 = vmatprep.subr.mxu0 0.0
    %489 = vmatpush1.msra.mxu0 0.0
    %490 = vmatprep.subr.mxu0 0.0
    %491 = vmatpush1.msra.mxu0 0.0
    %492 = vmatprep.subr.mxu0 0.0
    %493 = vmatpush1.msra.mxu0 0.0
    %494 = vmatprep.subr.mxu0 0.0
    %495 = vmatpush1.msra.mxu0 0.0
    %496 = vmatprep.mubr.f32.mxu0 0.0
    %v497 = vand.u32 %v150, 4294901760
    %v498 = vsub.f32 %v150, %v497
    %v499 = vand.u32 %v498, 4294901760
    %500 = vmatmul.mubr.f32.gmra.mrb[0].mxu0 %v499
    %v501 = vpop.f32.mrb[0].mxu0
    %v502 = vadd.f32 %v418, %v501
    %v503 = vpop.f32.mrb[0].mxu0
    %504 = vmatprep.mubr.f32.mxu0 0.0
    %v505 = vand.u32 %v153, 4294901760
    %v506 = vsub.f32 %v153, %v505
    %v507 = vand.u32 %v506, 4294901760
    %508 = vmatmul.mubr.f32.gmra.mrb[0].mxu0 %v507
    %v509 = vpop.f32.mrb[0].mxu0
    %v510 = vadd.f32 %v425, %v509
    %v511 = vpop.f32.mrb[0].mxu0
    %512 = vdwg.mxu0
    %513 = vmatprep.subr.mxu0 0.0
    %v514 = vand.u32 %v145, 4294901760
    %v515 = vsub.f32 %v145, %v514
    %v516 = vand.u32 %v515, 4294901760
    %517 = vmatpush1.msra.mxu0 %v516
    %518 = vmatprep.subr.mxu0 0.0
    %v519 = vand.u32 %v146, 4294901760
    %v520 = vsub.f32 %v146, %v519
    %v521 = vand.u32 %v520, 4294901760
    %522 = vmatpush1.msra.mxu0 %v521
    %523 = vmatprep.subr.mxu0 0.0
    %v524 = vand.u32 %v147, 4294901760
    %v525 = vsub.f32 %v147, %v524
    %v526 = vand.u32 %v525, 4294901760
    %527 = vmatpush1.msra.mxu0 %v526
    %528 = vmatprep.subr.mxu0 0.0
    %v529 = vand.u32 %v148, 4294901760
    %v530 = vsub.f32 %v148, %v529
    %v531 = vand.u32 %v530, 4294901760
    %532 = vmatpush1.msra.mxu0 %v531
    %533 = vmatprep.subr.mxu0 0.0
    %534 = vmatpush1.msra.mxu0 0.0
    %535 = vmatprep.subr.mxu0 0.0
    %536 = vmatpush1.msra.mxu0 0.0
    %537 = vmatprep.subr.mxu0 0.0
    %538 = vmatpush1.msra.mxu0 0.0
    %539 = vmatprep.subr.mxu0 0.0
    %540 = vmatpush1.msra.mxu0 0.0
    %541 = vmatprep.subr.mxu0 0.0
    %542 = vmatpush1.msra.mxu0 0.0
    %543 = vmatprep.subr.mxu0 0.0
    %544 = vmatpush1.msra.mxu0 0.0
    %545 = vmatprep.subr.mxu0 0.0
    %546 = vmatpush1.msra.mxu0 0.0
    %547 = vmatprep.subr.mxu0 0.0
    %548 = vmatpush1.msra.mxu0 0.0
    %549 = vmatprep.subr.mxu0 0.0
    %550 = vmatpush1.msra.mxu0 0.0
    %551 = vmatprep.subr.mxu0 0.0
    %552 = vmatpush1.msra.mxu0 0.0
    %553 = vmatprep.subr.mxu0 0.0
    %554 = vmatpush1.msra.mxu0 0.0
    %555 = vmatprep.subr.mxu0 0.0
    %556 = vmatpush1.msra.mxu0 0.0
    %557 = vmatprep.subr.mxu0 0.0
    %558 = vmatpush1.msra.mxu0 0.0
    %559 = vmatprep.subr.mxu0 0.0
    %560 = vmatpush1.msra.mxu0 0.0
    %561 = vmatprep.subr.mxu0 0.0
    %562 = vmatpush1.msra.mxu0 0.0
    %563 = vmatprep.subr.mxu0 0.0
    %564 = vmatpush1.msra.mxu0 0.0
    %565 = vmatprep.subr.mxu0 0.0
    %566 = vmatpush1.msra.mxu0 0.0
    %567 = vmatprep.subr.mxu0 0.0
    %568 = vmatpush1.msra.mxu0 0.0
    %569 = vmatprep.subr.mxu0 0.0
    %570 = vmatpush1.msra.mxu0 0.0
    %571 = vmatprep.subr.mxu0 0.0
    %572 = vmatpush1.msra.mxu0 0.0
    %573 = vmatprep.subr.mxu0 0.0
    %574 = vmatpush1.msra.mxu0 0.0
    %575 = vmatprep.subr.mxu0 0.0
    %576 = vmatpush1.msra.mxu0 0.0
    %577 = vmatprep.subr.mxu0 0.0
    %578 = vmatpush1.msra.mxu0 0.0
    %579 = vmatprep.subr.mxu0 0.0
    %580 = vmatpush1.msra.mxu0 0.0
    %581 = vmatprep.subr.mxu0 0.0
    %582 = vmatpush1.msra.mxu0 0.0
    %583 = vmatprep.subr.mxu0 0.0
    %584 = vmatpush1.msra.mxu0 0.0
    %585 = vmatprep.subr.mxu0 0.0
    %586 = vmatpush1.msra.mxu0 0.0
    %587 = vmatprep.subr.mxu0 0.0
    %588 = vmatpush1.msra.mxu0 0.0
    %589 = vmatprep.mubr.f32.mxu0 0.0
    %v590 = vand.u32 %v150, 4294901760
    %591 = vmatmul.mubr.f32.gmra.mrb[0].mxu0 %v590
    %v592 = vpop.f32.mrb[0].mxu0
    %v593 = vadd.f32 %v502, %v592
    %v594 = vpop.f32.mrb[0].mxu0
    %595 = vmatprep.mubr.f32.mxu0 0.0
    %v596 = vand.u32 %v153, 4294901760
    %597 = vmatmul.mubr.f32.gmra.mrb[0].mxu0 %v596
    %v598 = vpop.f32.mrb[0].mxu0
    %v599 = vadd.f32 %v510, %v598
    %v600 = vpop.f32.mrb[0].mxu0
    %601 = vdwg.mxu0
    %602 = vmatprep.subr.mxu0 0.0
    %v603 = vand.u32 %v145, 4294901760
    %604 = vmatpush1.msra.mxu0 %v603
    %605 = vmatprep.subr.mxu0 0.0
    %v606 = vand.u32 %v146, 4294901760
    %607 = vmatpush1.msra.mxu0 %v606
    %608 = vmatprep.subr.mxu0 0.0
    %v609 = vand.u32 %v147, 4294901760
    %610 = vmatpush1.msra.mxu0 %v609
    %611 = vmatprep.subr.mxu0 0.0
    %v612 = vand.u32 %v148, 4294901760
    %613 = vmatpush1.msra.mxu0 %v612
    %614 = vmatprep.subr.mxu0 0.0
    %615 = vmatpush1.msra.mxu0 0.0
    %616 = vmatprep.subr.mxu0 0.0
    %617 = vmatpush1.msra.mxu0 0.0
    %618 = vmatprep.subr.mxu0 0.0
    %619 = vmatpush1.msra.mxu0 0.0
    %620 = vmatprep.subr.mxu0 0.0
    %621 = vmatpush1.msra.mxu0 0.0
    %622 = vmatprep.subr.mxu0 0.0
    %623 = vmatpush1.msra.mxu0 0.0
    %624 = vmatprep.subr.mxu0 0.0
    %625 = vmatpush1.msra.mxu0 0.0
    %626 = vmatprep.subr.mxu0 0.0
    %627 = vmatpush1.msra.mxu0 0.0
    %628 = vmatprep.subr.mxu0 0.0
    %629 = vmatpush1.msra.mxu0 0.0
    %630 = vmatprep.subr.mxu0 0.0
    %631 = vmatpush1.msra.mxu0 0.0
    %632 = vmatprep.subr.mxu0 0.0
    %633 = vmatpush1.msra.mxu0 0.0
    %634 = vmatprep.subr.mxu0 0.0
    %635 = vmatpush1.msra.mxu0 0.0
    %636 = vmatprep.subr.mxu0 0.0
    %637 = vmatpush1.msra.mxu0 0.0
    %638 = vmatprep.subr.mxu0 0.0
    %639 = vmatpush1.msra.mxu0 0.0
    %640 = vmatprep.subr.mxu0 0.0
    %641 = vmatpush1.msra.mxu0 0.0
    %642 = vmatprep.subr.mxu0 0.0
    %643 = vmatpush1.msra.mxu0 0.0
    %644 = vmatprep.subr.mxu0 0.0
    %645 = vmatpush1.msra.mxu0 0.0
    %646 = vmatprep.subr.mxu0 0.0
    %647 = vmatpush1.msra.mxu0 0.0
    %648 = vmatprep.subr.mxu0 0.0
    %649 = vmatpush1.msra.mxu0 0.0
    %650 = vmatprep.subr.mxu0 0.0
    %651 = vmatpush1.msra.mxu0 0.0
    %652 = vmatprep.subr.mxu0 0.0
    %653 = vmatpush1.msra.mxu0 0.0
    %654 = vmatprep.subr.mxu0 0.0
    %655 = vmatpush1.msra.mxu0 0.0
    %656 = vmatprep.subr.mxu0 0.0
    %657 = vmatpush1.msra.mxu0 0.0
    %658 = vmatprep.subr.mxu0 0.0
    %659 = vmatpush1.msra.mxu0 0.0
    %660 = vmatprep.subr.mxu0 0.0
    %661 = vmatpush1.msra.mxu0 0.0
    %662 = vmatprep.subr.mxu0 0.0
    %663 = vmatpush1.msra.mxu0 0.0
    %664 = vmatprep.subr.mxu0 0.0
    %665 = vmatpush1.msra.mxu0 0.0
    %666 = vmatprep.subr.mxu0 0.0
    %667 = vmatpush1.msra.mxu0 0.0
    %668 = vmatprep.subr.mxu0 0.0
    %669 = vmatpush1.msra.mxu0 0.0
    %670 = vmatprep.mubr.f32.mxu0 0.0
    %v671 = vand.u32 %v150, 4294901760
    %672 = vmatmul.mubr.f32.gmra.mrb[0].mxu0 %v671
    %v673 = vpop.f32.mrb[0].mxu0
    %v674 = vadd.f32 %v593, %v673
    %v675 = vpop.f32.mrb[0].mxu0
    %676 = vmatprep.mubr.f32.mxu0 0.0
    %v677 = vand.u32 %v153, 4294901760
    %678 = vmatmul.mubr.f32.gmra.mrb[0].mxu0 %v677
    %v679 = vpop.f32.mrb[0].mxu0
    %v680 = vadd.f32 %v599, %v679
    %v681 = vpop.f32.mrb[0].mxu0
    %682 = vdwg.mxu0
    %v684 = vsel %vm41, %v136, 0
    %v687 = vsel %vm41, %v137, 0
    %689 = vmatprep.subr.mxu0 0.0
    %v690 = vand.u32 %v141, 4294901760
    %691 = vmatpush1.msra.mxu0 %v690
    %692 = vmatprep.subr.mxu0 0.0
    %v693 = vand.u32 %v142, 4294901760
    %694 = vmatpush1.msra.mxu0 %v693
    %695 = vmatprep.subr.mxu0 0.0
    %v696 = vand.u32 %v143, 4294901760
    %697 = vmatpush1.msra.mxu0 %v696
    %698 = vmatprep.subr.mxu0 0.0
    %v699 = vand.u32 %v144, 4294901760
    %700 = vmatpush1.msra.mxu0 %v699
    %701 = vmatprep.subr.mxu0 0.0
    %702 = vmatpush1.msra.mxu0 0.0
    %703 = vmatprep.subr.mxu0 0.0
    %704 = vmatpush1.msra.mxu0 0.0
    %705 = vmatprep.subr.mxu0 0.0
    %706 = vmatpush1.msra.mxu0 0.0
    %707 = vmatprep.subr.mxu0 0.0
    %708 = vmatpush1.msra.mxu0 0.0
    %709 = vmatprep.subr.mxu0 0.0
    %710 = vmatpush1.msra.mxu0 0.0
    %711 = vmatprep.subr.mxu0 0.0
    %712 = vmatpush1.msra.mxu0 0.0
    %713 = vmatprep.subr.mxu0 0.0
    %714 = vmatpush1.msra.mxu0 0.0
    %715 = vmatprep.subr.mxu0 0.0
    %716 = vmatpush1.msra.mxu0 0.0
    %717 = vmatprep.subr.mxu0 0.0
    %718 = vmatpush1.msra.mxu0 0.0
    %719 = vmatprep.subr.mxu0 0.0
    %720 = vmatpush1.msra.mxu0 0.0
    %721 = vmatprep.subr.mxu0 0.0
    %722 = vmatpush1.msra.mxu0 0.0
    %723 = vmatprep.subr.mxu0 0.0
    %724 = vmatpush1.msra.mxu0 0.0
    %725 = vmatprep.subr.mxu0 0.0
    %726 = vmatpush1.msra.mxu0 0.0
    %727 = vmatprep.subr.mxu0 0.0
    %728 = vmatpush1.msra.mxu0 0.0
    %729 = vmatprep.subr.mxu0 0.0
    %730 = vmatpush1.msra.mxu0 0.0
    %731 = vmatprep.subr.mxu0 0.0
    %732 = vmatpush1.msra.mxu0 0.0
    %733 = vmatprep.subr.mxu0 0.0
    %734 = vmatpush1.msra.mxu0 0.0
    %735 = vmatprep.subr.mxu0 0.0
    %736 = vmatpush1.msra.mxu0 0.0
    %737 = vmatprep.subr.mxu0 0.0
    %738 = vmatpush1.msra.mxu0 0.0
    %739 = vmatprep.subr.mxu0 0.0
    %740 = vmatpush1.msra.mxu0 0.0
    %741 = vmatprep.subr.mxu0 0.0
    %742 = vmatpush1.msra.mxu0 0.0
    %743 = vmatprep.subr.mxu0 0.0
    %744 = vmatpush1.msra.mxu0 0.0
    %745 = vmatprep.subr.mxu0 0.0
    %746 = vmatpush1.msra.mxu0 0.0
    %747 = vmatprep.subr.mxu0 0.0
    %748 = vmatpush1.msra.mxu0 0.0
    %749 = vmatprep.subr.mxu0 0.0
    %750 = vmatpush1.msra.mxu0 0.0
    %751 = vmatprep.subr.mxu0 0.0
    %752 = vmatpush1.msra.mxu0 0.0
    %753 = vmatprep.subr.mxu0 0.0
    %754 = vmatpush1.msra.mxu0 0.0
    %755 = vmatprep.subr.mxu0 0.0
    %756 = vmatpush1.msra.mxu0 0.0
    %757 = vmatprep.mubr.f32.mxu0 0.0
    %v758 = vand.u32 %v684, 4294901760
    %v759 = vsub.f32 %v684, %v758
    %v760 = vand.u32 %v759, 4294901760
    %v761 = vsub.f32 %v759, %v760
    %v762 = vand.u32 %v761, 4294901760
    %763 = vmatmul.mubr.f32.gmra.mrb[0].mxu0 %v762
    %v764 = vpop.f32.mrb[0].mxu0
    %v765 = vadd.f32 %v674, %v764
    %v766 = vpop.f32.mrb[0].mxu0
    %767 = vmatprep.mubr.f32.mxu0 0.0
    %v768 = vand.u32 %v687, 4294901760
    %v769 = vsub.f32 %v687, %v768
    %v770 = vand.u32 %v769, 4294901760
    %v771 = vsub.f32 %v769, %v770
    %v772 = vand.u32 %v771, 4294901760
    %773 = vmatmul.mubr.f32.gmra.mrb[0].mxu0 %v772
    %v774 = vpop.f32.mrb[0].mxu0
    %v775 = vadd.f32 %v680, %v774
    %v776 = vpop.f32.mrb[0].mxu0
    %777 = vdwg.mxu0
    %778 = vmatprep.subr.mxu0 0.0
    %v779 = vand.u32 %v141, 4294901760
    %v780 = vsub.f32 %v141, %v779
    %v781 = vand.u32 %v780, 4294901760
    %v782 = vsub.f32 %v780, %v781
    %v783 = vand.u32 %v782, 4294901760
    %784 = vmatpush1.msra.mxu0 %v783
    %785 = vmatprep.subr.mxu0 0.0
    %v786 = vand.u32 %v142, 4294901760
    %v787 = vsub.f32 %v142, %v786
    %v788 = vand.u32 %v787, 4294901760
    %v789 = vsub.f32 %v787, %v788
    %v790 = vand.u32 %v789, 4294901760
    %791 = vmatpush1.msra.mxu0 %v790
    %792 = vmatprep.subr.mxu0 0.0
    %v793 = vand.u32 %v143, 4294901760
    %v794 = vsub.f32 %v143, %v793
    %v795 = vand.u32 %v794, 4294901760
    %v796 = vsub.f32 %v794, %v795
    %v797 = vand.u32 %v796, 4294901760
    %798 = vmatpush1.msra.mxu0 %v797
    %799 = vmatprep.subr.mxu0 0.0
    %v800 = vand.u32 %v144, 4294901760
    %v801 = vsub.f32 %v144, %v800
    %v802 = vand.u32 %v801, 4294901760
    %v803 = vsub.f32 %v801, %v802
    %v804 = vand.u32 %v803, 4294901760
    %805 = vmatpush1.msra.mxu0 %v804
    %806 = vmatprep.subr.mxu0 0.0
    %807 = vmatpush1.msra.mxu0 0.0
    %808 = vmatprep.subr.mxu0 0.0
    %809 = vmatpush1.msra.mxu0 0.0
    %810 = vmatprep.subr.mxu0 0.0
    %811 = vmatpush1.msra.mxu0 0.0
    %812 = vmatprep.subr.mxu0 0.0
    %813 = vmatpush1.msra.mxu0 0.0
    %814 = vmatprep.subr.mxu0 0.0
    %815 = vmatpush1.msra.mxu0 0.0
    %816 = vmatprep.subr.mxu0 0.0
    %817 = vmatpush1.msra.mxu0 0.0
    %818 = vmatprep.subr.mxu0 0.0
    %819 = vmatpush1.msra.mxu0 0.0
    %820 = vmatprep.subr.mxu0 0.0
    %821 = vmatpush1.msra.mxu0 0.0
    %822 = vmatprep.subr.mxu0 0.0
    %823 = vmatpush1.msra.mxu0 0.0
    %824 = vmatprep.subr.mxu0 0.0
    %825 = vmatpush1.msra.mxu0 0.0
    %826 = vmatprep.subr.mxu0 0.0
    %827 = vmatpush1.msra.mxu0 0.0
    %828 = vmatprep.subr.mxu0 0.0
    %829 = vmatpush1.msra.mxu0 0.0
    %830 = vmatprep.subr.mxu0 0.0
    %831 = vmatpush1.msra.mxu0 0.0
    %832 = vmatprep.subr.mxu0 0.0
    %833 = vmatpush1.msra.mxu0 0.0
    %834 = vmatprep.subr.mxu0 0.0
    %835 = vmatpush1.msra.mxu0 0.0
    %836 = vmatprep.subr.mxu0 0.0
    %837 = vmatpush1.msra.mxu0 0.0
    %838 = vmatprep.subr.mxu0 0.0
    %839 = vmatpush1.msra.mxu0 0.0
    %840 = vmatprep.subr.mxu0 0.0
    %841 = vmatpush1.msra.mxu0 0.0
    %842 = vmatprep.subr.mxu0 0.0
    %843 = vmatpush1.msra.mxu0 0.0
    %844 = vmatprep.subr.mxu0 0.0
    %845 = vmatpush1.msra.mxu0 0.0
    %846 = vmatprep.subr.mxu0 0.0
    %847 = vmatpush1.msra.mxu0 0.0
    %848 = vmatprep.subr.mxu0 0.0
    %849 = vmatpush1.msra.mxu0 0.0
    %850 = vmatprep.subr.mxu0 0.0
    %851 = vmatpush1.msra.mxu0 0.0
    %852 = vmatprep.subr.mxu0 0.0
    %853 = vmatpush1.msra.mxu0 0.0
    %854 = vmatprep.subr.mxu0 0.0
    %855 = vmatpush1.msra.mxu0 0.0
    %856 = vmatprep.subr.mxu0 0.0
    %857 = vmatpush1.msra.mxu0 0.0
    %858 = vmatprep.subr.mxu0 0.0
    %859 = vmatpush1.msra.mxu0 0.0
    %860 = vmatprep.subr.mxu0 0.0
    %861 = vmatpush1.msra.mxu0 0.0
    %862 = vmatprep.mubr.f32.mxu0 0.0
    %v863 = vand.u32 %v684, 4294901760
    %864 = vmatmul.mubr.f32.gmra.mrb[0].mxu0 %v863
    %v865 = vpop.f32.mrb[0].mxu0
    %v866 = vadd.f32 %v765, %v865
    %v867 = vpop.f32.mrb[0].mxu0
    %868 = vmatprep.mubr.f32.mxu0 0.0
    %v869 = vand.u32 %v687, 4294901760
    %870 = vmatmul.mubr.f32.gmra.mrb[0].mxu0 %v869
    %v871 = vpop.f32.mrb[0].mxu0
    %v872 = vadd.f32 %v775, %v871
    %v873 = vpop.f32.mrb[0].mxu0
    %874 = vdwg.mxu0
    %875 = vmatprep.subr.mxu0 0.0
    %v876 = vand.u32 %v141, 4294901760
    %v877 = vsub.f32 %v141, %v876
    %878 = vmatpush1.msra.mxu0 %v877
    %879 = vmatprep.subr.mxu0 0.0
    %v880 = vand.u32 %v142, 4294901760
    %v881 = vsub.f32 %v142, %v880
    %882 = vmatpush1.msra.mxu0 %v881
    %883 = vmatprep.subr.mxu0 0.0
    %v884 = vand.u32 %v143, 4294901760
    %v885 = vsub.f32 %v143, %v884
    %886 = vmatpush1.msra.mxu0 %v885
    %887 = vmatprep.subr.mxu0 0.0
    %v888 = vand.u32 %v144, 4294901760
    %v889 = vsub.f32 %v144, %v888
    %890 = vmatpush1.msra.mxu0 %v889
    %891 = vmatprep.subr.mxu0 0.0
    %892 = vmatpush1.msra.mxu0 0.0
    %893 = vmatprep.subr.mxu0 0.0
    %894 = vmatpush1.msra.mxu0 0.0
    %895 = vmatprep.subr.mxu0 0.0
    %896 = vmatpush1.msra.mxu0 0.0
    %897 = vmatprep.subr.mxu0 0.0
    %898 = vmatpush1.msra.mxu0 0.0
    %899 = vmatprep.subr.mxu0 0.0
    %900 = vmatpush1.msra.mxu0 0.0
    %901 = vmatprep.subr.mxu0 0.0
    %902 = vmatpush1.msra.mxu0 0.0
    %903 = vmatprep.subr.mxu0 0.0
    %904 = vmatpush1.msra.mxu0 0.0
    %905 = vmatprep.subr.mxu0 0.0
    %906 = vmatpush1.msra.mxu0 0.0
    %907 = vmatprep.subr.mxu0 0.0
    %908 = vmatpush1.msra.mxu0 0.0
    %909 = vmatprep.subr.mxu0 0.0
    %910 = vmatpush1.msra.mxu0 0.0
    %911 = vmatprep.subr.mxu0 0.0
    %912 = vmatpush1.msra.mxu0 0.0
    %913 = vmatprep.subr.mxu0 0.0
    %914 = vmatpush1.msra.mxu0 0.0
    %915 = vmatprep.subr.mxu0 0.0
    %916 = vmatpush1.msra.mxu0 0.0
    %917 = vmatprep.subr.mxu0 0.0
    %918 = vmatpush1.msra.mxu0 0.0
    %919 = vmatprep.subr.mxu0 0.0
    %920 = vmatpush1.msra.mxu0 0.0
    %921 = vmatprep.subr.mxu0 0.0
    %922 = vmatpush1.msra.mxu0 0.0
    %923 = vmatprep.subr.mxu0 0.0
    %924 = vmatpush1.msra.mxu0 0.0
    %925 = vmatprep.subr.mxu0 0.0
    %926 = vmatpush1.msra.mxu0 0.0
    %927 = vmatprep.subr.mxu0 0.0
    %928 = vmatpush1.msra.mxu0 0.0
    %929 = vmatprep.subr.mxu0 0.0
    %930 = vmatpush1.msra.mxu0 0.0
    %931 = vmatprep.subr.mxu0 0.0
    %932 = vmatpush1.msra.mxu0 0.0
    %933 = vmatprep.subr.mxu0 0.0
    %934 = vmatpush1.msra.mxu0 0.0
    %935 = vmatprep.subr.mxu0 0.0
    %936 = vmatpush1.msra.mxu0 0.0
    %937 = vmatprep.subr.mxu0 0.0
    %938 = vmatpush1.msra.mxu0 0.0
    %939 = vmatprep.subr.mxu0 0.0
    %940 = vmatpush1.msra.mxu0 0.0
    %941 = vmatprep.subr.mxu0 0.0
    %942 = vmatpush1.msra.mxu0 0.0
    %943 = vmatprep.subr.mxu0 0.0
    %944 = vmatpush1.msra.mxu0 0.0
    %945 = vmatprep.subr.mxu0 0.0
    %946 = vmatpush1.msra.mxu0 0.0
    %947 = vmatprep.mubr.f32.mxu0 0.0
    %v948 = vand.u32 %v684, 4294901760
    %v949 = vsub.f32 %v684, %v948
    %950 = vmatmul.mubr.f32.gmra.mrb[0].mxu0 %v949
    %v951 = vpop.f32.mrb[0].mxu0
    %v952 = vadd.f32 %v866, %v951
    %v953 = vpop.f32.mrb[0].mxu0
    %954 = vmatprep.mubr.f32.mxu0 0.0
    %v955 = vand.u32 %v687, 4294901760
    %v956 = vsub.f32 %v687, %v955
    %957 = vmatmul.mubr.f32.gmra.mrb[0].mxu0 %v956
    %v958 = vpop.f32.mrb[0].mxu0
    %v959 = vadd.f32 %v872, %v958
    %v960 = vpop.f32.mrb[0].mxu0
    %961 = vdwg.mxu0
    %962 = vmatprep.subr.mxu0 0.0
    %v963 = vand.u32 %v141, 4294901760
    %964 = vmatpush1.msra.mxu0 %v963
    %965 = vmatprep.subr.mxu0 0.0
    %v966 = vand.u32 %v142, 4294901760
    %967 = vmatpush1.msra.mxu0 %v966
    %968 = vmatprep.subr.mxu0 0.0
    %v969 = vand.u32 %v143, 4294901760
    %970 = vmatpush1.msra.mxu0 %v969
    %971 = vmatprep.subr.mxu0 0.0
    %v972 = vand.u32 %v144, 4294901760
    %973 = vmatpush1.msra.mxu0 %v972
    %974 = vmatprep.subr.mxu0 0.0
    %975 = vmatpush1.msra.mxu0 0.0
    %976 = vmatprep.subr.mxu0 0.0
    %977 = vmatpush1.msra.mxu0 0.0
    %978 = vmatprep.subr.mxu0 0.0
    %979 = vmatpush1.msra.mxu0 0.0
    %980 = vmatprep.subr.mxu0 0.0
    %981 = vmatpush1.msra.mxu0 0.0
    %982 = vmatprep.subr.mxu0 0.0
    %983 = vmatpush1.msra.mxu0 0.0
    %984 = vmatprep.subr.mxu0 0.0
    %985 = vmatpush1.msra.mxu0 0.0
    %986 = vmatprep.subr.mxu0 0.0
    %987 = vmatpush1.msra.mxu0 0.0
    %988 = vmatprep.subr.mxu0 0.0
    %989 = vmatpush1.msra.mxu0 0.0
    %990 = vmatprep.subr.mxu0 0.0
    %991 = vmatpush1.msra.mxu0 0.0
    %992 = vmatprep.subr.mxu0 0.0
    %993 = vmatpush1.msra.mxu0 0.0
    %994 = vmatprep.subr.mxu0 0.0
    %995 = vmatpush1.msra.mxu0 0.0
    %996 = vmatprep.subr.mxu0 0.0
    %997 = vmatpush1.msra.mxu0 0.0
    %998 = vmatprep.subr.mxu0 0.0
    %999 = vmatpush1.msra.mxu0 0.0
    %1000 = vmatprep.subr.mxu0 0.0
    %1001 = vmatpush1.msra.mxu0 0.0
    %1002 = vmatprep.subr.mxu0 0.0
    %1003 = vmatpush1.msra.mxu0 0.0
    %1004 = vmatprep.subr.mxu0 0.0
    %1005 = vmatpush1.msra.mxu0 0.0
    %1006 = vmatprep.subr.mxu0 0.0
    %1007 = vmatpush1.msra.mxu0 0.0
    %1008 = vmatprep.subr.mxu0 0.0
    %1009 = vmatpush1.msra.mxu0 0.0
    %1010 = vmatprep.subr.mxu0 0.0
    %1011 = vmatpush1.msra.mxu0 0.0
    %1012 = vmatprep.subr.mxu0 0.0
    %1013 = vmatpush1.msra.mxu0 0.0
    %1014 = vmatprep.subr.mxu0 0.0
    %1015 = vmatpush1.msra.mxu0 0.0
    %1016 = vmatprep.subr.mxu0 0.0
    %1017 = vmatpush1.msra.mxu0 0.0
    %1018 = vmatprep.subr.mxu0 0.0
    %1019 = vmatpush1.msra.mxu0 0.0
    %1020 = vmatprep.subr.mxu0 0.0
    %1021 = vmatpush1.msra.mxu0 0.0
    %1022 = vmatprep.subr.mxu0 0.0
    %1023 = vmatpush1.msra.mxu0 0.0
    %1024 = vmatprep.subr.mxu0 0.0
    %1025 = vmatpush1.msra.mxu0 0.0
    %1026 = vmatprep.subr.mxu0 0.0
    %1027 = vmatpush1.msra.mxu0 0.0
    %1028 = vmatprep.subr.mxu0 0.0
    %1029 = vmatpush1.msra.mxu0 0.0
    %1030 = vmatprep.mubr.f32.mxu0 0.0
    %v1031 = vand.u32 %v684, 4294901760
    %v1032 = vsub.f32 %v684, %v1031
    %v1033 = vand.u32 %v1032, 4294901760
    %1034 = vmatmul.mubr.f32.gmra.mrb[0].mxu0 %v1033
    %v1035 = vpop.f32.mrb[0].mxu0
    %v1036 = vadd.f32 %v952, %v1035
    %v1037 = vpop.f32.mrb[0].mxu0
    %1038 = vmatprep.mubr.f32.mxu0 0.0
    %v1039 = vand.u32 %v687, 4294901760
    %v1040 = vsub.f32 %v687, %v1039
    %v1041 = vand.u32 %v1040, 4294901760
    %1042 = vmatmul.mubr.f32.gmra.mrb[0].mxu0 %v1041
    %v1043 = vpop.f32.mrb[0].mxu0
    %v1044 = vadd.f32 %v959, %v1043
    %v1045 = vpop.f32.mrb[0].mxu0
    %1046 = vdwg.mxu0
    %1047 = vmatprep.subr.mxu0 0.0
    %v1048 = vand.u32 %v141, 4294901760
    %v1049 = vsub.f32 %v141, %v1048
    %v1050 = vand.u32 %v1049, 4294901760
    %1051 = vmatpush1.msra.mxu0 %v1050
    %1052 = vmatprep.subr.mxu0 0.0
    %v1053 = vand.u32 %v142, 4294901760
    %v1054 = vsub.f32 %v142, %v1053
    %v1055 = vand.u32 %v1054, 4294901760
    %1056 = vmatpush1.msra.mxu0 %v1055
    %1057 = vmatprep.subr.mxu0 0.0
    %v1058 = vand.u32 %v143, 4294901760
    %v1059 = vsub.f32 %v143, %v1058
    %v1060 = vand.u32 %v1059, 4294901760
    %1061 = vmatpush1.msra.mxu0 %v1060
    %1062 = vmatprep.subr.mxu0 0.0
    %v1063 = vand.u32 %v144, 4294901760
    %v1064 = vsub.f32 %v144, %v1063
    %v1065 = vand.u32 %v1064, 4294901760
    %1066 = vmatpush1.msra.mxu0 %v1065
    %1067 = vmatprep.subr.mxu0 0.0
    %1068 = vmatpush1.msra.mxu0 0.0
    %1069 = vmatprep.subr.mxu0 0.0
    %1070 = vmatpush1.msra.mxu0 0.0
    %1071 = vmatprep.subr.mxu0 0.0
    %1072 = vmatpush1.msra.mxu0 0.0
    %1073 = vmatprep.subr.mxu0 0.0
    %1074 = vmatpush1.msra.mxu0 0.0
    %1075 = vmatprep.subr.mxu0 0.0
    %1076 = vmatpush1.msra.mxu0 0.0
    %1077 = vmatprep.subr.mxu0 0.0
    %1078 = vmatpush1.msra.mxu0 0.0
    %1079 = vmatprep.subr.mxu0 0.0
    %1080 = vmatpush1.msra.mxu0 0.0
    %1081 = vmatprep.subr.mxu0 0.0
    %1082 = vmatpush1.msra.mxu0 0.0
    %1083 = vmatprep.subr.mxu0 0.0
    %1084 = vmatpush1.msra.mxu0 0.0
    %1085 = vmatprep.subr.mxu0 0.0
    %1086 = vmatpush1.msra.mxu0 0.0
    %1087 = vmatprep.subr.mxu0 0.0
    %1088 = vmatpush1.msra.mxu0 0.0
    %1089 = vmatprep.subr.mxu0 0.0
    %1090 = vmatpush1.msra.mxu0 0.0
    %1091 = vmatprep.subr.mxu0 0.0
    %1092 = vmatpush1.msra.mxu0 0.0
    %1093 = vmatprep.subr.mxu0 0.0
    %1094 = vmatpush1.msra.mxu0 0.0
    %1095 = vmatprep.subr.mxu0 0.0
    %1096 = vmatpush1.msra.mxu0 0.0
    %1097 = vmatprep.subr.mxu0 0.0
    %1098 = vmatpush1.msra.mxu0 0.0
    %1099 = vmatprep.subr.mxu0 0.0
    %1100 = vmatpush1.msra.mxu0 0.0
    %1101 = vmatprep.subr.mxu0 0.0
    %1102 = vmatpush1.msra.mxu0 0.0
    %1103 = vmatprep.subr.mxu0 0.0
    %1104 = vmatpush1.msra.mxu0 0.0
    %1105 = vmatprep.subr.mxu0 0.0
    %1106 = vmatpush1.msra.mxu0 0.0
    %1107 = vmatprep.subr.mxu0 0.0
    %1108 = vmatpush1.msra.mxu0 0.0
    %1109 = vmatprep.subr.mxu0 0.0
    %1110 = vmatpush1.msra.mxu0 0.0
    %1111 = vmatprep.subr.mxu0 0.0
    %1112 = vmatpush1.msra.mxu0 0.0
    %1113 = vmatprep.subr.mxu0 0.0
    %1114 = vmatpush1.msra.mxu0 0.0
    %1115 = vmatprep.subr.mxu0 0.0
    %1116 = vmatpush1.msra.mxu0 0.0
    %1117 = vmatprep.subr.mxu0 0.0
    %1118 = vmatpush1.msra.mxu0 0.0
    %1119 = vmatprep.subr.mxu0 0.0
    %1120 = vmatpush1.msra.mxu0 0.0
    %1121 = vmatprep.subr.mxu0 0.0
    %1122 = vmatpush1.msra.mxu0 0.0
    %1123 = vmatprep.mubr.f32.mxu0 0.0
    %v1124 = vand.u32 %v684, 4294901760
    %1125 = vmatmul.mubr.f32.gmra.mrb[0].mxu0 %v1124
    %v1126 = vpop.f32.mrb[0].mxu0
    %v1127 = vadd.f32 %v1036, %v1126
    %v1128 = vpop.f32.mrb[0].mxu0
    %1129 = vmatprep.mubr.f32.mxu0 0.0
    %v1130 = vand.u32 %v687, 4294901760
    %1131 = vmatmul.mubr.f32.gmra.mrb[0].mxu0 %v1130
    %v1132 = vpop.f32.mrb[0].mxu0
    %v1133 = vadd.f32 %v1044, %v1132
    %v1134 = vpop.f32.mrb[0].mxu0
    %1135 = vdwg.mxu0
    %1136 = vmatprep.subr.mxu0 0.0
    %v1137 = vand.u32 %v141, 4294901760
    %1138 = vmatpush1.msra.mxu0 %v1137
    %1139 = vmatprep.subr.mxu0 0.0
    %v1140 = vand.u32 %v142, 4294901760
    %1141 = vmatpush1.msra.mxu0 %v1140
    %1142 = vmatprep.subr.mxu0 0.0
    %v1143 = vand.u32 %v143, 4294901760
    %1144 = vmatpush1.msra.mxu0 %v1143
    %1145 = vmatprep.subr.mxu0 0.0
    %v1146 = vand.u32 %v144, 4294901760
    %1147 = vmatpush1.msra.mxu0 %v1146
    %1148 = vmatprep.subr.mxu0 0.0
    %1149 = vmatpush1.msra.mxu0 0.0
    %1150 = vmatprep.subr.mxu0 0.0
    %1151 = vmatpush1.msra.mxu0 0.0
    %1152 = vmatprep.subr.mxu0 0.0
    %1153 = vmatpush1.msra.mxu0 0.0
    %1154 = vmatprep.subr.mxu0 0.0
    %1155 = vmatpush1.msra.mxu0 0.0
    %1156 = vmatprep.subr.mxu0 0.0
    %1157 = vmatpush1.msra.mxu0 0.0
    %1158 = vmatprep.subr.mxu0 0.0
    %1159 = vmatpush1.msra.mxu0 0.0
    %1160 = vmatprep.subr.mxu0 0.0
    %1161 = vmatpush1.msra.mxu0 0.0
    %1162 = vmatprep.subr.mxu0 0.0
    %1163 = vmatpush1.msra.mxu0 0.0
    %1164 = vmatprep.subr.mxu0 0.0
    %1165 = vmatpush1.msra.mxu0 0.0
    %1166 = vmatprep.subr.mxu0 0.0
    %1167 = vmatpush1.msra.mxu0 0.0
    %1168 = vmatprep.subr.mxu0 0.0
    %1169 = vmatpush1.msra.mxu0 0.0
    %1170 = vmatprep.subr.mxu0 0.0
    %1171 = vmatpush1.msra.mxu0 0.0
    %1172 = vmatprep.subr.mxu0 0.0
    %1173 = vmatpush1.msra.mxu0 0.0
    %1174 = vmatprep.subr.mxu0 0.0
    %1175 = vmatpush1.msra.mxu0 0.0
    %1176 = vmatprep.subr.mxu0 0.0
    %1177 = vmatpush1.msra.mxu0 0.0
    %1178 = vmatprep.subr.mxu0 0.0
    %1179 = vmatpush1.msra.mxu0 0.0
    %1180 = vmatprep.subr.mxu0 0.0
    %1181 = vmatpush1.msra.mxu0 0.0
    %1182 = vmatprep.subr.mxu0 0.0
    %1183 = vmatpush1.msra.mxu0 0.0
    %1184 = vmatprep.subr.mxu0 0.0
    %1185 = vmatpush1.msra.mxu0 0.0
    %1186 = vmatprep.subr.mxu0 0.0
    %1187 = vmatpush1.msra.mxu0 0.0
    %1188 = vmatprep.subr.mxu0 0.0
    %1189 = vmatpush1.msra.mxu0 0.0
    %1190 = vmatprep.subr.mxu0 0.0
    %1191 = vmatpush1.msra.mxu0 0.0
    %1192 = vmatprep.subr.mxu0 0.0
    %1193 = vmatpush1.msra.mxu0 0.0
    %1194 = vmatprep.subr.mxu0 0.0
    %1195 = vmatpush1.msra.mxu0 0.0
    %1196 = vmatprep.subr.mxu0 0.0
    %1197 = vmatpush1.msra.mxu0 0.0
    %1198 = vmatprep.subr.mxu0 0.0
    %1199 = vmatpush1.msra.mxu0 0.0
    %1200 = vmatprep.subr.mxu0 0.0
    %1201 = vmatpush1.msra.mxu0 0.0
    %1202 = vmatprep.subr.mxu0 0.0
    %1203 = vmatpush1.msra.mxu0 0.0
    %1204 = vmatprep.mubr.f32.mxu0 0.0
    %v1205 = vand.u32 %v684, 4294901760
    %1206 = vmatmul.mubr.f32.gmra.mrb[0].mxu0 %v1205
    %v1207 = vpop.f32.mrb[0].mxu0
    %v1208 = vadd.f32 %v1127, %v1207
    %v1209 = vpop.f32.mrb[0].mxu0
    %1210 = vmatprep.mubr.f32.mxu0 0.0
    %v1211 = vand.u32 %v687, 4294901760
    %1212 = vmatmul.mubr.f32.gmra.mrb[0].mxu0 %v1211
    %v1213 = vpop.f32.mrb[0].mxu0
    %v1214 = vadd.f32 %v1133, %v1213
    %v1215 = vpop.f32.mrb[0].mxu0
    %1216 = vdwg.mxu0
    %v1217 = vld [vmem:[%s6] sm:$0xff]
    %v1218 = vld [vmem:[%s6 + $0x8] sm:$0xff]
    %vm1219 = vcmask 31744
    %v1221 = vsel %vm1219, %v1208, 0
    %v1224 = vsel %vm1219, %v1214, 0
    %1226 = vmatprep.subr.mxu0 0.0
    %v1227 = vand.u32 %v1221, 4294901760
    %1228 = vmatpush1.xpose.msra.mxu0 %v1227
    %1229 = vmatprep.subr.mxu0 0.0
    %v1230 = vand.u32 %v1224, 4294901760
    %1231 = vmatpush1.xpose.msra.mxu0 %v1230
    %1232 = vmatprep.subr.mxu0 0.0
    %1233 = vmatpush1.xpose.msra.mxu0 0.0
    %1234 = vmatprep.subr.mxu0 0.0
    %1235 = vmatpush1.xpose.msra.mxu0 0.0
    %1236 = vmatprep.subr.mxu0 0.0
    %1237 = vmatpush1.xpose.msra.mxu0 0.0
    %1238 = vmatprep.subr.mxu0 0.0
    %1239 = vmatpush1.xpose.msra.mxu0 0.0
    %1240 = vmatprep.subr.mxu0 0.0
    %1241 = vmatpush1.xpose.msra.mxu0 0.0
    %1242 = vmatprep.subr.mxu0 0.0
    %1243 = vmatpush1.xpose.msra.mxu0 0.0
    %1244 = vmatprep.subr.mxu0 0.0
    %1245 = vmatpush1.xpose.msra.mxu0 0.0
    %1246 = vmatprep.subr.mxu0 0.0
    %1247 = vmatpush1.xpose.msra.mxu0 0.0
    %1248 = vmatprep.subr.mxu0 0.0
    %1249 = vmatpush1.xpose.msra.mxu0 0.0
    %1250 = vmatprep.subr.mxu0 0.0
    %1251 = vmatpush1.xpose.msra.mxu0 0.0
    %1252 = vmatprep.subr.mxu0 0.0
    %1253 = vmatpush1.xpose.msra.mxu0 0.0
    %1254 = vmatprep.subr.mxu0 0.0
    %1255 = vmatpush1.xpose.msra.mxu0 0.0
    %1256 = vmatprep.subr.mxu0 0.0
    %1257 = vmatpush1.xpose.msra.mxu0 0.0
    %1258 = vmatprep.subr.mxu0 0.0
    %1259 = vmatpush1.xpose.msra.mxu0 0.0
    %1260 = vmatprep.subr.mxu0 0.0
    %1261 = vmatpush1.xpose.msra.mxu0 0.0
    %1262 = vmatprep.subr.mxu0 0.0
    %1263 = vmatpush1.xpose.msra.mxu0 0.0
    %1264 = vmatprep.subr.mxu0 0.0
    %1265 = vmatpush1.xpose.msra.mxu0 0.0
    %1266 = vmatprep.subr.mxu0 0.0
    %1267 = vmatpush1.xpose.msra.mxu0 0.0
    %1268 = vmatprep.subr.mxu0 0.0
    %1269 = vmatpush1.xpose.msra.mxu0 0.0
    %1270 = vmatprep.subr.mxu0 0.0
    %1271 = vmatpush1.xpose.msra.mxu0 0.0
    %1272 = vmatprep.subr.mxu0 0.0
    %1273 = vmatpush1.xpose.msra.mxu0 0.0
    %1274 = vmatprep.subr.mxu0 0.0
    %1275 = vmatpush1.xpose.msra.mxu0 0.0
    %1276 = vmatprep.subr.mxu0 0.0
    %1277 = vmatpush1.xpose.msra.mxu0 0.0
    %1278 = vmatprep.subr.mxu0 0.0
    %1279 = vmatpush1.xpose.msra.mxu0 0.0
    %1280 = vmatprep.subr.mxu0 0.0
    %1281 = vmatpush1.xpose.msra.mxu0 0.0
    %1282 = vmatprep.subr.mxu0 0.0
    %1283 = vmatpush1.xpose.msra.mxu0 0.0
    %1284 = vmatprep.subr.mxu0 0.0
    %1285 = vmatpush1.xpose.msra.mxu0 0.0
    %1286 = vmatprep.subr.mxu0 0.0
    %1287 = vmatpush1.xpose.msra.mxu0 0.0
    %1288 = vmatprep.subr.mxu0 0.0
    %1289 = vmatpush1.xpose.msra.mxu0 0.0
    %1290 = vmatprep.subr.mxu0 0.0
    %1291 = vmatpush1.xpose.msra.mxu0 0.0
    %1292 = vmatprep.mubr.f32.mxu0 0.0
    %v1293 = vand.u32 %v1221, 4294901760
    %v1294 = vsub.f32 %v1221, %v1293
    %v1295 = vand.u32 %v1294, 4294901760
    %v1296 = vsub.f32 %v1294, %v1295
    %v1297 = vand.u32 %v1296, 4294901760
    %1298 = vmatmul.mubr.f32.gmra.mrb[0].mxu0 %v1297
    %v1299 = vpop.f32.mrb[0].mxu0
    %v1300 = vadd.f32 %v1217, %v1299
    %v1301 = vpop.f32.mrb[0].mxu0
    %1302 = vmatprep.mubr.f32.mxu0 0.0
    %v1303 = vand.u32 %v1224, 4294901760
    %v1304 = vsub.f32 %v1224, %v1303
    %v1305 = vand.u32 %v1304, 4294901760
    %v1306 = vsub.f32 %v1304, %v1305
    %v1307 = vand.u32 %v1306, 4294901760
    %1308 = vmatmul.mubr.f32.gmra.mrb[0].mxu0 %v1307
    %v1309 = vpop.f32.mrb[0].mxu0
    %v1310 = vadd.f32 %v1218, %v1309
    %v1311 = vpop.f32.mrb[0].mxu0
    %1312 = vdwg.mxu0
    %1313 = vmatprep.subr.mxu0 0.0
    %v1314 = vand.u32 %v1221, 4294901760
    %v1315 = vsub.f32 %v1221, %v1314
    %v1316 = vand.u32 %v1315, 4294901760
    %v1317 = vsub.f32 %v1315, %v1316
    %v1318 = vand.u32 %v1317, 4294901760
    %1319 = vmatpush1.xpose.msra.mxu0 %v1318
    %1320 = vmatprep.subr.mxu0 0.0
    %v1321 = vand.u32 %v1224, 4294901760
    %v1322 = vsub.f32 %v1224, %v1321
    %v1323 = vand.u32 %v1322, 4294901760
    %v1324 = vsub.f32 %v1322, %v1323
    %v1325 = vand.u32 %v1324, 4294901760
    %1326 = vmatpush1.xpose.msra.mxu0 %v1325
    %1327 = vmatprep.subr.mxu0 0.0
    %1328 = vmatpush1.xpose.msra.mxu0 0.0
    %1329 = vmatprep.subr.mxu0 0.0
    %1330 = vmatpush1.xpose.msra.mxu0 0.0
    %1331 = vmatprep.subr.mxu0 0.0
    %1332 = vmatpush1.xpose.msra.mxu0 0.0
    %1333 = vmatprep.subr.mxu0 0.0
    %1334 = vmatpush1.xpose.msra.mxu0 0.0
    %1335 = vmatprep.subr.mxu0 0.0
    %1336 = vmatpush1.xpose.msra.mxu0 0.0
    %1337 = vmatprep.subr.mxu0 0.0
    %1338 = vmatpush1.xpose.msra.mxu0 0.0
    %1339 = vmatprep.subr.mxu0 0.0
    %1340 = vmatpush1.xpose.msra.mxu0 0.0
    %1341 = vmatprep.subr.mxu0 0.0
    %1342 = vmatpush1.xpose.msra.mxu0 0.0
    %1343 = vmatprep.subr.mxu0 0.0
    %1344 = vmatpush1.xpose.msra.mxu0 0.0
    %1345 = vmatprep.subr.mxu0 0.0
    %1346 = vmatpush1.xpose.msra.mxu0 0.0
    %1347 = vmatprep.subr.mxu0 0.0
    %1348 = vmatpush1.xpose.msra.mxu0 0.0
    %1349 = vmatprep.subr.mxu0 0.0
    %1350 = vmatpush1.xpose.msra.mxu0 0.0
    %1351 = vmatprep.subr.mxu0 0.0
    %1352 = vmatpush1.xpose.msra.mxu0 0.0
    %1353 = vmatprep.subr.mxu0 0.0
    %1354 = vmatpush1.xpose.msra.mxu0 0.0
    %1355 = vmatprep.subr.mxu0 0.0
    %1356 = vmatpush1.xpose.msra.mxu0 0.0
    %1357 = vmatprep.subr.mxu0 0.0
    %1358 = vmatpush1.xpose.msra.mxu0 0.0
    %1359 = vmatprep.subr.mxu0 0.0
    %1360 = vmatpush1.xpose.msra.mxu0 0.0
    %1361 = vmatprep.subr.mxu0 0.0
    %1362 = vmatpush1.xpose.msra.mxu0 0.0
    %1363 = vmatprep.subr.mxu0 0.0
    %1364 = vmatpush1.xpose.msra.mxu0 0.0
    %1365 = vmatprep.subr.mxu0 0.0
    %1366 = vmatpush1.xpose.msra.mxu0 0.0
    %1367 = vmatprep.subr.mxu0 0.0
    %1368 = vmatpush1.xpose.msra.mxu0 0.0
    %1369 = vmatprep.subr.mxu0 0.0
    %1370 = vmatpush1.xpose.msra.mxu0 0.0
    %1371 = vmatprep.subr.mxu0 0.0
    %1372 = vmatpush1.xpose.msra.mxu0 0.0
    %1373 = vmatprep.subr.mxu0 0.0
    %1374 = vmatpush1.xpose.msra.mxu0 0.0
    %1375 = vmatprep.subr.mxu0 0.0
    %1376 = vmatpush1.xpose.msra.mxu0 0.0
    %1377 = vmatprep.subr.mxu0 0.0
    %1378 = vmatpush1.xpose.msra.mxu0 0.0
    %1379 = vmatprep.subr.mxu0 0.0
    %1380 = vmatpush1.xpose.msra.mxu0 0.0
    %1381 = vmatprep.subr.mxu0 0.0
    %1382 = vmatpush1.xpose.msra.mxu0 0.0
    %1383 = vmatprep.subr.mxu0 0.0
    %1384 = vmatpush1.xpose.msra.mxu0 0.0
    %1385 = vmatprep.subr.mxu0 0.0
    %1386 = vmatpush1.xpose.msra.mxu0 0.0
    %1387 = vmatprep.mubr.f32.mxu0 0.0
    %v1388 = vand.u32 %v1221, 4294901760
    %1389 = vmatmul.mubr.f32.gmra.mrb[0].mxu0 %v1388
    %v1390 = vpop.f32.mrb[0].mxu0
    %v1391 = vadd.f32 %v1300, %v1390
    %v1392 = vpop.f32.mrb[0].mxu0
    %1393 = vmatprep.mubr.f32.mxu0 0.0
    %v1394 = vand.u32 %v1224, 4294901760
    %1395 = vmatmul.mubr.f32.gmra.mrb[0].mxu0 %v1394
    %v1396 = vpop.f32.mrb[0].mxu0
    %v1397 = vadd.f32 %v1310, %v1396
    %v1398 = vpop.f32.mrb[0].mxu0
    %1399 = vdwg.mxu0
    %1400 = vmatprep.subr.mxu0 0.0
    %v1401 = vand.u32 %v1221, 4294901760
    %v1402 = vsub.f32 %v1221, %v1401
    %1403 = vmatpush1.xpose.msra.mxu0 %v1402
    %1404 = vmatprep.subr.mxu0 0.0
    %v1405 = vand.u32 %v1224, 4294901760
    %v1406 = vsub.f32 %v1224, %v1405
    %1407 = vmatpush1.xpose.msra.mxu0 %v1406
    %1408 = vmatprep.subr.mxu0 0.0
    %1409 = vmatpush1.xpose.msra.mxu0 0.0
    %1410 = vmatprep.subr.mxu0 0.0
    %1411 = vmatpush1.xpose.msra.mxu0 0.0
    %1412 = vmatprep.subr.mxu0 0.0
    %1413 = vmatpush1.xpose.msra.mxu0 0.0
    %1414 = vmatprep.subr.mxu0 0.0
    %1415 = vmatpush1.xpose.msra.mxu0 0.0
    %1416 = vmatprep.subr.mxu0 0.0
    %1417 = vmatpush1.xpose.msra.mxu0 0.0
    %1418 = vmatprep.subr.mxu0 0.0
    %1419 = vmatpush1.xpose.msra.mxu0 0.0
    %1420 = vmatprep.subr.mxu0 0.0
    %1421 = vmatpush1.xpose.msra.mxu0 0.0
    %1422 = vmatprep.subr.mxu0 0.0
    %1423 = vmatpush1.xpose.msra.mxu0 0.0
    %1424 = vmatprep.subr.mxu0 0.0
    %1425 = vmatpush1.xpose.msra.mxu0 0.0
    %1426 = vmatprep.subr.mxu0 0.0
    %1427 = vmatpush1.xpose.msra.mxu0 0.0
    %1428 = vmatprep.subr.mxu0 0.0
    %1429 = vmatpush1.xpose.msra.mxu0 0.0
    %1430 = vmatprep.subr.mxu0 0.0
    %1431 = vmatpush1.xpose.msra.mxu0 0.0
    %1432 = vmatprep.subr.mxu0 0.0
    %1433 = vmatpush1.xpose.msra.mxu0 0.0
    %1434 = vmatprep.subr.mxu0 0.0
    %1435 = vmatpush1.xpose.msra.mxu0 0.0
    %1436 = vmatprep.subr.mxu0 0.0
    %1437 = vmatpush1.xpose.msra.mxu0 0.0
    %1438 = vmatprep.subr.mxu0 0.0
    %1439 = vmatpush1.xpose.msra.mxu0 0.0
    %1440 = vmatprep.subr.mxu0 0.0
    %1441 = vmatpush1.xpose.msra.mxu0 0.0
    %1442 = vmatprep.subr.mxu0 0.0
    %1443 = vmatpush1.xpose.msra.mxu0 0.0
    %1444 = vmatprep.subr.mxu0 0.0
    %1445 = vmatpush1.xpose.msra.mxu0 0.0
    %1446 = vmatprep.subr.mxu0 0.0
    %1447 = vmatpush1.xpose.msra.mxu0 0.0
    %1448 = vmatprep.subr.mxu0 0.0
    %1449 = vmatpush1.xpose.msra.mxu0 0.0
    %1450 = vmatprep.subr.mxu0 0.0
    %1451 = vmatpush1.xpose.msra.mxu0 0.0
    %1452 = vmatprep.subr.mxu0 0.0
    %1453 = vmatpush1.xpose.msra.mxu0 0.0
    %1454 = vmatprep.subr.mxu0 0.0
    %1455 = vmatpush1.xpose.msra.mxu0 0.0
    %1456 = vmatprep.subr.mxu0 0.0
    %1457 = vmatpush1.xpose.msra.mxu0 0.0
    %1458 = vmatprep.subr.mxu0 0.0
    %1459 = vmatpush1.xpose.msra.mxu0 0.0
    %1460 = vmatprep.subr.mxu0 0.0
    %1461 = vmatpush1.xpose.msra.mxu0 0.0
    %1462 = vmatprep.subr.mxu0 0.0
    %1463 = vmatpush1.xpose.msra.mxu0 0.0
    %1464 = vmatprep.subr.mxu0 0.0
    %1465 = vmatpush1.xpose.msra.mxu0 0.0
    %1466 = vmatprep.subr.mxu0 0.0
    %1467 = vmatpush1.xpose.msra.mxu0 0.0
    %1468 = vmatprep.mubr.f32.mxu0 0.0
    %v1469 = vand.u32 %v1221, 4294901760
    %v1470 = vsub.f32 %v1221, %v1469
    %1471 = vmatmul.mubr.f32.gmra.mrb[0].mxu0 %v1470
    %v1472 = vpop.f32.mrb[0].mxu0
    %v1473 = vadd.f32 %v1391, %v1472
    %v1474 = vpop.f32.mrb[0].mxu0
    %1475 = vmatprep.mubr.f32.mxu0 0.0
    %v1476 = vand.u32 %v1224, 4294901760
    %v1477 = vsub.f32 %v1224, %v1476
    %1478 = vmatmul.mubr.f32.gmra.mrb[0].mxu0 %v1477
    %v1479 = vpop.f32.mrb[0].mxu0
    %v1480 = vadd.f32 %v1397, %v1479
    %v1481 = vpop.f32.mrb[0].mxu0
    %1482 = vdwg.mxu0
    %1483 = vmatprep.subr.mxu0 0.0
    %v1484 = vand.u32 %v1221, 4294901760
    %1485 = vmatpush1.xpose.msra.mxu0 %v1484
    %1486 = vmatprep.subr.mxu0 0.0
    %v1487 = vand.u32 %v1224, 4294901760
    %1488 = vmatpush1.xpose.msra.mxu0 %v1487
    %1489 = vmatprep.subr.mxu0 0.0
    %1490 = vmatpush1.xpose.msra.mxu0 0.0
    %1491 = vmatprep.subr.mxu0 0.0
    %1492 = vmatpush1.xpose.msra.mxu0 0.0
    %1493 = vmatprep.subr.mxu0 0.0
    %1494 = vmatpush1.xpose.msra.mxu0 0.0
    %1495 = vmatprep.subr.mxu0 0.0
    %1496 = vmatpush1.xpose.msra.mxu0 0.0
    %1497 = vmatprep.subr.mxu0 0.0
    %1498 = vmatpush1.xpose.msra.mxu0 0.0
    %1499 = vmatprep.subr.mxu0 0.0
    %1500 = vmatpush1.xpose.msra.mxu0 0.0
    %1501 = vmatprep.subr.mxu0 0.0
    %1502 = vmatpush1.xpose.msra.mxu0 0.0
    %1503 = vmatprep.subr.mxu0 0.0
    %1504 = vmatpush1.xpose.msra.mxu0 0.0
    %1505 = vmatprep.subr.mxu0 0.0
    %1506 = vmatpush1.xpose.msra.mxu0 0.0
    %1507 = vmatprep.subr.mxu0 0.0
    %1508 = vmatpush1.xpose.msra.mxu0 0.0
    %1509 = vmatprep.subr.mxu0 0.0
    %1510 = vmatpush1.xpose.msra.mxu0 0.0
    %1511 = vmatprep.subr.mxu0 0.0
    %1512 = vmatpush1.xpose.msra.mxu0 0.0
    %1513 = vmatprep.subr.mxu0 0.0
    %1514 = vmatpush1.xpose.msra.mxu0 0.0
    %1515 = vmatprep.subr.mxu0 0.0
    %1516 = vmatpush1.xpose.msra.mxu0 0.0
    %1517 = vmatprep.subr.mxu0 0.0
    %1518 = vmatpush1.xpose.msra.mxu0 0.0
    %1519 = vmatprep.subr.mxu0 0.0
    %1520 = vmatpush1.xpose.msra.mxu0 0.0
    %1521 = vmatprep.subr.mxu0 0.0
    %1522 = vmatpush1.xpose.msra.mxu0 0.0
    %1523 = vmatprep.subr.mxu0 0.0
    %1524 = vmatpush1.xpose.msra.mxu0 0.0
    %1525 = vmatprep.subr.mxu0 0.0
    %1526 = vmatpush1.xpose.msra.mxu0 0.0
    %1527 = vmatprep.subr.mxu0 0.0
    %1528 = vmatpush1.xpose.msra.mxu0 0.0
    %1529 = vmatprep.subr.mxu0 0.0
    %1530 = vmatpush1.xpose.msra.mxu0 0.0
    %1531 = vmatprep.subr.mxu0 0.0
    %1532 = vmatpush1.xpose.msra.mxu0 0.0
    %1533 = vmatprep.subr.mxu0 0.0
    %1534 = vmatpush1.xpose.msra.mxu0 0.0
    %1535 = vmatprep.subr.mxu0 0.0
    %1536 = vmatpush1.xpose.msra.mxu0 0.0
    %1537 = vmatprep.subr.mxu0 0.0
    %1538 = vmatpush1.xpose.msra.mxu0 0.0
    %1539 = vmatprep.subr.mxu0 0.0
    %1540 = vmatpush1.xpose.msra.mxu0 0.0
    %1541 = vmatprep.subr.mxu0 0.0
    %1542 = vmatpush1.xpose.msra.mxu0 0.0
    %1543 = vmatprep.subr.mxu0 0.0
    %1544 = vmatpush1.xpose.msra.mxu0 0.0
    %1545 = vmatprep.subr.mxu0 0.0
    %1546 = vmatpush1.xpose.msra.mxu0 0.0
    %1547 = vmatprep.subr.mxu0 0.0
    %1548 = vmatpush1.xpose.msra.mxu0 0.0
    %1549 = vmatprep.mubr.f32.mxu0 0.0
    %v1550 = vand.u32 %v1221, 4294901760
    %v1551 = vsub.f32 %v1221, %v1550
    %v1552 = vand.u32 %v1551, 4294901760
    %1553 = vmatmul.mubr.f32.gmra.mrb[0].mxu0 %v1552
    %v1554 = vpop.f32.mrb[0].mxu0
    %v1555 = vadd.f32 %v1473, %v1554
    %v1556 = vpop.f32.mrb[0].mxu0
    %1557 = vmatprep.mubr.f32.mxu0 0.0
    %v1558 = vand.u32 %v1224, 4294901760
    %v1559 = vsub.f32 %v1224, %v1558
    %v1560 = vand.u32 %v1559, 4294901760
    %1561 = vmatmul.mubr.f32.gmra.mrb[0].mxu0 %v1560
    %v1562 = vpop.f32.mrb[0].mxu0
    %v1563 = vadd.f32 %v1480, %v1562
    %v1564 = vpop.f32.mrb[0].mxu0
    %1565 = vdwg.mxu0
    %1566 = vmatprep.subr.mxu0 0.0
    %v1567 = vand.u32 %v1221, 4294901760
    %v1568 = vsub.f32 %v1221, %v1567
    %v1569 = vand.u32 %v1568, 4294901760
    %1570 = vmatpush1.xpose.msra.mxu0 %v1569
    %1571 = vmatprep.subr.mxu0 0.0
    %v1572 = vand.u32 %v1224, 4294901760
    %v1573 = vsub.f32 %v1224, %v1572
    %v1574 = vand.u32 %v1573, 4294901760
    %1575 = vmatpush1.xpose.msra.mxu0 %v1574
    %1576 = vmatprep.subr.mxu0 0.0
    %1577 = vmatpush1.xpose.msra.mxu0 0.0
    %1578 = vmatprep.subr.mxu0 0.0
    %1579 = vmatpush1.xpose.msra.mxu0 0.0
    %1580 = vmatprep.subr.mxu0 0.0
    %1581 = vmatpush1.xpose.msra.mxu0 0.0
    %1582 = vmatprep.subr.mxu0 0.0
    %1583 = vmatpush1.xpose.msra.mxu0 0.0
    %1584 = vmatprep.subr.mxu0 0.0
    %1585 = vmatpush1.xpose.msra.mxu0 0.0
    %1586 = vmatprep.subr.mxu0 0.0
    %1587 = vmatpush1.xpose.msra.mxu0 0.0
    %1588 = vmatprep.subr.mxu0 0.0
    %1589 = vmatpush1.xpose.msra.mxu0 0.0
    %1590 = vmatprep.subr.mxu0 0.0
    %1591 = vmatpush1.xpose.msra.mxu0 0.0
    %1592 = vmatprep.subr.mxu0 0.0
    %1593 = vmatpush1.xpose.msra.mxu0 0.0
    %1594 = vmatprep.subr.mxu0 0.0
    %1595 = vmatpush1.xpose.msra.mxu0 0.0
    %1596 = vmatprep.subr.mxu0 0.0
    %1597 = vmatpush1.xpose.msra.mxu0 0.0
    %1598 = vmatprep.subr.mxu0 0.0
    %1599 = vmatpush1.xpose.msra.mxu0 0.0
    %1600 = vmatprep.subr.mxu0 0.0
    %1601 = vmatpush1.xpose.msra.mxu0 0.0
    %1602 = vmatprep.subr.mxu0 0.0
    %1603 = vmatpush1.xpose.msra.mxu0 0.0
    %1604 = vmatprep.subr.mxu0 0.0
    %1605 = vmatpush1.xpose.msra.mxu0 0.0
    %1606 = vmatprep.subr.mxu0 0.0
    %1607 = vmatpush1.xpose.msra.mxu0 0.0
    %1608 = vmatprep.subr.mxu0 0.0
    %1609 = vmatpush1.xpose.msra.mxu0 0.0
    %1610 = vmatprep.subr.mxu0 0.0
    %1611 = vmatpush1.xpose.msra.mxu0 0.0
    %1612 = vmatprep.subr.mxu0 0.0
    %1613 = vmatpush1.xpose.msra.mxu0 0.0
    %1614 = vmatprep.subr.mxu0 0.0
    %1615 = vmatpush1.xpose.msra.mxu0 0.0
    %1616 = vmatprep.subr.mxu0 0.0
    %1617 = vmatpush1.xpose.msra.mxu0 0.0
    %1618 = vmatprep.subr.mxu0 0.0
    %1619 = vmatpush1.xpose.msra.mxu0 0.0
    %1620 = vmatprep.subr.mxu0 0.0
    %1621 = vmatpush1.xpose.msra.mxu0 0.0
    %1622 = vmatprep.subr.mxu0 0.0
    %1623 = vmatpush1.xpose.msra.mxu0 0.0
    %1624 = vmatprep.subr.mxu0 0.0
    %1625 = vmatpush1.xpose.msra.mxu0 0.0
    %1626 = vmatprep.subr.mxu0 0.0
    %1627 = vmatpush1.xpose.msra.mxu0 0.0
    %1628 = vmatprep.subr.mxu0 0.0
    %1629 = vmatpush1.xpose.msra.mxu0 0.0
    %1630 = vmatprep.subr.mxu0 0.0
    %1631 = vmatpush1.xpose.msra.mxu0 0.0
    %1632 = vmatprep.subr.mxu0 0.0
    %1633 = vmatpush1.xpose.msra.mxu0 0.0
    %1634 = vmatprep.subr.mxu0 0.0
    %1635 = vmatpush1.xpose.msra.mxu0 0.0
    %1636 = vmatprep.mubr.f32.mxu0 0.0
    %v1637 = vand.u32 %v1221, 4294901760
    %1638 = vmatmul.mubr.f32.gmra.mrb[0].mxu0 %v1637
    %v1639 = vpop.f32.mrb[0].mxu0
    %v1640 = vadd.f32 %v1555, %v1639
    %v1641 = vpop.f32.mrb[0].mxu0
    %1642 = vmatprep.mubr.f32.mxu0 0.0
    %v1643 = vand.u32 %v1224, 4294901760
    %1644 = vmatmul.mubr.f32.gmra.mrb[0].mxu0 %v1643
    %v1645 = vpop.f32.mrb[0].mxu0
    %v1646 = vadd.f32 %v1563, %v1645
    %v1647 = vpop.f32.mrb[0].mxu0
    %1648 = vdwg.mxu0
    %1649 = vmatprep.subr.mxu0 0.0
    %v1650 = vand.u32 %v1221, 4294901760
    %1651 = vmatpush1.xpose.msra.mxu0 %v1650
    %1652 = vmatprep.subr.mxu0 0.0
    %v1653 = vand.u32 %v1224, 4294901760
    %1654 = vmatpush1.xpose.msra.mxu0 %v1653
    %1655 = vmatprep.subr.mxu0 0.0
    %1656 = vmatpush1.xpose.msra.mxu0 0.0
    %1657 = vmatprep.subr.mxu0 0.0
    %1658 = vmatpush1.xpose.msra.mxu0 0.0
    %1659 = vmatprep.subr.mxu0 0.0
    %1660 = vmatpush1.xpose.msra.mxu0 0.0
    %1661 = vmatprep.subr.mxu0 0.0
    %1662 = vmatpush1.xpose.msra.mxu0 0.0
    %1663 = vmatprep.subr.mxu0 0.0
    %1664 = vmatpush1.xpose.msra.mxu0 0.0
    %1665 = vmatprep.subr.mxu0 0.0
    %1666 = vmatpush1.xpose.msra.mxu0 0.0
    %1667 = vmatprep.subr.mxu0 0.0
    %1668 = vmatpush1.xpose.msra.mxu0 0.0
    %1669 = vmatprep.subr.mxu0 0.0
    %1670 = vmatpush1.xpose.msra.mxu0 0.0
    %1671 = vmatprep.subr.mxu0 0.0
    %1672 = vmatpush1.xpose.msra.mxu0 0.0
    %1673 = vmatprep.subr.mxu0 0.0
    %1674 = vmatpush1.xpose.msra.mxu0 0.0
    %1675 = vmatprep.subr.mxu0 0.0
    %1676 = vmatpush1.xpose.msra.mxu0 0.0
    %1677 = vmatprep.subr.mxu0 0.0
    %1678 = vmatpush1.xpose.msra.mxu0 0.0
    %1679 = vmatprep.subr.mxu0 0.0
    %1680 = vmatpush1.xpose.msra.mxu0 0.0
    %1681 = vmatprep.subr.mxu0 0.0
    %1682 = vmatpush1.xpose.msra.mxu0 0.0
    %1683 = vmatprep.subr.mxu0 0.0
    %1684 = vmatpush1.xpose.msra.mxu0 0.0
    %1685 = vmatprep.subr.mxu0 0.0
    %1686 = vmatpush1.xpose.msra.mxu0 0.0
    %1687 = vmatprep.subr.mxu0 0.0
    %1688 = vmatpush1.xpose.msra.mxu0 0.0
    %1689 = vmatprep.subr.mxu0 0.0
    %1690 = vmatpush1.xpose.msra.mxu0 0.0
    %1691 = vmatprep.subr.mxu0 0.0
    %1692 = vmatpush1.xpose.msra.mxu0 0.0
    %1693 = vmatprep.subr.mxu0 0.0
    %1694 = vmatpush1.xpose.msra.mxu0 0.0
    %1695 = vmatprep.subr.mxu0 0.0
    %1696 = vmatpush1.xpose.msra.mxu0 0.0
    %1697 = vmatprep.subr.mxu0 0.0
    %1698 = vmatpush1.xpose.msra.mxu0 0.0
    %1699 = vmatprep.subr.mxu0 0.0
    %1700 = vmatpush1.xpose.msra.mxu0 0.0
    %1701 = vmatprep.subr.mxu0 0.0
    %1702 = vmatpush1.xpose.msra.mxu0 0.0
    %1703 = vmatprep.subr.mxu0 0.0
    %1704 = vmatpush1.xpose.msra.mxu0 0.0
    %1705 = vmatprep.subr.mxu0 0.0
    %1706 = vmatpush1.xpose.msra.mxu0 0.0
    %1707 = vmatprep.subr.mxu0 0.0
    %1708 = vmatpush1.xpose.msra.mxu0 0.0
    %1709 = vmatprep.subr.mxu0 0.0
    %1710 = vmatpush1.xpose.msra.mxu0 0.0
    %1711 = vmatprep.subr.mxu0 0.0
    %1712 = vmatpush1.xpose.msra.mxu0 0.0
    %1713 = vmatprep.subr.mxu0 0.0
    %1714 = vmatpush1.xpose.msra.mxu0 0.0
    %1715 = vmatprep.mubr.f32.mxu0 0.0
    %v1716 = vand.u32 %v1221, 4294901760
    %1717 = vmatmul.mubr.f32.gmra.mrb[0].mxu0 %v1716
    %v1718 = vpop.f32.mrb[0].mxu0
    %v1719 = vadd.f32 %v1640, %v1718
    %v1720 = vpop.f32.mrb[0].mxu0
    %1721 = vmatprep.mubr.f32.mxu0 0.0
    %v1722 = vand.u32 %v1224, 4294901760
    %1723 = vmatmul.mubr.f32.gmra.mrb[0].mxu0 %v1722
    %v1724 = vpop.f32.mrb[0].mxu0
    %v1725 = vadd.f32 %v1646, %v1724
    %v1726 = vpop.f32.mrb[0].mxu0
    %1727 = vdwg.mxu0
    %vm1728 = vcmask 130048
    %v1729 = vsel %vm1728, %v1719, -inf
    %1730 = vmax.xlane.f32.xlu0 %v1729
    %v1731 = vpop.xlane.xlu0 %1730
    %v1732 = vsel %vm1728, %v1725, -inf
    %1733 = vmax.xlane.f32.xlu0 %v1732
    %v1734 = vpop.xlane.xlu0 %1733
    %v1735 = vsub.f32 %v1719, %v1731
    %v1736 = vsub.f32 %v1725, %v1734
    %v1737 = vmul.f32 %v1735, 1.442695
    %v1738 = vpow.pop %v1737
    %v1739 = vmul.f32 %v1736, 1.442695
    %v1740 = vpow.pop %v1739
    %v1741 = vsel %vm1728, %v1738, 0.0
    %1742 = vadd.xlane.f32.xlu0 %v1741
    %v1743 = vpop.xlane.xlu0 %1742
    %v1744 = vsel %vm1728, %v1740, 0.0
    %1745 = vadd.xlane.f32.xlu0 %v1744
    %v1746 = vpop.xlane.xlu0 %1745
    %v1747 = vrcp.pop %v1743
    %v1748 = vmul.f32 %v1738, %v1747
    %v1749 = vrcp.pop %v1746
    %v1750 = vmul.f32 %v1740, %v1749
    %v1752 = vsel %vm1728, %v1748, 0
    %v1755 = vsel %vm1728, %v1750, 0
    %1757 = vmatprep.subr.mxu0 0.0
    %v1758 = vand.u32 %v133, 4294901760
    %1759 = vmatpush1.msra.mxu0 %v1758
    %1760 = vmatprep.subr.mxu0 0.0
    %v1761 = vand.u32 %v134, 4294901760
    %1762 = vmatpush1.msra.mxu0 %v1761
    %1763 = vmatprep.subr.mxu0 0.0
    %1764 = vmatpush1.msra.mxu0 0.0
    %1765 = vmatprep.subr.mxu0 0.0
    %1766 = vmatpush1.msra.mxu0 0.0
    %1767 = vmatprep.subr.mxu0 0.0
    %1768 = vmatpush1.msra.mxu0 0.0
    %1769 = vmatprep.subr.mxu0 0.0
    %1770 = vmatpush1.msra.mxu0 0.0
    %1771 = vmatprep.subr.mxu0 0.0
    %1772 = vmatpush1.msra.mxu0 0.0
    %1773 = vmatprep.subr.mxu0 0.0
    %1774 = vmatpush1.msra.mxu0 0.0
    %1775 = vmatprep.subr.mxu0 0.0
    %1776 = vmatpush1.msra.mxu0 0.0
    %1777 = vmatprep.subr.mxu0 0.0
    %1778 = vmatpush1.msra.mxu0 0.0
    %1779 = vmatprep.subr.mxu0 0.0
    %1780 = vmatpush1.msra.mxu0 0.0
    %1781 = vmatprep.subr.mxu0 0.0
    %1782 = vmatpush1.msra.mxu0 0.0
    %1783 = vmatprep.subr.mxu0 0.0
    %1784 = vmatpush1.msra.mxu0 0.0
    %1785 = vmatprep.subr.mxu0 0.0
    %1786 = vmatpush1.msra.mxu0 0.0
    %1787 = vmatprep.subr.mxu0 0.0
    %1788 = vmatpush1.msra.mxu0 0.0
    %1789 = vmatprep.subr.mxu0 0.0
    %1790 = vmatpush1.msra.mxu0 0.0
    %1791 = vmatprep.subr.mxu0 0.0
    %1792 = vmatpush1.msra.mxu0 0.0
    %1793 = vmatprep.subr.mxu0 0.0
    %1794 = vmatpush1.msra.mxu0 0.0
    %1795 = vmatprep.subr.mxu0 0.0
    %1796 = vmatpush1.msra.mxu0 0.0
    %1797 = vmatprep.subr.mxu0 0.0
    %1798 = vmatpush1.msra.mxu0 0.0
    %1799 = vmatprep.subr.mxu0 0.0
    %1800 = vmatpush1.msra.mxu0 0.0
    %1801 = vmatprep.subr.mxu0 0.0
    %1802 = vmatpush1.msra.mxu0 0.0
    %1803 = vmatprep.subr.mxu0 0.0
    %1804 = vmatpush1.msra.mxu0 0.0
    %1805 = vmatprep.subr.mxu0 0.0
    %1806 = vmatpush1.msra.mxu0 0.0
    %1807 = vmatprep.subr.mxu0 0.0
    %1808 = vmatpush1.msra.mxu0 0.0
    %1809 = vmatprep.subr.mxu0 0.0
    %1810 = vmatpush1.msra.mxu0 0.0
    %1811 = vmatprep.subr.mxu0 0.0
    %1812 = vmatpush1.msra.mxu0 0.0
    %1813 = vmatprep.subr.mxu0 0.0
    %1814 = vmatpush1.msra.mxu0 0.0
    %1815 = vmatprep.subr.mxu0 0.0
    %1816 = vmatpush1.msra.mxu0 0.0
    %1817 = vmatprep.subr.mxu0 0.0
    %1818 = vmatpush1.msra.mxu0 0.0
    %1819 = vmatprep.subr.mxu0 0.0
    %1820 = vmatpush1.msra.mxu0 0.0
    %1821 = vmatprep.subr.mxu0 0.0
    %1822 = vmatpush1.msra.mxu0 0.0
    %1823 = vmatprep.mubr.f32.mxu0 0.0
    %v1824 = vand.u32 %v1752, 4294901760
    %v1825 = vsub.f32 %v1752, %v1824
    %v1826 = vand.u32 %v1825, 4294901760
    %v1827 = vsub.f32 %v1825, %v1826
    %v1828 = vand.u32 %v1827, 4294901760
    %1829 = vmatmul.mubr.f32.gmra.mrb[0].mxu0 %v1828
    %v1830 = vpop.f32.mrb[0].mxu0
    %v1831 = vadd.f32 0.0, %v1830
    %v1832 = vpop.f32.mrb[0].mxu0
    %1833 = vmatprep.mubr.f32.mxu0 0.0
    %v1834 = vand.u32 %v1755, 4294901760
    %v1835 = vsub.f32 %v1755, %v1834
    %v1836 = vand.u32 %v1835, 4294901760
    %v1837 = vsub.f32 %v1835, %v1836
    %v1838 = vand.u32 %v1837, 4294901760
    %1839 = vmatmul.mubr.f32.gmra.mrb[0].mxu0 %v1838
    %v1840 = vpop.f32.mrb[0].mxu0
    %v1841 = vadd.f32 0.0, %v1840
    %v1842 = vpop.f32.mrb[0].mxu0
    %1843 = vdwg.mxu0
    %1844 = vmatprep.subr.mxu0 0.0
    %v1845 = vand.u32 %v133, 4294901760
    %v1846 = vsub.f32 %v133, %v1845
    %v1847 = vand.u32 %v1846, 4294901760
    %v1848 = vsub.f32 %v1846, %v1847
    %v1849 = vand.u32 %v1848, 4294901760
    %1850 = vmatpush1.msra.mxu0 %v1849
    %1851 = vmatprep.subr.mxu0 0.0
    %v1852 = vand.u32 %v134, 4294901760
    %v1853 = vsub.f32 %v134, %v1852
    %v1854 = vand.u32 %v1853, 4294901760
    %v1855 = vsub.f32 %v1853, %v1854
    %v1856 = vand.u32 %v1855, 4294901760
    %1857 = vmatpush1.msra.mxu0 %v1856
    %1858 = vmatprep.subr.mxu0 0.0
    %1859 = vmatpush1.msra.mxu0 0.0
    %1860 = vmatprep.subr.mxu0 0.0
    %1861 = vmatpush1.msra.mxu0 0.0
    %1862 = vmatprep.subr.mxu0 0.0
    %1863 = vmatpush1.msra.mxu0 0.0
    %1864 = vmatprep.subr.mxu0 0.0
    %1865 = vmatpush1.msra.mxu0 0.0
    %1866 = vmatprep.subr.mxu0 0.0
    %1867 = vmatpush1.msra.mxu0 0.0
    %1868 = vmatprep.subr.mxu0 0.0
    %1869 = vmatpush1.msra.mxu0 0.0
    %1870 = vmatprep.subr.mxu0 0.0
    %1871 = vmatpush1.msra.mxu0 0.0
    %1872 = vmatprep.subr.mxu0 0.0
    %1873 = vmatpush1.msra.mxu0 0.0
    %1874 = vmatprep.subr.mxu0 0.0
    %1875 = vmatpush1.msra.mxu0 0.0
    %1876 = vmatprep.subr.mxu0 0.0
    %1877 = vmatpush1.msra.mxu0 0.0
    %1878 = vmatprep.subr.mxu0 0.0
    %1879 = vmatpush1.msra.mxu0 0.0
    %1880 = vmatprep.subr.mxu0 0.0
    %1881 = vmatpush1.msra.mxu0 0.0
    %1882 = vmatprep.subr.mxu0 0.0
    %1883 = vmatpush1.msra.mxu0 0.0
    %1884 = vmatprep.subr.mxu0 0.0
    %1885 = vmatpush1.msra.mxu0 0.0
    %1886 = vmatprep.subr.mxu0 0.0
    %1887 = vmatpush1.msra.mxu0 0.0
    %1888 = vmatprep.subr.mxu0 0.0
    %1889 = vmatpush1.msra.mxu0 0.0
    %1890 = vmatprep.subr.mxu0 0.0
    %1891 = vmatpush1.msra.mxu0 0.0
    %1892 = vmatprep.subr.mxu0 0.0
    %1893 = vmatpush1.msra.mxu0 0.0
    %1894 = vmatprep.subr.mxu0 0.0
    %1895 = vmatpush1.msra.mxu0 0.0
    %1896 = vmatprep.subr.mxu0 0.0
    %1897 = vmatpush1.msra.mxu0 0.0
    %1898 = vmatprep.subr.mxu0 0.0
    %1899 = vmatpush1.msra.mxu0 0.0
    %1900 = vmatprep.subr.mxu0 0.0
    %1901 = vmatpush1.msra.mxu0 0.0
    %1902 = vmatprep.subr.mxu0 0.0
    %1903 = vmatpush1.msra.mxu0 0.0
    %1904 = vmatprep.subr.mxu0 0.0
    %1905 = vmatpush1.msra.mxu0 0.0
    %1906 = vmatprep.subr.mxu0 0.0
    %1907 = vmatpush1.msra.mxu0 0.0
    %1908 = vmatprep.subr.mxu0 0.0
    %1909 = vmatpush1.msra.mxu0 0.0
    %1910 = vmatprep.subr.mxu0 0.0
    %1911 = vmatpush1.msra.mxu0 0.0
    %1912 = vmatprep.subr.mxu0 0.0
    %1913 = vmatpush1.msra.mxu0 0.0
    %1914 = vmatprep.subr.mxu0 0.0
    %1915 = vmatpush1.msra.mxu0 0.0
    %1916 = vmatprep.subr.mxu0 0.0
    %1917 = vmatpush1.msra.mxu0 0.0
    %1918 = vmatprep.mubr.f32.mxu0 0.0
    %v1919 = vand.u32 %v1752, 4294901760
    %1920 = vmatmul.mubr.f32.gmra.mrb[0].mxu0 %v1919
    %v1921 = vpop.f32.mrb[0].mxu0
    %v1922 = vadd.f32 %v1831, %v1921
    %v1923 = vpop.f32.mrb[0].mxu0
    %1924 = vmatprep.mubr.f32.mxu0 0.0
    %v1925 = vand.u32 %v1755, 4294901760
    %1926 = vmatmul.mubr.f32.gmra.mrb[0].mxu0 %v1925
    %v1927 = vpop.f32.mrb[0].mxu0
    %v1928 = vadd.f32 %v1841, %v1927
    %v1929 = vpop.f32.mrb[0].mxu0
    %1930 = vdwg.mxu0
    %1931 = vmatprep.subr.mxu0 0.0
    %v1932 = vand.u32 %v133, 4294901760
    %v1933 = vsub.f32 %v133, %v1932
    %1934 = vmatpush1.msra.mxu0 %v1933
    %1935 = vmatprep.subr.mxu0 0.0
    %v1936 = vand.u32 %v134, 4294901760
    %v1937 = vsub.f32 %v134, %v1936
    %1938 = vmatpush1.msra.mxu0 %v1937
    %1939 = vmatprep.subr.mxu0 0.0
    %1940 = vmatpush1.msra.mxu0 0.0
    %1941 = vmatprep.subr.mxu0 0.0
    %1942 = vmatpush1.msra.mxu0 0.0
    %1943 = vmatprep.subr.mxu0 0.0
    %1944 = vmatpush1.msra.mxu0 0.0
    %1945 = vmatprep.subr.mxu0 0.0
    %1946 = vmatpush1.msra.mxu0 0.0
    %1947 = vmatprep.subr.mxu0 0.0
    %1948 = vmatpush1.msra.mxu0 0.0
    %1949 = vmatprep.subr.mxu0 0.0
    %1950 = vmatpush1.msra.mxu0 0.0
    %1951 = vmatprep.subr.mxu0 0.0
    %1952 = vmatpush1.msra.mxu0 0.0
    %1953 = vmatprep.subr.mxu0 0.0
    %1954 = vmatpush1.msra.mxu0 0.0
    %1955 = vmatprep.subr.mxu0 0.0
    %1956 = vmatpush1.msra.mxu0 0.0
    %1957 = vmatprep.subr.mxu0 0.0
    %1958 = vmatpush1.msra.mxu0 0.0
    %1959 = vmatprep.subr.mxu0 0.0
    %1960 = vmatpush1.msra.mxu0 0.0
    %1961 = vmatprep.subr.mxu0 0.0
    %1962 = vmatpush1.msra.mxu0 0.0
    %1963 = vmatprep.subr.mxu0 0.0
    %1964 = vmatpush1.msra.mxu0 0.0
    %1965 = vmatprep.subr.mxu0 0.0
    %1966 = vmatpush1.msra.mxu0 0.0
    %1967 = vmatprep.subr.mxu0 0.0
    %1968 = vmatpush1.msra.mxu0 0.0
    %1969 = vmatprep.subr.mxu0 0.0
    %1970 = vmatpush1.msra.mxu0 0.0
    %1971 = vmatprep.subr.mxu0 0.0
    %1972 = vmatpush1.msra.mxu0 0.0
    %1973 = vmatprep.subr.mxu0 0.0
    %1974 = vmatpush1.msra.mxu0 0.0
    %1975 = vmatprep.subr.mxu0 0.0
    %1976 = vmatpush1.msra.mxu0 0.0
    %1977 = vmatprep.subr.mxu0 0.0
    %1978 = vmatpush1.msra.mxu0 0.0
    %1979 = vmatprep.subr.mxu0 0.0
    %1980 = vmatpush1.msra.mxu0 0.0
    %1981 = vmatprep.subr.mxu0 0.0
    %1982 = vmatpush1.msra.mxu0 0.0
    %1983 = vmatprep.subr.mxu0 0.0
    %1984 = vmatpush1.msra.mxu0 0.0
    %1985 = vmatprep.subr.mxu0 0.0
    %1986 = vmatpush1.msra.mxu0 0.0
    %1987 = vmatprep.subr.mxu0 0.0
    %1988 = vmatpush1.msra.mxu0 0.0
    %1989 = vmatprep.subr.mxu0 0.0
    %1990 = vmatpush1.msra.mxu0 0.0
    %1991 = vmatprep.subr.mxu0 0.0
    %1992 = vmatpush1.msra.mxu0 0.0
    %1993 = vmatprep.subr.mxu0 0.0
    %1994 = vmatpush1.msra.mxu0 0.0
    %1995 = vmatprep.subr.mxu0 0.0
    %1996 = vmatpush1.msra.mxu0 0.0
    %1997 = vmatprep.subr.mxu0 0.0
    %1998 = vmatpush1.msra.mxu0 0.0
    %1999 = vmatprep.mubr.f32.mxu0 0.0
    %v2000 = vand.u32 %v1752, 4294901760
    %v2001 = vsub.f32 %v1752, %v2000
    %2002 = vmatmul.mubr.f32.gmra.mrb[0].mxu0 %v2001
    %v2003 = vpop.f32.mrb[0].mxu0
    %v2004 = vadd.f32 %v1922, %v2003
    %v2005 = vpop.f32.mrb[0].mxu0
    %2006 = vmatprep.mubr.f32.mxu0 0.0
    %v2007 = vand.u32 %v1755, 4294901760
    %v2008 = vsub.f32 %v1755, %v2007
    %2009 = vmatmul.mubr.f32.gmra.mrb[0].mxu0 %v2008
    %v2010 = vpop.f32.mrb[0].mxu0
    %v2011 = vadd.f32 %v1928, %v2010
    %v2012 = vpop.f32.mrb[0].mxu0
    %2013 = vdwg.mxu0
    %2014 = vmatprep.subr.mxu0 0.0
    %v2015 = vand.u32 %v133, 4294901760
    %2016 = vmatpush1.msra.mxu0 %v2015
    %2017 = vmatprep.subr.mxu0 0.0
    %v2018 = vand.u32 %v134, 4294901760
    %2019 = vmatpush1.msra.mxu0 %v2018
    %2020 = vmatprep.subr.mxu0 0.0
    %2021 = vmatpush1.msra.mxu0 0.0
    %2022 = vmatprep.subr.mxu0 0.0
    %2023 = vmatpush1.msra.mxu0 0.0
    %2024 = vmatprep.subr.mxu0 0.0
    %2025 = vmatpush1.msra.mxu0 0.0
    %2026 = vmatprep.subr.mxu0 0.0
    %2027 = vmatpush1.msra.mxu0 0.0
    %2028 = vmatprep.subr.mxu0 0.0
    %2029 = vmatpush1.msra.mxu0 0.0
    %2030 = vmatprep.subr.mxu0 0.0
    %2031 = vmatpush1.msra.mxu0 0.0
    %2032 = vmatprep.subr.mxu0 0.0
    %2033 = vmatpush1.msra.mxu0 0.0
    %2034 = vmatprep.subr.mxu0 0.0
    %2035 = vmatpush1.msra.mxu0 0.0
    %2036 = vmatprep.subr.mxu0 0.0
    %2037 = vmatpush1.msra.mxu0 0.0
    %2038 = vmatprep.subr.mxu0 0.0
    %2039 = vmatpush1.msra.mxu0 0.0
    %2040 = vmatprep.subr.mxu0 0.0
    %2041 = vmatpush1.msra.mxu0 0.0
    %2042 = vmatprep.subr.mxu0 0.0
    %2043 = vmatpush1.msra.mxu0 0.0
    %2044 = vmatprep.subr.mxu0 0.0
    %2045 = vmatpush1.msra.mxu0 0.0
    %2046 = vmatprep.subr.mxu0 0.0
    %2047 = vmatpush1.msra.mxu0 0.0
    %2048 = vmatprep.subr.mxu0 0.0
    %2049 = vmatpush1.msra.mxu0 0.0
    %2050 = vmatprep.subr.mxu0 0.0
    %2051 = vmatpush1.msra.mxu0 0.0
    %2052 = vmatprep.subr.mxu0 0.0
    %2053 = vmatpush1.msra.mxu0 0.0
    %2054 = vmatprep.subr.mxu0 0.0
    %2055 = vmatpush1.msra.mxu0 0.0
    %2056 = vmatprep.subr.mxu0 0.0
    %2057 = vmatpush1.msra.mxu0 0.0
    %2058 = vmatprep.subr.mxu0 0.0
    %2059 = vmatpush1.msra.mxu0 0.0
    %2060 = vmatprep.subr.mxu0 0.0
    %2061 = vmatpush1.msra.mxu0 0.0
    %2062 = vmatprep.subr.mxu0 0.0
    %2063 = vmatpush1.msra.mxu0 0.0
    %2064 = vmatprep.subr.mxu0 0.0
    %2065 = vmatpush1.msra.mxu0 0.0
    %2066 = vmatprep.subr.mxu0 0.0
    %2067 = vmatpush1.msra.mxu0 0.0
    %2068 = vmatprep.subr.mxu0 0.0
    %2069 = vmatpush1.msra.mxu0 0.0
    %2070 = vmatprep.subr.mxu0 0.0
    %2071 = vmatpush1.msra.mxu0 0.0
    %2072 = vmatprep.subr.mxu0 0.0
    %2073 = vmatpush1.msra.mxu0 0.0
    %2074 = vmatprep.subr.mxu0 0.0
    %2075 = vmatpush1.msra.mxu0 0.0
    %2076 = vmatprep.subr.mxu0 0.0
    %2077 = vmatpush1.msra.mxu0 0.0
    %2078 = vmatprep.subr.mxu0 0.0
    %2079 = vmatpush1.msra.mxu0 0.0
    %2080 = vmatprep.mubr.f32.mxu0 0.0
    %v2081 = vand.u32 %v1752, 4294901760
    %v2082 = vsub.f32 %v1752, %v2081
    %v2083 = vand.u32 %v2082, 4294901760
    %2084 = vmatmul.mubr.f32.gmra.mrb[0].mxu0 %v2083
    %v2085 = vpop.f32.mrb[0].mxu0
    %v2086 = vadd.f32 %v2004, %v2085
    %v2087 = vpop.f32.mrb[0].mxu0
    %2088 = vmatprep.mubr.f32.mxu0 0.0
    %v2089 = vand.u32 %v1755, 4294901760
    %v2090 = vsub.f32 %v1755, %v2089
    %v2091 = vand.u32 %v2090, 4294901760
    %2092 = vmatmul.mubr.f32.gmra.mrb[0].mxu0 %v2091
    %v2093 = vpop.f32.mrb[0].mxu0
    %v2094 = vadd.f32 %v2011, %v2093
    %v2095 = vpop.f32.mrb[0].mxu0
    %2096 = vdwg.mxu0
    %2097 = vmatprep.subr.mxu0 0.0
    %v2098 = vand.u32 %v133, 4294901760
    %v2099 = vsub.f32 %v133, %v2098
    %v2100 = vand.u32 %v2099, 4294901760
    %2101 = vmatpush1.msra.mxu0 %v2100
    %2102 = vmatprep.subr.mxu0 0.0
    %v2103 = vand.u32 %v134, 4294901760
    %v2104 = vsub.f32 %v134, %v2103
    %v2105 = vand.u32 %v2104, 4294901760
    %2106 = vmatpush1.msra.mxu0 %v2105
    %2107 = vmatprep.subr.mxu0 0.0
    %2108 = vmatpush1.msra.mxu0 0.0
    %2109 = vmatprep.subr.mxu0 0.0
    %2110 = vmatpush1.msra.mxu0 0.0
    %2111 = vmatprep.subr.mxu0 0.0
    %2112 = vmatpush1.msra.mxu0 0.0
    %2113 = vmatprep.subr.mxu0 0.0
    %2114 = vmatpush1.msra.mxu0 0.0
    %2115 = vmatprep.subr.mxu0 0.0
    %2116 = vmatpush1.msra.mxu0 0.0
    %2117 = vmatprep.subr.mxu0 0.0
    %2118 = vmatpush1.msra.mxu0 0.0
    %2119 = vmatprep.subr.mxu0 0.0
    %2120 = vmatpush1.msra.mxu0 0.0
    %2121 = vmatprep.subr.mxu0 0.0
    %2122 = vmatpush1.msra.mxu0 0.0
    %2123 = vmatprep.subr.mxu0 0.0
    %2124 = vmatpush1.msra.mxu0 0.0
    %2125 = vmatprep.subr.mxu0 0.0
    %2126 = vmatpush1.msra.mxu0 0.0
    %2127 = vmatprep.subr.mxu0 0.0
    %2128 = vmatpush1.msra.mxu0 0.0
    %2129 = vmatprep.subr.mxu0 0.0
    %2130 = vmatpush1.msra.mxu0 0.0
    %2131 = vmatprep.subr.mxu0 0.0
    %2132 = vmatpush1.msra.mxu0 0.0
    %2133 = vmatprep.subr.mxu0 0.0
    %2134 = vmatpush1.msra.mxu0 0.0
    %2135 = vmatprep.subr.mxu0 0.0
    %2136 = vmatpush1.msra.mxu0 0.0
    %2137 = vmatprep.subr.mxu0 0.0
    %2138 = vmatpush1.msra.mxu0 0.0
    %2139 = vmatprep.subr.mxu0 0.0
    %2140 = vmatpush1.msra.mxu0 0.0
    %2141 = vmatprep.subr.mxu0 0.0
    %2142 = vmatpush1.msra.mxu0 0.0
    %2143 = vmatprep.subr.mxu0 0.0
    %2144 = vmatpush1.msra.mxu0 0.0
    %2145 = vmatprep.subr.mxu0 0.0
    %2146 = vmatpush1.msra.mxu0 0.0
    %2147 = vmatprep.subr.mxu0 0.0
    %2148 = vmatpush1.msra.mxu0 0.0
    %2149 = vmatprep.subr.mxu0 0.0
    %2150 = vmatpush1.msra.mxu0 0.0
    %2151 = vmatprep.subr.mxu0 0.0
    %2152 = vmatpush1.msra.mxu0 0.0
    %2153 = vmatprep.subr.mxu0 0.0
    %2154 = vmatpush1.msra.mxu0 0.0
    %2155 = vmatprep.subr.mxu0 0.0
    %2156 = vmatpush1.msra.mxu0 0.0
    %2157 = vmatprep.subr.mxu0 0.0
    %2158 = vmatpush1.msra.mxu0 0.0
    %2159 = vmatprep.subr.mxu0 0.0
    %2160 = vmatpush1.msra.mxu0 0.0
    %2161 = vmatprep.subr.mxu0 0.0
    %2162 = vmatpush1.msra.mxu0 0.0
    %2163 = vmatprep.subr.mxu0 0.0
    %2164 = vmatpush1.msra.mxu0 0.0
    %2165 = vmatprep.subr.mxu0 0.0
    %2166 = vmatpush1.msra.mxu0 0.0
    %2167 = vmatprep.mubr.f32.mxu0 0.0
    %v2168 = vand.u32 %v1752, 4294901760
    %2169 = vmatmul.mubr.f32.gmra.mrb[0].mxu0 %v2168
    %v2170 = vpop.f32.mrb[0].mxu0
    %v2171 = vadd.f32 %v2086, %v2170
    %v2172 = vpop.f32.mrb[0].mxu0
    %2173 = vmatprep.mubr.f32.mxu0 0.0
    %v2174 = vand.u32 %v1755, 4294901760
    %2175 = vmatmul.mubr.f32.gmra.mrb[0].mxu0 %v2174
    %v2176 = vpop.f32.mrb[0].mxu0
    %v2177 = vadd.f32 %v2094, %v2176
    %v2178 = vpop.f32.mrb[0].mxu0
    %2179 = vdwg.mxu0
    %2180 = vmatprep.subr.mxu0 0.0
    %v2181 = vand.u32 %v133, 4294901760
    %2182 = vmatpush1.msra.mxu0 %v2181
    %2183 = vmatprep.subr.mxu0 0.0
    %v2184 = vand.u32 %v134, 4294901760
    %2185 = vmatpush1.msra.mxu0 %v2184
    %2186 = vmatprep.subr.mxu0 0.0
    %2187 = vmatpush1.msra.mxu0 0.0
    %2188 = vmatprep.subr.mxu0 0.0
    %2189 = vmatpush1.msra.mxu0 0.0
    %2190 = vmatprep.subr.mxu0 0.0
    %2191 = vmatpush1.msra.mxu0 0.0
    %2192 = vmatprep.subr.mxu0 0.0
    %2193 = vmatpush1.msra.mxu0 0.0
    %2194 = vmatprep.subr.mxu0 0.0
    %2195 = vmatpush1.msra.mxu0 0.0
    %2196 = vmatprep.subr.mxu0 0.0
    %2197 = vmatpush1.msra.mxu0 0.0
    %2198 = vmatprep.subr.mxu0 0.0
    %2199 = vmatpush1.msra.mxu0 0.0
    %2200 = vmatprep.subr.mxu0 0.0
    %2201 = vmatpush1.msra.mxu0 0.0
    %2202 = vmatprep.subr.mxu0 0.0
    %2203 = vmatpush1.msra.mxu0 0.0
    %2204 = vmatprep.subr.mxu0 0.0
    %2205 = vmatpush1.msra.mxu0 0.0
    %2206 = vmatprep.subr.mxu0 0.0
    %2207 = vmatpush1.msra.mxu0 0.0
    %2208 = vmatprep.subr.mxu0 0.0
    %2209 = vmatpush1.msra.mxu0 0.0
    %2210 = vmatprep.subr.mxu0 0.0
    %2211 = vmatpush1.msra.mxu0 0.0
    %2212 = vmatprep.subr.mxu0 0.0
    %2213 = vmatpush1.msra.mxu0 0.0
    %2214 = vmatprep.subr.mxu0 0.0
    %2215 = vmatpush1.msra.mxu0 0.0
    %2216 = vmatprep.subr.mxu0 0.0
    %2217 = vmatpush1.msra.mxu0 0.0
    %2218 = vmatprep.subr.mxu0 0.0
    %2219 = vmatpush1.msra.mxu0 0.0
    %2220 = vmatprep.subr.mxu0 0.0
    %2221 = vmatpush1.msra.mxu0 0.0
    %2222 = vmatprep.subr.mxu0 0.0
    %2223 = vmatpush1.msra.mxu0 0.0
    %2224 = vmatprep.subr.mxu0 0.0
    %2225 = vmatpush1.msra.mxu0 0.0
    %2226 = vmatprep.subr.mxu0 0.0
    %2227 = vmatpush1.msra.mxu0 0.0
    %2228 = vmatprep.subr.mxu0 0.0
    %2229 = vmatpush1.msra.mxu0 0.0
    %2230 = vmatprep.subr.mxu0 0.0
    %2231 = vmatpush1.msra.mxu0 0.0
    %2232 = vmatprep.subr.mxu0 0.0
    %2233 = vmatpush1.msra.mxu0 0.0
    %2234 = vmatprep.subr.mxu0 0.0
    %2235 = vmatpush1.msra.mxu0 0.0
    %2236 = vmatprep.subr.mxu0 0.0
    %2237 = vmatpush1.msra.mxu0 0.0
    %2238 = vmatprep.subr.mxu0 0.0
    %2239 = vmatpush1.msra.mxu0 0.0
    %2240 = vmatprep.subr.mxu0 0.0
    %2241 = vmatpush1.msra.mxu0 0.0
    %2242 = vmatprep.subr.mxu0 0.0
    %2243 = vmatpush1.msra.mxu0 0.0
    %2244 = vmatprep.subr.mxu0 0.0
    %2245 = vmatpush1.msra.mxu0 0.0
    %2246 = vmatprep.mubr.f32.mxu0 0.0
    %v2247 = vand.u32 %v1752, 4294901760
    %2248 = vmatmul.mubr.f32.gmra.mrb[0].mxu0 %v2247
    %v2249 = vpop.f32.mrb[0].mxu0
    %v2250 = vadd.f32 %v2171, %v2249
    %v2251 = vpop.f32.mrb[0].mxu0
    %2252 = vmatprep.mubr.f32.mxu0 0.0
    %v2253 = vand.u32 %v1755, 4294901760
    %2254 = vmatmul.mubr.f32.gmra.mrb[0].mxu0 %v2253
    %v2255 = vpop.f32.mrb[0].mxu0
    %v2256 = vadd.f32 %v2177, %v2255
    %v2257 = vpop.f32.mrb[0].mxu0
    %2258 = vdwg.mxu0
    %vm2259 = vcmask 64512
    %2260 = vst.msk [vmem:[#allocation2] sm:$0xff] %vm2259, %v2250
    %2261 = vst.msk [vmem:[#allocation2 + $0x8] sm:$0xff] %vm2259, %v2256
    %2262 = vrot.lane.b32.xlu0 %v1208, 124
    %v2263 = vpop.permute.xlu0 %2262
    %2264 = vrot.lane.b32.xlu0 %v1214, 124
    %v2265 = vpop.permute.xlu0 %2264
    %v2266 = vsel %vm1219, %v2263, 0
    %v2268 = vsel %vm1219, %v2265, 0
    %2270 = vmatprep.subr.mxu0 0.0
    %v2271 = vand.u32 %v2266, 4294901760
    %2272 = vmatpush1.xpose.msra.mxu0 %v2271
    %2273 = vmatprep.subr.mxu0 0.0
    %v2274 = vand.u32 %v2268, 4294901760
    %2275 = vmatpush1.xpose.msra.mxu0 %v2274
    %2276 = vmatprep.subr.mxu0 0.0
    %2277 = vmatpush1.xpose.msra.mxu0 0.0
    %2278 = vmatprep.subr.mxu0 0.0
    %2279 = vmatpush1.xpose.msra.mxu0 0.0
    %2280 = vmatprep.subr.mxu0 0.0
    %2281 = vmatpush1.xpose.msra.mxu0 0.0
    %2282 = vmatprep.subr.mxu0 0.0
    %2283 = vmatpush1.xpose.msra.mxu0 0.0
    %2284 = vmatprep.subr.mxu0 0.0
    %2285 = vmatpush1.xpose.msra.mxu0 0.0
    %2286 = vmatprep.subr.mxu0 0.0
    %2287 = vmatpush1.xpose.msra.mxu0 0.0
    %2288 = vmatprep.subr.mxu0 0.0
    %2289 = vmatpush1.xpose.msra.mxu0 0.0
    %2290 = vmatprep.subr.mxu0 0.0
    %2291 = vmatpush1.xpose.msra.mxu0 0.0
    %2292 = vmatprep.subr.mxu0 0.0
    %2293 = vmatpush1.xpose.msra.mxu0 0.0
    %2294 = vmatprep.subr.mxu0 0.0
    %2295 = vmatpush1.xpose.msra.mxu0 0.0
    %2296 = vmatprep.subr.mxu0 0.0
    %2297 = vmatpush1.xpose.msra.mxu0 0.0
    %2298 = vmatprep.subr.mxu0 0.0
    %2299 = vmatpush1.xpose.msra.mxu0 0.0
    %2300 = vmatprep.subr.mxu0 0.0
    %2301 = vmatpush1.xpose.msra.mxu0 0.0
    %2302 = vmatprep.subr.mxu0 0.0
    %2303 = vmatpush1.xpose.msra.mxu0 0.0
    %2304 = vmatprep.subr.mxu0 0.0
    %2305 = vmatpush1.xpose.msra.mxu0 0.0
    %2306 = vmatprep.subr.mxu0 0.0
    %2307 = vmatpush1.xpose.msra.mxu0 0.0
    %2308 = vmatprep.subr.mxu0 0.0
    %2309 = vmatpush1.xpose.msra.mxu0 0.0
    %2310 = vmatprep.subr.mxu0 0.0
    %2311 = vmatpush1.xpose.msra.mxu0 0.0
    %2312 = vmatprep.subr.mxu0 0.0
    %2313 = vmatpush1.xpose.msra.mxu0 0.0
    %2314 = vmatprep.subr.mxu0 0.0
    %2315 = vmatpush1.xpose.msra.mxu0 0.0
    %2316 = vmatprep.subr.mxu0 0.0
    %2317 = vmatpush1.xpose.msra.mxu0 0.0
    %2318 = vmatprep.subr.mxu0 0.0
    %2319 = vmatpush1.xpose.msra.mxu0 0.0
    %2320 = vmatprep.subr.mxu0 0.0
    %2321 = vmatpush1.xpose.msra.mxu0 0.0
    %2322 = vmatprep.subr.mxu0 0.0
    %2323 = vmatpush1.xpose.msra.mxu0 0.0
    %2324 = vmatprep.subr.mxu0 0.0
    %2325 = vmatpush1.xpose.msra.mxu0 0.0
    %2326 = vmatprep.subr.mxu0 0.0
    %2327 = vmatpush1.xpose.msra.mxu0 0.0
    %2328 = vmatprep.subr.mxu0 0.0
    %2329 = vmatpush1.xpose.msra.mxu0 0.0
    %2330 = vmatprep.subr.mxu0 0.0
    %2331 = vmatpush1.xpose.msra.mxu0 0.0
    %2332 = vmatprep.subr.mxu0 0.0
    %2333 = vmatpush1.xpose.msra.mxu0 0.0
    %2334 = vmatprep.subr.mxu0 0.0
    %2335 = vmatpush1.xpose.msra.mxu0 0.0
    %2336 = vmatprep.mubr.f32.mxu0 0.0
    %v2337 = vand.u32 %v2266, 4294901760
    %v2338 = vsub.f32 %v2266, %v2337
    %v2339 = vand.u32 %v2338, 4294901760
    %v2340 = vsub.f32 %v2338, %v2339
    %v2341 = vand.u32 %v2340, 4294901760
    %2342 = vmatmul.mubr.f32.gmra.mrb[0].mxu0 %v2341
    %v2343 = vpop.f32.mrb[0].mxu0
    %v2344 = vadd.f32 %v1217, %v2343
    %v2345 = vpop.f32.mrb[0].mxu0
    %2346 = vmatprep.mubr.f32.mxu0 0.0
    %v2347 = vand.u32 %v2268, 4294901760
    %v2348 = vsub.f32 %v2268, %v2347
    %v2349 = vand.u32 %v2348, 4294901760
    %v2350 = vsub.f32 %v2348, %v2349
    %v2351 = vand.u32 %v2350, 4294901760
    %2352 = vmatmul.mubr.f32.gmra.mrb[0].mxu0 %v2351
    %v2353 = vpop.f32.mrb[0].mxu0
    %v2354 = vadd.f32 %v1218, %v2353
    %v2355 = vpop.f32.mrb[0].mxu0
    %2356 = vdwg.mxu0
    %2357 = vmatprep.subr.mxu0 0.0
    %v2358 = vand.u32 %v2266, 4294901760
    %v2359 = vsub.f32 %v2266, %v2358
    %v2360 = vand.u32 %v2359, 4294901760
    %v2361 = vsub.f32 %v2359, %v2360
    %v2362 = vand.u32 %v2361, 4294901760
    %2363 = vmatpush1.xpose.msra.mxu0 %v2362
    %2364 = vmatprep.subr.mxu0 0.0
    %v2365 = vand.u32 %v2268, 4294901760
    %v2366 = vsub.f32 %v2268, %v2365
    %v2367 = vand.u32 %v2366, 4294901760
    %v2368 = vsub.f32 %v2366, %v2367
    %v2369 = vand.u32 %v2368, 4294901760
    %2370 = vmatpush1.xpose.msra.mxu0 %v2369
    %2371 = vmatprep.subr.mxu0 0.0
    %2372 = vmatpush1.xpose.msra.mxu0 0.0
    %2373 = vmatprep.subr.mxu0 0.0
    %2374 = vmatpush1.xpose.msra.mxu0 0.0
    %2375 = vmatprep.subr.mxu0 0.0
    %2376 = vmatpush1.xpose.msra.mxu0 0.0
    %2377 = vmatprep.subr.mxu0 0.0
    %2378 = vmatpush1.xpose.msra.mxu0 0.0
    %2379 = vmatprep.subr.mxu0 0.0
    %2380 = vmatpush1.xpose.msra.mxu0 0.0
    %2381 = vmatprep.subr.mxu0 0.0
    %2382 = vmatpush1.xpose.msra.mxu0 0.0
    %2383 = vmatprep.subr.mxu0 0.0
    %2384 = vmatpush1.xpose.msra.mxu0 0.0
    %2385 = vmatprep.subr.mxu0 0.0
    %2386 = vmatpush1.xpose.msra.mxu0 0.0
    %2387 = vmatprep.subr.mxu0 0.0
    %2388 = vmatpush1.xpose.msra.mxu0 0.0
    %2389 = vmatprep.subr.mxu0 0.0
    %2390 = vmatpush1.xpose.msra.mxu0 0.0
    %2391 = vmatprep.subr.mxu0 0.0
    %2392 = vmatpush1.xpose.msra.mxu0 0.0
    %2393 = vmatprep.subr.mxu0 0.0
    %2394 = vmatpush1.xpose.msra.mxu0 0.0
    %2395 = vmatprep.subr.mxu0 0.0
    %2396 = vmatpush1.xpose.msra.mxu0 0.0
    %2397 = vmatprep.subr.mxu0 0.0
    %2398 = vmatpush1.xpose.msra.mxu0 0.0
    %2399 = vmatprep.subr.mxu0 0.0
    %2400 = vmatpush1.xpose.msra.mxu0 0.0
    %2401 = vmatprep.subr.mxu0 0.0
    %2402 = vmatpush1.xpose.msra.mxu0 0.0
    %2403 = vmatprep.subr.mxu0 0.0
    %2404 = vmatpush1.xpose.msra.mxu0 0.0
    %2405 = vmatprep.subr.mxu0 0.0
    %2406 = vmatpush1.xpose.msra.mxu0 0.0
    %2407 = vmatprep.subr.mxu0 0.0
    %2408 = vmatpush1.xpose.msra.mxu0 0.0
    %2409 = vmatprep.subr.mxu0 0.0
    %2410 = vmatpush1.xpose.msra.mxu0 0.0
    %2411 = vmatprep.subr.mxu0 0.0
    %2412 = vmatpush1.xpose.msra.mxu0 0.0
    %2413 = vmatprep.subr.mxu0 0.0
    %2414 = vmatpush1.xpose.msra.mxu0 0.0
    %2415 = vmatprep.subr.mxu0 0.0
    %2416 = vmatpush1.xpose.msra.mxu0 0.0
    %2417 = vmatprep.subr.mxu0 0.0
    %2418 = vmatpush1.xpose.msra.mxu0 0.0
    %2419 = vmatprep.subr.mxu0 0.0
    %2420 = vmatpush1.xpose.msra.mxu0 0.0
    %2421 = vmatprep.subr.mxu0 0.0
    %2422 = vmatpush1.xpose.msra.mxu0 0.0
    %2423 = vmatprep.subr.mxu0 0.0
    %2424 = vmatpush1.xpose.msra.mxu0 0.0
    %2425 = vmatprep.subr.mxu0 0.0
    %2426 = vmatpush1.xpose.msra.mxu0 0.0
    %2427 = vmatprep.subr.mxu0 0.0
    %2428 = vmatpush1.xpose.msra.mxu0 0.0
    %2429 = vmatprep.subr.mxu0 0.0
    %2430 = vmatpush1.xpose.msra.mxu0 0.0
    %2431 = vmatprep.mubr.f32.mxu0 0.0
    %v2432 = vand.u32 %v2266, 4294901760
    %2433 = vmatmul.mubr.f32.gmra.mrb[0].mxu0 %v2432
    %v2434 = vpop.f32.mrb[0].mxu0
    %v2435 = vadd.f32 %v2344, %v2434
    %v2436 = vpop.f32.mrb[0].mxu0
    %2437 = vmatprep.mubr.f32.mxu0 0.0
    %v2438 = vand.u32 %v2268, 4294901760
    %2439 = vmatmul.mubr.f32.gmra.mrb[0].mxu0 %v2438
    %v2440 = vpop.f32.mrb[0].mxu0
    %v2441 = vadd.f32 %v2354, %v2440
    %v2442 = vpop.f32.mrb[0].mxu0
    %2443 = vdwg.mxu0
    %2444 = vmatprep.subr.mxu0 0.0
    %v2445 = vand.u32 %v2266, 4294901760
    %v2446 = vsub.f32 %v2266, %v2445
    %2447 = vmatpush1.xpose.msra.mxu0 %v2446
    %2448 = vmatprep.subr.mxu0 0.0
    %v2449 = vand.u32 %v2268, 4294901760
    %v2450 = vsub.f32 %v2268, %v2449
    %2451 = vmatpush1.xpose.msra.mxu0 %v2450
    %2452 = vmatprep.subr.mxu0 0.0
    %2453 = vmatpush1.xpose.msra.mxu0 0.0
    %2454 = vmatprep.subr.mxu0 0.0
    %2455 = vmatpush1.xpose.msra.mxu0 0.0
    %2456 = vmatprep.subr.mxu0 0.0
    %2457 = vmatpush1.xpose.msra.mxu0 0.0
    %2458 = vmatprep.subr.mxu0 0.0
    %2459 = vmatpush1.xpose.msra.mxu0 0.0
    %2460 = vmatprep.subr.mxu0 0.0
    %2461 = vmatpush1.xpose.msra.mxu0 0.0
    %2462 = vmatprep.subr.mxu0 0.0
    %2463 = vmatpush1.xpose.msra.mxu0 0.0
    %2464 = vmatprep.subr.mxu0 0.0
    %2465 = vmatpush1.xpose.msra.mxu0 0.0
    %2466 = vmatprep.subr.mxu0 0.0
    %2467 = vmatpush1.xpose.msra.mxu0 0.0
    %2468 = vmatprep.subr.mxu0 0.0
    %2469 = vmatpush1.xpose.msra.mxu0 0.0
    %2470 = vmatprep.subr.mxu0 0.0
    %2471 = vmatpush1.xpose.msra.mxu0 0.0
    %2472 = vmatprep.subr.mxu0 0.0
    %2473 = vmatpush1.xpose.msra.mxu0 0.0
    %2474 = vmatprep.subr.mxu0 0.0
    %2475 = vmatpush1.xpose.msra.mxu0 0.0
    %2476 = vmatprep.subr.mxu0 0.0
    %2477 = vmatpush1.xpose.msra.mxu0 0.0
    %2478 = vmatprep.subr.mxu0 0.0
    %2479 = vmatpush1.xpose.msra.mxu0 0.0
    %2480 = vmatprep.subr.mxu0 0.0
    %2481 = vmatpush1.xpose.msra.mxu0 0.0
    %2482 = vmatprep.subr.mxu0 0.0
    %2483 = vmatpush1.xpose.msra.mxu0 0.0
    %2484 = vmatprep.subr.mxu0 0.0
    %2485 = vmatpush1.xpose.msra.mxu0 0.0
    %2486 = vmatprep.subr.mxu0 0.0
    %2487 = vmatpush1.xpose.msra.mxu0 0.0
    %2488 = vmatprep.subr.mxu0 0.0
    %2489 = vmatpush1.xpose.msra.mxu0 0.0
    %2490 = vmatprep.subr.mxu0 0.0
    %2491 = vmatpush1.xpose.msra.mxu0 0.0
    %2492 = vmatprep.subr.mxu0 0.0
    %2493 = vmatpush1.xpose.msra.mxu0 0.0
    %2494 = vmatprep.subr.mxu0 0.0
    %2495 = vmatpush1.xpose.msra.mxu0 0.0
    %2496 = vmatprep.subr.mxu0 0.0
    %2497 = vmatpush1.xpose.msra.mxu0 0.0
    %2498 = vmatprep.subr.mxu0 0.0
    %2499 = vmatpush1.xpose.msra.mxu0 0.0
    %2500 = vmatprep.subr.mxu0 0.0
    %2501 = vmatpush1.xpose.msra.mxu0 0.0
    %2502 = vmatprep.subr.mxu0 0.0
    %2503 = vmatpush1.xpose.msra.mxu0 0.0
    %2504 = vmatprep.subr.mxu0 0.0
    %2505 = vmatpush1.xpose.msra.mxu0 0.0
    %2506 = vmatprep.subr.mxu0 0.0
    %2507 = vmatpush1.xpose.msra.mxu0 0.0
    %2508 = vmatprep.subr.mxu0 0.0
    %2509 = vmatpush1.xpose.msra.mxu0 0.0
    %2510 = vmatprep.subr.mxu0 0.0
    %2511 = vmatpush1.xpose.msra.mxu0 0.0
    %2512 = vmatprep.mubr.f32.mxu0 0.0
    %v2513 = vand.u32 %v2266, 4294901760
    %v2514 = vsub.f32 %v2266, %v2513
    %2515 = vmatmul.mubr.f32.gmra.mrb[0].mxu0 %v2514
    %v2516 = vpop.f32.mrb[0].mxu0
    %v2517 = vadd.f32 %v2435, %v2516
    %v2518 = vpop.f32.mrb[0].mxu0
    %2519 = vmatprep.mubr.f32.mxu0 0.0
    %v2520 = vand.u32 %v2268, 4294901760
    %v2521 = vsub.f32 %v2268, %v2520
    %2522 = vmatmul.mubr.f32.gmra.mrb[0].mxu0 %v2521
    %v2523 = vpop.f32.mrb[0].mxu0
    %v2524 = vadd.f32 %v2441, %v2523
    %v2525 = vpop.f32.mrb[0].mxu0
    %2526 = vdwg.mxu0
    %2527 = vmatprep.subr.mxu0 0.0
    %v2528 = vand.u32 %v2266, 4294901760
    %2529 = vmatpush1.xpose.msra.mxu0 %v2528
    %2530 = vmatprep.subr.mxu0 0.0
    %v2531 = vand.u32 %v2268, 4294901760
    %2532 = vmatpush1.xpose.msra.mxu0 %v2531
    %2533 = vmatprep.subr.mxu0 0.0
    %2534 = vmatpush1.xpose.msra.mxu0 0.0
    %2535 = vmatprep.subr.mxu0 0.0
    %2536 = vmatpush1.xpose.msra.mxu0 0.0
    %2537 = vmatprep.subr.mxu0 0.0
    %2538 = vmatpush1.xpose.msra.mxu0 0.0
    %2539 = vmatprep.subr.mxu0 0.0
    %2540 = vmatpush1.xpose.msra.mxu0 0.0
    %2541 = vmatprep.subr.mxu0 0.0
    %2542 = vmatpush1.xpose.msra.mxu0 0.0
    %2543 = vmatprep.subr.mxu0 0.0
    %2544 = vmatpush1.xpose.msra.mxu0 0.0
    %2545 = vmatprep.subr.mxu0 0.0
    %2546 = vmatpush1.xpose.msra.mxu0 0.0
    %2547 = vmatprep.subr.mxu0 0.0
    %2548 = vmatpush1.xpose.msra.mxu0 0.0
    %2549 = vmatprep.subr.mxu0 0.0
    %2550 = vmatpush1.xpose.msra.mxu0 0.0
    %2551 = vmatprep.subr.mxu0 0.0
    %2552 = vmatpush1.xpose.msra.mxu0 0.0
    %2553 = vmatprep.subr.mxu0 0.0
    %2554 = vmatpush1.xpose.msra.mxu0 0.0
    %2555 = vmatprep.subr.mxu0 0.0
    %2556 = vmatpush1.xpose.msra.mxu0 0.0
    %2557 = vmatprep.subr.mxu0 0.0
    %2558 = vmatpush1.xpose.msra.mxu0 0.0
    %2559 = vmatprep.subr.mxu0 0.0
    %2560 = vmatpush1.xpose.msra.mxu0 0.0
    %2561 = vmatprep.subr.mxu0 0.0
    %2562 = vmatpush1.xpose.msra.mxu0 0.0
    %2563 = vmatprep.subr.mxu0 0.0
    %2564 = vmatpush1.xpose.msra.mxu0 0.0
    %2565 = vmatprep.subr.mxu0 0.0
    %2566 = vmatpush1.xpose.msra.mxu0 0.0
    %2567 = vmatprep.subr.mxu0 0.0
    %2568 = vmatpush1.xpose.msra.mxu0 0.0
    %2569 = vmatprep.subr.mxu0 0.0
    %2570 = vmatpush1.xpose.msra.mxu0 0.0
    %2571 = vmatprep.subr.mxu0 0.0
    %2572 = vmatpush1.xpose.msra.mxu0 0.0
    %2573 = vmatprep.subr.mxu0 0.0
    %2574 = vmatpush1.xpose.msra.mxu0 0.0
    %2575 = vmatprep.subr.mxu0 0.0
    %2576 = vmatpush1.xpose.msra.mxu0 0.0
    %2577 = vmatprep.subr.mxu0 0.0
    %2578 = vmatpush1.xpose.msra.mxu0 0.0
    %2579 = vmatprep.subr.mxu0 0.0
    %2580 = vmatpush1.xpose.msra.mxu0 0.0
    %2581 = vmatprep.subr.mxu0 0.0
    %2582 = vmatpush1.xpose.msra.mxu0 0.0
    %2583 = vmatprep.subr.mxu0 0.0
    %2584 = vmatpush1.xpose.msra.mxu0 0.0
    %2585 = vmatprep.subr.mxu0 0.0
    %2586 = vmatpush1.xpose.msra.mxu0 0.0
    %2587 = vmatprep.subr.mxu0 0.0
    %2588 = vmatpush1.xpose.msra.mxu0 0.0
    %2589 = vmatprep.subr.mxu0 0.0
    %2590 = vmatpush1.xpose.msra.mxu0 0.0
    %2591 = vmatprep.subr.mxu0 0.0
    %2592 = vmatpush1.xpose.msra.mxu0 0.0
    %2593 = vmatprep.mubr.f32.mxu0 0.0
    %v2594 = vand.u32 %v2266, 4294901760
    %v2595 = vsub.f32 %v2266, %v2594
    %v2596 = vand.u32 %v2595, 4294901760
    %2597 = vmatmul.mubr.f32.gmra.mrb[0].mxu0 %v2596
    %v2598 = vpop.f32.mrb[0].mxu0
    %v2599 = vadd.f32 %v2517, %v2598
    %v2600 = vpop.f32.mrb[0].mxu0
    %2601 = vmatprep.mubr.f32.mxu0 0.0
    %v2602 = vand.u32 %v2268, 4294901760
    %v2603 = vsub.f32 %v2268, %v2602
    %v2604 = vand.u32 %v2603, 4294901760
    %2605 = vmatmul.mubr.f32.gmra.mrb[0].mxu0 %v2604
    %v2606 = vpop.f32.mrb[0].mxu0
    %v2607 = vadd.f32 %v2524, %v2606
    %v2608 = vpop.f32.mrb[0].mxu0
    %2609 = vdwg.mxu0
    %2610 = vmatprep.subr.mxu0 0.0
    %v2611 = vand.u32 %v2266, 4294901760
    %v2612 = vsub.f32 %v2266, %v2611
    %v2613 = vand.u32 %v2612, 4294901760
    %2614 = vmatpush1.xpose.msra.mxu0 %v2613
    %2615 = vmatprep.subr.mxu0 0.0
    %v2616 = vand.u32 %v2268, 4294901760
    %v2617 = vsub.f32 %v2268, %v2616
    %v2618 = vand.u32 %v2617, 4294901760
    %2619 = vmatpush1.xpose.msra.mxu0 %v2618
    %2620 = vmatprep.subr.mxu0 0.0
    %2621 = vmatpush1.xpose.msra.mxu0 0.0
    %2622 = vmatprep.subr.mxu0 0.0
    %2623 = vmatpush1.xpose.msra.mxu0 0.0
    %2624 = vmatprep.subr.mxu0 0.0
    %2625 = vmatpush1.xpose.msra.mxu0 0.0
    %2626 = vmatprep.subr.mxu0 0.0
    %2627 = vmatpush1.xpose.msra.mxu0 0.0
    %2628 = vmatprep.subr.mxu0 0.0
    %2629 = vmatpush1.xpose.msra.mxu0 0.0
    %2630 = vmatprep.subr.mxu0 0.0
    %2631 = vmatpush1.xpose.msra.mxu0 0.0
    %2632 = vmatprep.subr.mxu0 0.0
    %2633 = vmatpush1.xpose.msra.mxu0 0.0
    %2634 = vmatprep.subr.mxu0 0.0
    %2635 = vmatpush1.xpose.msra.mxu0 0.0
    %2636 = vmatprep.subr.mxu0 0.0
    %2637 = vmatpush1.xpose.msra.mxu0 0.0
    %2638 = vmatprep.subr.mxu0 0.0
    %2639 = vmatpush1.xpose.msra.mxu0 0.0
    %2640 = vmatprep.subr.mxu0 0.0
    %2641 = vmatpush1.xpose.msra.mxu0 0.0
    %2642 = vmatprep.subr.mxu0 0.0
    %2643 = vmatpush1.xpose.msra.mxu0 0.0
    %2644 = vmatprep.subr.mxu0 0.0
    %2645 = vmatpush1.xpose.msra.mxu0 0.0
    %2646 = vmatprep.subr.mxu0 0.0
    %2647 = vmatpush1.xpose.msra.mxu0 0.0
    %2648 = vmatprep.subr.mxu0 0.0
    %2649 = vmatpush1.xpose.msra.mxu0 0.0
    %2650 = vmatprep.subr.mxu0 0.0
    %2651 = vmatpush1.xpose.msra.mxu0 0.0
    %2652 = vmatprep.subr.mxu0 0.0
    %2653 = vmatpush1.xpose.msra.mxu0 0.0
    %2654 = vmatprep.subr.mxu0 0.0
    %2655 = vmatpush1.xpose.msra.mxu0 0.0
    %2656 = vmatprep.subr.mxu0 0.0
    %2657 = vmatpush1.xpose.msra.mxu0 0.0
    %2658 = vmatprep.subr.mxu0 0.0
    %2659 = vmatpush1.xpose.msra.mxu0 0.0
    %2660 = vmatprep.subr.mxu0 0.0
    %2661 = vmatpush1.xpose.msra.mxu0 0.0
    %2662 = vmatprep.subr.mxu0 0.0
    %2663 = vmatpush1.xpose.msra.mxu0 0.0
    %2664 = vmatprep.subr.mxu0 0.0
    %2665 = vmatpush1.xpose.msra.mxu0 0.0
    %2666 = vmatprep.subr.mxu0 0.0
    %2667 = vmatpush1.xpose.msra.mxu0 0.0
    %2668 = vmatprep.subr.mxu0 0.0
    %2669 = vmatpush1.xpose.msra.mxu0 0.0
    %2670 = vmatprep.subr.mxu0 0.0
    %2671 = vmatpush1.xpose.msra.mxu0 0.0
    %2672 = vmatprep.subr.mxu0 0.0
    %2673 = vmatpush1.xpose.msra.mxu0 0.0
    %2674 = vmatprep.subr.mxu0 0.0
    %2675 = vmatpush1.xpose.msra.mxu0 0.0
    %2676 = vmatprep.subr.mxu0 0.0
    %2677 = vmatpush1.xpose.msra.mxu0 0.0
    %2678 = vmatprep.subr.mxu0 0.0
    %2679 = vmatpush1.xpose.msra.mxu0 0.0
    %2680 = vmatprep.mubr.f32.mxu0 0.0
    %v2681 = vand.u32 %v2266, 4294901760
    %2682 = vmatmul.mubr.f32.gmra.mrb[0].mxu0 %v2681
    %v2683 = vpop.f32.mrb[0].mxu0
    %v2684 = vadd.f32 %v2599, %v2683
    %v2685 = vpop.f32.mrb[0].mxu0
    %2686 = vmatprep.mubr.f32.mxu0 0.0
    %v2687 = vand.u32 %v2268, 4294901760
    %2688 = vmatmul.mubr.f32.gmra.mrb[0].mxu0 %v2687
    %v2689 = vpop.f32.mrb[0].mxu0
    %v2690 = vadd.f32 %v2607, %v2689
    %v2691 = vpop.f32.mrb[0].mxu0
    %2692 = vdwg.mxu0
    %2693 = vmatprep.subr.mxu0 0.0
    %v2694 = vand.u32 %v2266, 4294901760
    %2695 = vmatpush1.xpose.msra.mxu0 %v2694
    %2696 = vmatprep.subr.mxu0 0.0
    %v2697 = vand.u32 %v2268, 4294901760
    %2698 = vmatpush1.xpose.msra.mxu0 %v2697
    %2699 = vmatprep.subr.mxu0 0.0
    %2700 = vmatpush1.xpose.msra.mxu0 0.0
    %2701 = vmatprep.subr.mxu0 0.0
    %2702 = vmatpush1.xpose.msra.mxu0 0.0
    %2703 = vmatprep.subr.mxu0 0.0
    %2704 = vmatpush1.xpose.msra.mxu0 0.0
    %2705 = vmatprep.subr.mxu0 0.0
    %2706 = vmatpush1.xpose.msra.mxu0 0.0
    %2707 = vmatprep.subr.mxu0 0.0
    %2708 = vmatpush1.xpose.msra.mxu0 0.0
    %2709 = vmatprep.subr.mxu0 0.0
    %2710 = vmatpush1.xpose.msra.mxu0 0.0
    %2711 = vmatprep.subr.mxu0 0.0
    %2712 = vmatpush1.xpose.msra.mxu0 0.0
    %2713 = vmatprep.subr.mxu0 0.0
    %2714 = vmatpush1.xpose.msra.mxu0 0.0
    %2715 = vmatprep.subr.mxu0 0.0
    %2716 = vmatpush1.xpose.msra.mxu0 0.0
    %2717 = vmatprep.subr.mxu0 0.0
    %2718 = vmatpush1.xpose.msra.mxu0 0.0
    %2719 = vmatprep.subr.mxu0 0.0
    %2720 = vmatpush1.xpose.msra.mxu0 0.0
    %2721 = vmatprep.subr.mxu0 0.0
    %2722 = vmatpush1.xpose.msra.mxu0 0.0
    %2723 = vmatprep.subr.mxu0 0.0
    %2724 = vmatpush1.xpose.msra.mxu0 0.0
    %2725 = vmatprep.subr.mxu0 0.0
    %2726 = vmatpush1.xpose.msra.mxu0 0.0
    %2727 = vmatprep.subr.mxu0 0.0
    %2728 = vmatpush1.xpose.msra.mxu0 0.0
    %2729 = vmatprep.subr.mxu0 0.0
    %2730 = vmatpush1.xpose.msra.mxu0 0.0
    %2731 = vmatprep.subr.mxu0 0.0
    %2732 = vmatpush1.xpose.msra.mxu0 0.0
    %2733 = vmatprep.subr.mxu0 0.0
    %2734 = vmatpush1.xpose.msra.mxu0 0.0
    %2735 = vmatprep.subr.mxu0 0.0
    %2736 = vmatpush1.xpose.msra.mxu0 0.0
    %2737 = vmatprep.subr.mxu0 0.0
    %2738 = vmatpush1.xpose.msra.mxu0 0.0
    %2739 = vmatprep.subr.mxu0 0.0
    %2740 = vmatpush1.xpose.msra.mxu0 0.0
    %2741 = vmatprep.subr.mxu0 0.0
    %2742 = vmatpush1.xpose.msra.mxu0 0.0
    %2743 = vmatprep.subr.mxu0 0.0
    %2744 = vmatpush1.xpose.msra.mxu0 0.0
    %2745 = vmatprep.subr.mxu0 0.0
    %2746 = vmatpush1.xpose.msra.mxu0 0.0
    %2747 = vmatprep.subr.mxu0 0.0
    %2748 = vmatpush1.xpose.msra.mxu0 0.0
    %2749 = vmatprep.subr.mxu0 0.0
    %2750 = vmatpush1.xpose.msra.mxu0 0.0
    %2751 = vmatprep.subr.mxu0 0.0
    %2752 = vmatpush1.xpose.msra.mxu0 0.0
    %2753 = vmatprep.subr.mxu0 0.0
    %2754 = vmatpush1.xpose.msra.mxu0 0.0
    %2755 = vmatprep.subr.mxu0 0.0
    %2756 = vmatpush1.xpose.msra.mxu0 0.0
    %2757 = vmatprep.subr.mxu0 0.0
    %2758 = vmatpush1.xpose.msra.mxu0 0.0
    %2759 = vmatprep.mubr.f32.mxu0 0.0
    %v2760 = vand.u32 %v2266, 4294901760
    %2761 = vmatmul.mubr.f32.gmra.mrb[0].mxu0 %v2760
    %v2762 = vpop.f32.mrb[0].mxu0
    %v2763 = vadd.f32 %v2684, %v2762
    %v2764 = vpop.f32.mrb[0].mxu0
    %2765 = vmatprep.mubr.f32.mxu0 0.0
    %v2766 = vand.u32 %v2268, 4294901760
    %2767 = vmatmul.mubr.f32.gmra.mrb[0].mxu0 %v2766
    %v2768 = vpop.f32.mrb[0].mxu0
    %v2769 = vadd.f32 %v2690, %v2768
    %v2770 = vpop.f32.mrb[0].mxu0
    %2771 = vdwg.mxu0
    %v2772 = vsel %vm1728, %v2763, -inf
    %2773 = vmax.xlane.f32.xlu0 %v2772
    %v2774 = vpop.xlane.xlu0 %2773
    %v2775 = vsel %vm1728, %v2769, -inf
    %2776 = vmax.xlane.f32.xlu0 %v2775
    %v2777 = vpop.xlane.xlu0 %2776
    %v2778 = vsub.f32 %v2763, %v2774
    %v2779 = vsub.f32 %v2769, %v2777
    %v2780 = vmul.f32 %v2778, 1.442695
    %v2781 = vpow.pop %v2780
    %v2782 = vmul.f32 %v2779, 1.442695
    %v2783 = vpow.pop %v2782
    %v2784 = vsel %vm1728, %v2781, 0.0
    %2785 = vadd.xlane.f32.xlu0 %v2784
    %v2786 = vpop.xlane.xlu0 %2785
    %v2787 = vsel %vm1728, %v2783, 0.0
    %2788 = vadd.xlane.f32.xlu0 %v2787
    %v2789 = vpop.xlane.xlu0 %2788
    %v2790 = vrcp.pop %v2786
    %v2791 = vmul.f32 %v2781, %v2790
    %v2792 = vrcp.pop %v2789
    %v2793 = vmul.f32 %v2783, %v2792
    %2796 = vrot.lane.b32.xlu0 %v133, 120
    %v2797 = vpop.permute.xlu0 %2796
    %2798 = vrot.lane.b32.xlu0 %v134, 120
    %v2799 = vpop.permute.xlu0 %2798
    %v2803 = vsel %vm1728, %v2791, 0
    %v2806 = vsel %vm1728, %v2793, 0
    %2808 = vmatprep.subr.mxu0 0.0
    %v2809 = vand.u32 %v2797, 4294901760
    %2810 = vmatpush1.msra.mxu0 %v2809
    %2811 = vmatprep.subr.mxu0 0.0
    %v2812 = vand.u32 %v2799, 4294901760
    %2813 = vmatpush1.msra.mxu0 %v2812
    %2814 = vmatprep.subr.mxu0 0.0
    %2815 = vmatpush1.msra.mxu0 0.0
    %2816 = vmatprep.subr.mxu0 0.0
    %2817 = vmatpush1.msra.mxu0 0.0
    %2818 = vmatprep.subr.mxu0 0.0
    %2819 = vmatpush1.msra.mxu0 0.0
    %2820 = vmatprep.subr.mxu0 0.0
    %2821 = vmatpush1.msra.mxu0 0.0
    %2822 = vmatprep.subr.mxu0 0.0
    %2823 = vmatpush1.msra.mxu0 0.0
    %2824 = vmatprep.subr.mxu0 0.0
    %2825 = vmatpush1.msra.mxu0 0.0
    %2826 = vmatprep.subr.mxu0 0.0
    %2827 = vmatpush1.msra.mxu0 0.0
    %2828 = vmatprep.subr.mxu0 0.0
    %2829 = vmatpush1.msra.mxu0 0.0
    %2830 = vmatprep.subr.mxu0 0.0
    %2831 = vmatpush1.msra.mxu0 0.0
    %2832 = vmatprep.subr.mxu0 0.0
    %2833 = vmatpush1.msra.mxu0 0.0
    %2834 = vmatprep.subr.mxu0 0.0
    %2835 = vmatpush1.msra.mxu0 0.0
    %2836 = vmatprep.subr.mxu0 0.0
    %2837 = vmatpush1.msra.mxu0 0.0
    %2838 = vmatprep.subr.mxu0 0.0
    %2839 = vmatpush1.msra.mxu0 0.0
    %2840 = vmatprep.subr.mxu0 0.0
    %2841 = vmatpush1.msra.mxu0 0.0
    %2842 = vmatprep.subr.mxu0 0.0
    %2843 = vmatpush1.msra.mxu0 0.0
    %2844 = vmatprep.subr.mxu0 0.0
    %2845 = vmatpush1.msra.mxu0 0.0
    %2846 = vmatprep.subr.mxu0 0.0
    %2847 = vmatpush1.msra.mxu0 0.0
    %2848 = vmatprep.subr.mxu0 0.0
    %2849 = vmatpush1.msra.mxu0 0.0
    %2850 = vmatprep.subr.mxu0 0.0
    %2851 = vmatpush1.msra.mxu0 0.0
    %2852 = vmatprep.subr.mxu0 0.0
    %2853 = vmatpush1.msra.mxu0 0.0
    %2854 = vmatprep.subr.mxu0 0.0
    %2855 = vmatpush1.msra.mxu0 0.0
    %2856 = vmatprep.subr.mxu0 0.0
    %2857 = vmatpush1.msra.mxu0 0.0
    %2858 = vmatprep.subr.mxu0 0.0
    %2859 = vmatpush1.msra.mxu0 0.0
    %2860 = vmatprep.subr.mxu0 0.0
    %2861 = vmatpush1.msra.mxu0 0.0
    %2862 = vmatprep.subr.mxu0 0.0
    %2863 = vmatpush1.msra.mxu0 0.0
    %2864 = vmatprep.subr.mxu0 0.0
    %2865 = vmatpush1.msra.mxu0 0.0
    %2866 = vmatprep.subr.mxu0 0.0
    %2867 = vmatpush1.msra.mxu0 0.0
    %2868 = vmatprep.subr.mxu0 0.0
    %2869 = vmatpush1.msra.mxu0 0.0
    %2870 = vmatprep.subr.mxu0 0.0
    %2871 = vmatpush1.msra.mxu0 0.0
    %2872 = vmatprep.subr.mxu0 0.0
    %2873 = vmatpush1.msra.mxu0 0.0
    %2874 = vmatprep.mubr.f32.mxu0 0.0
    %v2875 = vand.u32 %v2803, 4294901760
    %v2876 = vsub.f32 %v2803, %v2875
    %v2877 = vand.u32 %v2876, 4294901760
    %v2878 = vsub.f32 %v2876, %v2877
    %v2879 = vand.u32 %v2878, 4294901760
    %2880 = vmatmul.mubr.f32.gmra.mrb[0].mxu0 %v2879
    %v2881 = vpop.f32.mrb[0].mxu0
    %v2882 = vadd.f32 0.0, %v2881
    %v2883 = vpop.f32.mrb[0].mxu0
    %2884 = vmatprep.mubr.f32.mxu0 0.0
    %v2885 = vand.u32 %v2806, 4294901760
    %v2886 = vsub.f32 %v2806, %v2885
    %v2887 = vand.u32 %v2886, 4294901760
    %v2888 = vsub.f32 %v2886, %v2887
    %v2889 = vand.u32 %v2888, 4294901760
    %2890 = vmatmul.mubr.f32.gmra.mrb[0].mxu0 %v2889
    %v2891 = vpop.f32.mrb[0].mxu0
    %v2892 = vadd.f32 0.0, %v2891
    %v2893 = vpop.f32.mrb[0].mxu0
    %2894 = vdwg.mxu0
    %2895 = vmatprep.subr.mxu0 0.0
    %v2896 = vand.u32 %v2797, 4294901760
    %v2897 = vsub.f32 %v2797, %v2896
    %v2898 = vand.u32 %v2897, 4294901760
    %v2899 = vsub.f32 %v2897, %v2898
    %v2900 = vand.u32 %v2899, 4294901760
    %2901 = vmatpush1.msra.mxu0 %v2900
    %2902 = vmatprep.subr.mxu0 0.0
    %v2903 = vand.u32 %v2799, 4294901760
    %v2904 = vsub.f32 %v2799, %v2903
    %v2905 = vand.u32 %v2904, 4294901760
    %v2906 = vsub.f32 %v2904, %v2905
    %v2907 = vand.u32 %v2906, 4294901760
    %2908 = vmatpush1.msra.mxu0 %v2907
    %2909 = vmatprep.subr.mxu0 0.0
    %2910 = vmatpush1.msra.mxu0 0.0
    %2911 = vmatprep.subr.mxu0 0.0
    %2912 = vmatpush1.msra.mxu0 0.0
    %2913 = vmatprep.subr.mxu0 0.0
    %2914 = vmatpush1.msra.mxu0 0.0
    %2915 = vmatprep.subr.mxu0 0.0
    %2916 = vmatpush1.msra.mxu0 0.0
    %2917 = vmatprep.subr.mxu0 0.0
    %2918 = vmatpush1.msra.mxu0 0.0
    %2919 = vmatprep.subr.mxu0 0.0
    %2920 = vmatpush1.msra.mxu0 0.0
    %2921 = vmatprep.subr.mxu0 0.0
    %2922 = vmatpush1.msra.mxu0 0.0
    %2923 = vmatprep.subr.mxu0 0.0
    %2924 = vmatpush1.msra.mxu0 0.0
    %2925 = vmatprep.subr.mxu0 0.0
    %2926 = vmatpush1.msra.mxu0 0.0
    %2927 = vmatprep.subr.mxu0 0.0
    %2928 = vmatpush1.msra.mxu0 0.0
    %2929 = vmatprep.subr.mxu0 0.0
    %2930 = vmatpush1.msra.mxu0 0.0
    %2931 = vmatprep.subr.mxu0 0.0
    %2932 = vmatpush1.msra.mxu0 0.0
    %2933 = vmatprep.subr.mxu0 0.0
    %2934 = vmatpush1.msra.mxu0 0.0
    %2935 = vmatprep.subr.mxu0 0.0
    %2936 = vmatpush1.msra.mxu0 0.0
    %2937 = vmatprep.subr.mxu0 0.0
    %2938 = vmatpush1.msra.mxu0 0.0
    %2939 = vmatprep.subr.mxu0 0.0
    %2940 = vmatpush1.msra.mxu0 0.0
    %2941 = vmatprep.subr.mxu0 0.0
    %2942 = vmatpush1.msra.mxu0 0.0
    %2943 = vmatprep.subr.mxu0 0.0
    %2944 = vmatpush1.msra.mxu0 0.0
    %2945 = vmatprep.subr.mxu0 0.0
    %2946 = vmatpush1.msra.mxu0 0.0
    %2947 = vmatprep.subr.mxu0 0.0
    %2948 = vmatpush1.msra.mxu0 0.0
    %2949 = vmatprep.subr.mxu0 0.0
    %2950 = vmatpush1.msra.mxu0 0.0
    %2951 = vmatprep.subr.mxu0 0.0
    %2952 = vmatpush1.msra.mxu0 0.0
    %2953 = vmatprep.subr.mxu0 0.0
    %2954 = vmatpush1.msra.mxu0 0.0
    %2955 = vmatprep.subr.mxu0 0.0
    %2956 = vmatpush1.msra.mxu0 0.0
    %2957 = vmatprep.subr.mxu0 0.0
    %2958 = vmatpush1.msra.mxu0 0.0
    %2959 = vmatprep.subr.mxu0 0.0
    %2960 = vmatpush1.msra.mxu0 0.0
    %2961 = vmatprep.subr.mxu0 0.0
    %2962 = vmatpush1.msra.mxu0 0.0
    %2963 = vmatprep.subr.mxu0 0.0
    %2964 = vmatpush1.msra.mxu0 0.0
    %2965 = vmatprep.subr.mxu0 0.0
    %2966 = vmatpush1.msra.mxu0 0.0
    %2967 = vmatprep.subr.mxu0 0.0
    %2968 = vmatpush1.msra.mxu0 0.0
    %2969 = vmatprep.mubr.f32.mxu0 0.0
    %v2970 = vand.u32 %v2803, 4294901760
    %2971 = vmatmul.mubr.f32.gmra.mrb[0].mxu0 %v2970
    %v2972 = vpop.f32.mrb[0].mxu0
    %v2973 = vadd.f32 %v2882, %v2972
    %v2974 = vpop.f32.mrb[0].mxu0
    %2975 = vmatprep.mubr.f32.mxu0 0.0
    %v2976 = vand.u32 %v2806, 4294901760
    %2977 = vmatmul.mubr.f32.gmra.mrb[0].mxu0 %v2976
    %v2978 = vpop.f32.mrb[0].mxu0
    %v2979 = vadd.f32 %v2892, %v2978
    %v2980 = vpop.f32.mrb[0].mxu0
    %2981 = vdwg.mxu0
    %2982 = vmatprep.subr.mxu0 0.0
    %v2983 = vand.u32 %v2797, 4294901760
    %v2984 = vsub.f32 %v2797, %v2983
    %2985 = vmatpush1.msra.mxu0 %v2984
    %2986 = vmatprep.subr.mxu0 0.0
    %v2987 = vand.u32 %v2799, 4294901760
    %v2988 = vsub.f32 %v2799, %v2987
    %2989 = vmatpush1.msra.mxu0 %v2988
    %2990 = vmatprep.subr.mxu0 0.0
    %2991 = vmatpush1.msra.mxu0 0.0
    %2992 = vmatprep.subr.mxu0 0.0
    %2993 = vmatpush1.msra.mxu0 0.0
    %2994 = vmatprep.subr.mxu0 0.0
    %2995 = vmatpush1.msra.mxu0 0.0
    %2996 = vmatprep.subr.mxu0 0.0
    %2997 = vmatpush1.msra.mxu0 0.0
    %2998 = vmatprep.subr.mxu0 0.0
    %2999 = vmatpush1.msra.mxu0 0.0
    %3000 = vmatprep.subr.mxu0 0.0
    %3001 = vmatpush1.msra.mxu0 0.0
    %3002 = vmatprep.subr.mxu0 0.0
    %3003 = vmatpush1.msra.mxu0 0.0
    %3004 = vmatprep.subr.mxu0 0.0
    %3005 = vmatpush1.msra.mxu0 0.0
    %3006 = vmatprep.subr.mxu0 0.0
    %3007 = vmatpush1.msra.mxu0 0.0
    %3008 = vmatprep.subr.mxu0 0.0
    %3009 = vmatpush1.msra.mxu0 0.0
    %3010 = vmatprep.subr.mxu0 0.0
    %3011 = vmatpush1.msra.mxu0 0.0
    %3012 = vmatprep.subr.mxu0 0.0
    %3013 = vmatpush1.msra.mxu0 0.0
    %3014 = vmatprep.subr.mxu0 0.0
    %3015 = vmatpush1.msra.mxu0 0.0
    %3016 = vmatprep.subr.mxu0 0.0
    %3017 = vmatpush1.msra.mxu0 0.0
    %3018 = vmatprep.subr.mxu0 0.0
    %3019 = vmatpush1.msra.mxu0 0.0
    %3020 = vmatprep.subr.mxu0 0.0
    %3021 = vmatpush1.msra.mxu0 0.0
    %3022 = vmatprep.subr.mxu0 0.0
    %3023 = vmatpush1.msra.mxu0 0.0
    %3024 = vmatprep.subr.mxu0 0.0
    %3025 = vmatpush1.msra.mxu0 0.0
    %3026 = vmatprep.subr.mxu0 0.0
    %3027 = vmatpush1.msra.mxu0 0.0
    %3028 = vmatprep.subr.mxu0 0.0
    %3029 = vmatpush1.msra.mxu0 0.0
    %3030 = vmatprep.subr.mxu0 0.0
    %3031 = vmatpush1.msra.mxu0 0.0
    %3032 = vmatprep.subr.mxu0 0.0
    %3033 = vmatpush1.msra.mxu0 0.0
    %3034 = vmatprep.subr.mxu0 0.0
    %3035 = vmatpush1.msra.mxu0 0.0
    %3036 = vmatprep.subr.mxu0 0.0
    %3037 = vmatpush1.msra.mxu0 0.0
    %3038 = vmatprep.subr.mxu0 0.0
    %3039 = vmatpush1.msra.mxu0 0.0
    %3040 = vmatprep.subr.mxu0 0.0
    %3041 = vmatpush1.msra.mxu0 0.0
    %3042 = vmatprep.subr.mxu0 0.0
    %3043 = vmatpush1.msra.mxu0 0.0
    %3044 = vmatprep.subr.mxu0 0.0
    %3045 = vmatpush1.msra.mxu0 0.0
    %3046 = vmatprep.subr.mxu0 0.0
    %3047 = vmatpush1.msra.mxu0 0.0
    %3048 = vmatprep.subr.mxu0 0.0
    %3049 = vmatpush1.msra.mxu0 0.0
    %3050 = vmatprep.mubr.f32.mxu0 0.0
    %v3051 = vand.u32 %v2803, 4294901760
    %v3052 = vsub.f32 %v2803, %v3051
    %3053 = vmatmul.mubr.f32.gmra.mrb[0].mxu0 %v3052
    %v3054 = vpop.f32.mrb[0].mxu0
    %v3055 = vadd.f32 %v2973, %v3054
    %v3056 = vpop.f32.mrb[0].mxu0
    %3057 = vmatprep.mubr.f32.mxu0 0.0
    %v3058 = vand.u32 %v2806, 4294901760
    %v3059 = vsub.f32 %v2806, %v3058
    %3060 = vmatmul.mubr.f32.gmra.mrb[0].mxu0 %v3059
    %v3061 = vpop.f32.mrb[0].mxu0
    %v3062 = vadd.f32 %v2979, %v3061
    %v3063 = vpop.f32.mrb[0].mxu0
    %3064 = vdwg.mxu0
    %3065 = vmatprep.subr.mxu0 0.0
    %v3066 = vand.u32 %v2797, 4294901760
    %3067 = vmatpush1.msra.mxu0 %v3066
    %3068 = vmatprep.subr.mxu0 0.0
    %v3069 = vand.u32 %v2799, 4294901760
    %3070 = vmatpush1.msra.mxu0 %v3069
    %3071 = vmatprep.subr.mxu0 0.0
    %3072 = vmatpush1.msra.mxu0 0.0
    %3073 = vmatprep.subr.mxu0 0.0
    %3074 = vmatpush1.msra.mxu0 0.0
    %3075 = vmatprep.subr.mxu0 0.0
    %3076 = vmatpush1.msra.mxu0 0.0
    %3077 = vmatprep.subr.mxu0 0.0
    %3078 = vmatpush1.msra.mxu0 0.0
    %3079 = vmatprep.subr.mxu0 0.0
    %3080 = vmatpush1.msra.mxu0 0.0
    %3081 = vmatprep.subr.mxu0 0.0
    %3082 = vmatpush1.msra.mxu0 0.0
    %3083 = vmatprep.subr.mxu0 0.0
    %3084 = vmatpush1.msra.mxu0 0.0
    %3085 = vmatprep.subr.mxu0 0.0
    %3086 = vmatpush1.msra.mxu0 0.0
    %3087 = vmatprep.subr.mxu0 0.0
    %3088 = vmatpush1.msra.mxu0 0.0
    %3089 = vmatprep.subr.mxu0 0.0
    %3090 = vmatpush1.msra.mxu0 0.0
    %3091 = vmatprep.subr.mxu0 0.0
    %3092 = vmatpush1.msra.mxu0 0.0
    %3093 = vmatprep.subr.mxu0 0.0
    %3094 = vmatpush1.msra.mxu0 0.0
    %3095 = vmatprep.subr.mxu0 0.0
    %3096 = vmatpush1.msra.mxu0 0.0
    %3097 = vmatprep.subr.mxu0 0.0
    %3098 = vmatpush1.msra.mxu0 0.0
    %3099 = vmatprep.subr.mxu0 0.0
    %3100 = vmatpush1.msra.mxu0 0.0
    %3101 = vmatprep.subr.mxu0 0.0
    %3102 = vmatpush1.msra.mxu0 0.0
    %3103 = vmatprep.subr.mxu0 0.0
    %3104 = vmatpush1.msra.mxu0 0.0
    %3105 = vmatprep.subr.mxu0 0.0
    %3106 = vmatpush1.msra.mxu0 0.0
    %3107 = vmatprep.subr.mxu0 0.0
    %3108 = vmatpush1.msra.mxu0 0.0
    %3109 = vmatprep.subr.mxu0 0.0
    %3110 = vmatpush1.msra.mxu0 0.0
    %3111 = vmatprep.subr.mxu0 0.0
    %3112 = vmatpush1.msra.mxu0 0.0
    %3113 = vmatprep.subr.mxu0 0.0
    %3114 = vmatpush1.msra.mxu0 0.0
    %3115 = vmatprep.subr.mxu0 0.0
    %3116 = vmatpush1.msra.mxu0 0.0
    %3117 = vmatprep.subr.mxu0 0.0
    %3118 = vmatpush1.msra.mxu0 0.0
    %3119 = vmatprep.subr.mxu0 0.0
    %3120 = vmatpush1.msra.mxu0 0.0
    %3121 = vmatprep.subr.mxu0 0.0
    %3122 = vmatpush1.msra.mxu0 0.0
    %3123 = vmatprep.subr.mxu0 0.0
    %3124 = vmatpush1.msra.mxu0 0.0
    %3125 = vmatprep.subr.mxu0 0.0
    %3126 = vmatpush1.msra.mxu0 0.0
    %3127 = vmatprep.subr.mxu0 0.0
    %3128 = vmatpush1.msra.mxu0 0.0
    %3129 = vmatprep.subr.mxu0 0.0
    %3130 = vmatpush1.msra.mxu0 0.0
    %3131 = vmatprep.mubr.f32.mxu0 0.0
    %v3132 = vand.u32 %v2803, 4294901760
    %v3133 = vsub.f32 %v2803, %v3132
    %v3134 = vand.u32 %v3133, 4294901760
    %3135 = vmatmul.mubr.f32.gmra.mrb[0].mxu0 %v3134
    %v3136 = vpop.f32.mrb[0].mxu0
    %v3137 = vadd.f32 %v3055, %v3136
    %v3138 = vpop.f32.mrb[0].mxu0
    %3139 = vmatprep.mubr.f32.mxu0 0.0
    %v3140 = vand.u32 %v2806, 4294901760
    %v3141 = vsub.f32 %v2806, %v3140
    %v3142 = vand.u32 %v3141, 4294901760
    %3143 = vmatmul.mubr.f32.gmra.mrb[0].mxu0 %v3142
    %v3144 = vpop.f32.mrb[0].mxu0
    %v3145 = vadd.f32 %v3062, %v3144
    %v3146 = vpop.f32.mrb[0].mxu0
    %3147 = vdwg.mxu0
    %3148 = vmatprep.subr.mxu0 0.0
    %v3149 = vand.u32 %v2797, 4294901760
    %v3150 = vsub.f32 %v2797, %v3149
    %v3151 = vand.u32 %v3150, 4294901760
    %3152 = vmatpush1.msra.mxu0 %v3151
    %3153 = vmatprep.subr.mxu0 0.0
    %v3154 = vand.u32 %v2799, 4294901760
    %v3155 = vsub.f32 %v2799, %v3154
    %v3156 = vand.u32 %v3155, 4294901760
    %3157 = vmatpush1.msra.mxu0 %v3156
    %3158 = vmatprep.subr.mxu0 0.0
    %3159 = vmatpush1.msra.mxu0 0.0
    %3160 = vmatprep.subr.mxu0 0.0
    %3161 = vmatpush1.msra.mxu0 0.0
    %3162 = vmatprep.subr.mxu0 0.0
    %3163 = vmatpush1.msra.mxu0 0.0
    %3164 = vmatprep.subr.mxu0 0.0
    %3165 = vmatpush1.msra.mxu0 0.0
    %3166 = vmatprep.subr.mxu0 0.0
    %3167 = vmatpush1.msra.mxu0 0.0
    %3168 = vmatprep.subr.mxu0 0.0
    %3169 = vmatpush1.msra.mxu0 0.0
    %3170 = vmatprep.subr.mxu0 0.0
    %3171 = vmatpush1.msra.mxu0 0.0
    %3172 = vmatprep.subr.mxu0 0.0
    %3173 = vmatpush1.msra.mxu0 0.0
    %3174 = vmatprep.subr.mxu0 0.0
    %3175 = vmatpush1.msra.mxu0 0.0
    %3176 = vmatprep.subr.mxu0 0.0
    %3177 = vmatpush1.msra.mxu0 0.0
    %3178 = vmatprep.subr.mxu0 0.0
    %3179 = vmatpush1.msra.mxu0 0.0
    %3180 = vmatprep.subr.mxu0 0.0
    %3181 = vmatpush1.msra.mxu0 0.0
    %3182 = vmatprep.subr.mxu0 0.0
    %3183 = vmatpush1.msra.mxu0 0.0
    %3184 = vmatprep.subr.mxu0 0.0
    %3185 = vmatpush1.msra.mxu0 0.0
    %3186 = vmatprep.subr.mxu0 0.0
    %3187 = vmatpush1.msra.mxu0 0.0
    %3188 = vmatprep.subr.mxu0 0.0
    %3189 = vmatpush1.msra.mxu0 0.0
    %3190 = vmatprep.subr.mxu0 0.0
    %3191 = vmatpush1.msra.mxu0 0.0
    %3192 = vmatprep.subr.mxu0 0.0
    %3193 = vmatpush1.msra.mxu0 0.0
    %3194 = vmatprep.subr.mxu0 0.0
    %3195 = vmatpush1.msra.mxu0 0.0
    %3196 = vmatprep.subr.mxu0 0.0
    %3197 = vmatpush1.msra.mxu0 0.0
    %3198 = vmatprep.subr.mxu0 0.0
    %3199 = vmatpush1.msra.mxu0 0.0
    %3200 = vmatprep.subr.mxu0 0.0
    %3201 = vmatpush1.msra.mxu0 0.0
    %3202 = vmatprep.subr.mxu0 0.0
    %3203 = vmatpush1.msra.mxu0 0.0
    %3204 = vmatprep.subr.mxu0 0.0
    %3205 = vmatpush1.msra.mxu0 0.0
    %3206 = vmatprep.subr.mxu0 0.0
    %3207 = vmatpush1.msra.mxu0 0.0
    %3208 = vmatprep.subr.mxu0 0.0
    %3209 = vmatpush1.msra.mxu0 0.0
    %3210 = vmatprep.subr.mxu0 0.0
    %3211 = vmatpush1.msra.mxu0 0.0
    %3212 = vmatprep.subr.mxu0 0.0
    %3213 = vmatpush1.msra.mxu0 0.0
    %3214 = vmatprep.subr.mxu0 0.0
    %3215 = vmatpush1.msra.mxu0 0.0
    %3216 = vmatprep.subr.mxu0 0.0
    %3217 = vmatpush1.msra.mxu0 0.0
    %3218 = vmatprep.mubr.f32.mxu0 0.0
    %v3219 = vand.u32 %v2803, 4294901760
    %3220 = vmatmul.mubr.f32.gmra.mrb[0].mxu0 %v3219
    %v3221 = vpop.f32.mrb[0].mxu0
    %v3222 = vadd.f32 %v3137, %v3221
    %v3223 = vpop.f32.mrb[0].mxu0
    %3224 = vmatprep.mubr.f32.mxu0 0.0
    %v3225 = vand.u32 %v2806, 4294901760
    %3226 = vmatmul.mubr.f32.gmra.mrb[0].mxu0 %v3225
    %v3227 = vpop.f32.mrb[0].mxu0
    %v3228 = vadd.f32 %v3145, %v3227
    %v3229 = vpop.f32.mrb[0].mxu0
    %3230 = vdwg.mxu0
    %3231 = vmatprep.subr.mxu0 0.0
    %v3232 = vand.u32 %v2797, 4294901760
    %3233 = vmatpush1.msra.mxu0 %v3232
    %3234 = vmatprep.subr.mxu0 0.0
    %v3235 = vand.u32 %v2799, 4294901760
    %3236 = vmatpush1.msra.mxu0 %v3235
    %3237 = vmatprep.subr.mxu0 0.0
    %3238 = vmatpush1.msra.mxu0 0.0
    %3239 = vmatprep.subr.mxu0 0.0
    %3240 = vmatpush1.msra.mxu0 0.0
    %3241 = vmatprep.subr.mxu0 0.0
    %3242 = vmatpush1.msra.mxu0 0.0
    %3243 = vmatprep.subr.mxu0 0.0
    %3244 = vmatpush1.msra.mxu0 0.0
    %3245 = vmatprep.subr.mxu0 0.0
    %3246 = vmatpush1.msra.mxu0 0.0
    %3247 = vmatprep.subr.mxu0 0.0
    %3248 = vmatpush1.msra.mxu0 0.0
    %3249 = vmatprep.subr.mxu0 0.0
    %3250 = vmatpush1.msra.mxu0 0.0
    %3251 = vmatprep.subr.mxu0 0.0
    %3252 = vmatpush1.msra.mxu0 0.0
    %3253 = vmatprep.subr.mxu0 0.0
    %3254 = vmatpush1.msra.mxu0 0.0
    %3255 = vmatprep.subr.mxu0 0.0
    %3256 = vmatpush1.msra.mxu0 0.0
    %3257 = vmatprep.subr.mxu0 0.0
    %3258 = vmatpush1.msra.mxu0 0.0
    %3259 = vmatprep.subr.mxu0 0.0
    %3260 = vmatpush1.msra.mxu0 0.0
    %3261 = vmatprep.subr.mxu0 0.0
    %3262 = vmatpush1.msra.mxu0 0.0
    %3263 = vmatprep.subr.mxu0 0.0
    %3264 = vmatpush1.msra.mxu0 0.0
    %3265 = vmatprep.subr.mxu0 0.0
    %3266 = vmatpush1.msra.mxu0 0.0
    %3267 = vmatprep.subr.mxu0 0.0
    %3268 = vmatpush1.msra.mxu0 0.0
    %3269 = vmatprep.subr.mxu0 0.0
    %3270 = vmatpush1.msra.mxu0 0.0
    %3271 = vmatprep.subr.mxu0 0.0
    %3272 = vmatpush1.msra.mxu0 0.0
    %3273 = vmatprep.subr.mxu0 0.0
    %3274 = vmatpush1.msra.mxu0 0.0
    %3275 = vmatprep.subr.mxu0 0.0
    %3276 = vmatpush1.msra.mxu0 0.0
    %3277 = vmatprep.subr.mxu0 0.0
    %3278 = vmatpush1.msra.mxu0 0.0
    %3279 = vmatprep.subr.mxu0 0.0
    %3280 = vmatpush1.msra.mxu0 0.0
    %3281 = vmatprep.subr.mxu0 0.0
    %3282 = vmatpush1.msra.mxu0 0.0
    %3283 = vmatprep.subr.mxu0 0.0
    %3284 = vmatpush1.msra.mxu0 0.0
    %3285 = vmatprep.subr.mxu0 0.0
    %3286 = vmatpush1.msra.mxu0 0.0
    %3287 = vmatprep.subr.mxu0 0.0
    %3288 = vmatpush1.msra.mxu0 0.0
    %3289 = vmatprep.subr.mxu0 0.0
    %3290 = vmatpush1.msra.mxu0 0.0
    %3291 = vmatprep.subr.mxu0 0.0
    %3292 = vmatpush1.msra.mxu0 0.0
    %3293 = vmatprep.subr.mxu0 0.0
    %3294 = vmatpush1.msra.mxu0 0.0
    %3295 = vmatprep.subr.mxu0 0.0
    %3296 = vmatpush1.msra.mxu0 0.0
    %3297 = vmatprep.mubr.f32.mxu0 0.0
    %v3298 = vand.u32 %v2803, 4294901760
    %3299 = vmatmul.mubr.f32.gmra.mrb[0].mxu0 %v3298
    %v3300 = vpop.f32.mrb[0].mxu0
    %v3301 = vadd.f32 %v3222, %v3300
    %v3302 = vpop.f32.mrb[0].mxu0
    %3303 = vmatprep.mubr.f32.mxu0 0.0
    %v3304 = vand.u32 %v2806, 4294901760
    %3305 = vmatmul.mubr.f32.gmra.mrb[0].mxu0 %v3304
    %v3306 = vpop.f32.mrb[0].mxu0
    %v3307 = vadd.f32 %v3228, %v3306
    %v3308 = vpop.f32.mrb[0].mxu0
    %3309 = vdwg.mxu0
    %3312 = vrot.lane.b32.xlu0 %v3301, 8
    %v3313 = vpop.permute.xlu0 %3312
    %3314 = vrot.lane.b32.xlu0 %v3307, 8
    %v3315 = vpop.permute.xlu0 %3314
    %vm3318 = vcmask 130112
    %3319 = vst.msk [vmem:[#allocation2] sm:$0xff] %vm3318, %v3313
    %3320 = vst.msk [vmem:[#allocation2 + $0x8] sm:$0xff] %vm3318, %v3315
    %3321 = vrot.lane.b32.xlu0 %v1208, 120
    %v3322 = vpop.permute.xlu0 %3321
    %3323 = vrot.lane.b32.xlu0 %v1214, 120
    %v3324 = vpop.permute.xlu0 %3323
    %v3325 = vsel %vm1219, %v3322, 0
    %v3327 = vsel %vm1219, %v3324, 0
    %3329 = vmatprep.subr.mxu0 0.0
    %v3330 = vand.u32 %v3325, 4294901760
    %3331 = vmatpush1.xpose.msra.mxu0 %v3330
    %3332 = vmatprep.subr.mxu0 0.0
    %v3333 = vand.u32 %v3327, 4294901760
    %3334 = vmatpush1.xpose.msra.mxu0 %v3333
    %3335 = vmatprep.subr.mxu0 0.0
    %3336 = vmatpush1.xpose.msra.mxu0 0.0
    %3337 = vmatprep.subr.mxu0 0.0
    %3338 = vmatpush1.xpose.msra.mxu0 0.0
    %3339 = vmatprep.subr.mxu0 0.0
    %3340 = vmatpush1.xpose.msra.mxu0 0.0
    %3341 = vmatprep.subr.mxu0 0.0
    %3342 = vmatpush1.xpose.msra.mxu0 0.0
    %3343 = vmatprep.subr.mxu0 0.0
    %3344 = vmatpush1.xpose.msra.mxu0 0.0
    %3345 = vmatprep.subr.mxu0 0.0
    %3346 = vmatpush1.xpose.msra.mxu0 0.0
    %3347 = vmatprep.subr.mxu0 0.0
    %3348 = vmatpush1.xpose.msra.mxu0 0.0
    %3349 = vmatprep.subr.mxu0 0.0
    %3350 = vmatpush1.xpose.msra.mxu0 0.0
    %3351 = vmatprep.subr.mxu0 0.0
    %3352 = vmatpush1.xpose.msra.mxu0 0.0
    %3353 = vmatprep.subr.mxu0 0.0
    %3354 = vmatpush1.xpose.msra.mxu0 0.0
    %3355 = vmatprep.subr.mxu0 0.0
    %3356 = vmatpush1.xpose.msra.mxu0 0.0
    %3357 = vmatprep.subr.mxu0 0.0
    %3358 = vmatpush1.xpose.msra.mxu0 0.0
    %3359 = vmatprep.subr.mxu0 0.0
    %3360 = vmatpush1.xpose.msra.mxu0 0.0
    %3361 = vmatprep.subr.mxu0 0.0
    %3362 = vmatpush1.xpose.msra.mxu0 0.0
    %3363 = vmatprep.subr.mxu0 0.0
    %3364 = vmatpush1.xpose.msra.mxu0 0.0
    %3365 = vmatprep.subr.mxu0 0.0
    %3366 = vmatpush1.xpose.msra.mxu0 0.0
    %3367 = vmatprep.subr.mxu0 0.0
    %3368 = vmatpush1.xpose.msra.mxu0 0.0
    %3369 = vmatprep.subr.mxu0 0.0
    %3370 = vmatpush1.xpose.msra.mxu0 0.0
    %3371 = vmatprep.subr.mxu0 0.0
    %3372 = vmatpush1.xpose.msra.mxu0 0.0
    %3373 = vmatprep.subr.mxu0 0.0
    %3374 = vmatpush1.xpose.msra.mxu0 0.0
    %3375 = vmatprep.subr.mxu0 0.0
    %3376 = vmatpush1.xpose.msra.mxu0 0.0
    %3377 = vmatprep.subr.mxu0 0.0
    %3378 = vmatpush1.xpose.msra.mxu0 0.0
    %3379 = vmatprep.subr.mxu0 0.0
    %3380 = vmatpush1.xpose.msra.mxu0 0.0
    %3381 = vmatprep.subr.mxu0 0.0
    %3382 = vmatpush1.xpose.msra.mxu0 0.0
    %3383 = vmatprep.subr.mxu0 0.0
    %3384 = vmatpush1.xpose.msra.mxu0 0.0
    %3385 = vmatprep.subr.mxu0 0.0
    %3386 = vmatpush1.xpose.msra.mxu0 0.0
    %3387 = vmatprep.subr.mxu0 0.0
    %3388 = vmatpush1.xpose.msra.mxu0 0.0
    %3389 = vmatprep.subr.mxu0 0.0
    %3390 = vmatpush1.xpose.msra.mxu0 0.0
    %3391 = vmatprep.subr.mxu0 0.0
    %3392 = vmatpush1.xpose.msra.mxu0 0.0
    %3393 = vmatprep.subr.mxu0 0.0
    %3394 = vmatpush1.xpose.msra.mxu0 0.0
    %3395 = vmatprep.mubr.f32.mxu0 0.0
    %v3396 = vand.u32 %v3325, 4294901760
    %v3397 = vsub.f32 %v3325, %v3396
    %v3398 = vand.u32 %v3397, 4294901760
    %v3399 = vsub.f32 %v3397, %v3398
    %v3400 = vand.u32 %v3399, 4294901760
    %3401 = vmatmul.mubr.f32.gmra.mrb[0].mxu0 %v3400
    %v3402 = vpop.f32.mrb[0].mxu0
    %v3403 = vadd.f32 %v1217, %v3402
    %v3404 = vpop.f32.mrb[0].mxu0
    %3405 = vmatprep.mubr.f32.mxu0 0.0
    %v3406 = vand.u32 %v3327, 4294901760
    %v3407 = vsub.f32 %v3327, %v3406
    %v3408 = vand.u32 %v3407, 4294901760
    %v3409 = vsub.f32 %v3407, %v3408
    %v3410 = vand.u32 %v3409, 4294901760
    %3411 = vmatmul.mubr.f32.gmra.mrb[0].mxu0 %v3410
    %v3412 = vpop.f32.mrb[0].mxu0
    %v3413 = vadd.f32 %v1218, %v3412
    %v3414 = vpop.f32.mrb[0].mxu0
    %3415 = vdwg.mxu0
    %3416 = vmatprep.subr.mxu0 0.0
    %v3417 = vand.u32 %v3325, 4294901760
    %v3418 = vsub.f32 %v3325, %v3417
    %v3419 = vand.u32 %v3418, 4294901760
    %v3420 = vsub.f32 %v3418, %v3419
    %v3421 = vand.u32 %v3420, 4294901760
    %3422 = vmatpush1.xpose.msra.mxu0 %v3421
    %3423 = vmatprep.subr.mxu0 0.0
    %v3424 = vand.u32 %v3327, 4294901760
    %v3425 = vsub.f32 %v3327, %v3424
    %v3426 = vand.u32 %v3425, 4294901760
    %v3427 = vsub.f32 %v3425, %v3426
    %v3428 = vand.u32 %v3427, 4294901760
    %3429 = vmatpush1.xpose.msra.mxu0 %v3428
    %3430 = vmatprep.subr.mxu0 0.0
    %3431 = vmatpush1.xpose.msra.mxu0 0.0
    %3432 = vmatprep.subr.mxu0 0.0
    %3433 = vmatpush1.xpose.msra.mxu0 0.0
    %3434 = vmatprep.subr.mxu0 0.0
    %3435 = vmatpush1.xpose.msra.mxu0 0.0
    %3436 = vmatprep.subr.mxu0 0.0
    %3437 = vmatpush1.xpose.msra.mxu0 0.0
    %3438 = vmatprep.subr.mxu0 0.0
    %3439 = vmatpush1.xpose.msra.mxu0 0.0
    %3440 = vmatprep.subr.mxu0 0.0
    %3441 = vmatpush1.xpose.msra.mxu0 0.0
    %3442 = vmatprep.subr.mxu0 0.0
    %3443 = vmatpush1.xpose.msra.mxu0 0.0
    %3444 = vmatprep.subr.mxu0 0.0
    %3445 = vmatpush1.xpose.msra.mxu0 0.0
    %3446 = vmatprep.subr.mxu0 0.0
    %3447 = vmatpush1.xpose.msra.mxu0 0.0
    %3448 = vmatprep.subr.mxu0 0.0
    %3449 = vmatpush1.xpose.msra.mxu0 0.0
    %3450 = vmatprep.subr.mxu0 0.0
    %3451 = vmatpush1.xpose.msra.mxu0 0.0
    %3452 = vmatprep.subr.mxu0 0.0
    %3453 = vmatpush1.xpose.msra.mxu0 0.0
    %3454 = vmatprep.subr.mxu0 0.0
    %3455 = vmatpush1.xpose.msra.mxu0 0.0
    %3456 = vmatprep.subr.mxu0 0.0
    %3457 = vmatpush1.xpose.msra.mxu0 0.0
    %3458 = vmatprep.subr.mxu0 0.0
    %3459 = vmatpush1.xpose.msra.mxu0 0.0
    %3460 = vmatprep.subr.mxu0 0.0
    %3461 = vmatpush1.xpose.msra.mxu0 0.0
    %3462 = vmatprep.subr.mxu0 0.0
    %3463 = vmatpush1.xpose.msra.mxu0 0.0
    %3464 = vmatprep.subr.mxu0 0.0
    %3465 = vmatpush1.xpose.msra.mxu0 0.0
    %3466 = vmatprep.subr.mxu0 0.0
    %3467 = vmatpush1.xpose.msra.mxu0 0.0
    %3468 = vmatprep.subr.mxu0 0.0
    %3469 = vmatpush1.xpose.msra.mxu0 0.0
    %3470 = vmatprep.subr.mxu0 0.0
    %3471 = vmatpush1.xpose.msra.mxu0 0.0
    %3472 = vmatprep.subr.mxu0 0.0
    %3473 = vmatpush1.xpose.msra.mxu0 0.0
    %3474 = vmatprep.subr.mxu0 0.0
    %3475 = vmatpush1.xpose.msra.mxu0 0.0
    %3476 = vmatprep.subr.mxu0 0.0
    %3477 = vmatpush1.xpose.msra.mxu0 0.0
    %3478 = vmatprep.subr.mxu0 0.0
    %3479 = vmatpush1.xpose.msra.mxu0 0.0
    %3480 = vmatprep.subr.mxu0 0.0
    %3481 = vmatpush1.xpose.msra.mxu0 0.0
    %3482 = vmatprep.subr.mxu0 0.0
    %3483 = vmatpush1.xpose.msra.mxu0 0.0
    %3484 = vmatprep.subr.mxu0 0.0
    %3485 = vmatpush1.xpose.msra.mxu0 0.0
    %3486 = vmatprep.subr.mxu0 0.0
    %3487 = vmatpush1.xpose.msra.mxu0 0.0
    %3488 = vmatprep.subr.mxu0 0.0
    %3489 = vmatpush1.xpose.msra.mxu0 0.0
    %3490 = vmatprep.mubr.f32.mxu0 0.0
    %v3491 = vand.u32 %v3325, 4294901760
    %3492 = vmatmul.mubr.f32.gmra.mrb[0].mxu0 %v3491
    %v3493 = vpop.f32.mrb[0].mxu0
    %v3494 = vadd.f32 %v3403, %v3493
    %v3495 = vpop.f32.mrb[0].mxu0
    %3496 = vmatprep.mubr.f32.mxu0 0.0
    %v3497 = vand.u32 %v3327, 4294901760
    %3498 = vmatmul.mubr.f32.gmra.mrb[0].mxu0 %v3497
    %v3499 = vpop.f32.mrb[0].mxu0
    %v3500 = vadd.f32 %v3413, %v3499
    %v3501 = vpop.f32.mrb[0].mxu0
    %3502 = vdwg.mxu0
    %3503 = vmatprep.subr.mxu0 0.0
    %v3504 = vand.u32 %v3325, 4294901760
    %v3505 = vsub.f32 %v3325, %v3504
    %3506 = vmatpush1.xpose.msra.mxu0 %v3505
    %3507 = vmatprep.subr.mxu0 0.0
    %v3508 = vand.u32 %v3327, 4294901760
    %v3509 = vsub.f32 %v3327, %v3508
    %3510 = vmatpush1.xpose.msra.mxu0 %v3509
    %3511 = vmatprep.subr.mxu0 0.0
    %3512 = vmatpush1.xpose.msra.mxu0 0.0
    %3513 = vmatprep.subr.mxu0 0.0
    %3514 = vmatpush1.xpose.msra.mxu0 0.0
    %3515 = vmatprep.subr.mxu0 0.0
    %3516 = vmatpush1.xpose.msra.mxu0 0.0
    %3517 = vmatprep.subr.mxu0 0.0
    %3518 = vmatpush1.xpose.msra.mxu0 0.0
    %3519 = vmatprep.subr.mxu0 0.0
    %3520 = vmatpush1.xpose.msra.mxu0 0.0
    %3521 = vmatprep.subr.mxu0 0.0
    %3522 = vmatpush1.xpose.msra.mxu0 0.0
    %3523 = vmatprep.subr.mxu0 0.0
    %3524 = vmatpush1.xpose.msra.mxu0 0.0
    %3525 = vmatprep.subr.mxu0 0.0
    %3526 = vmatpush1.xpose.msra.mxu0 0.0
    %3527 = vmatprep.subr.mxu0 0.0
    %3528 = vmatpush1.xpose.msra.mxu0 0.0
    %3529 = vmatprep.subr.mxu0 0.0
    %3530 = vmatpush1.xpose.msra.mxu0 0.0
    %3531 = vmatprep.subr.mxu0 0.0
    %3532 = vmatpush1.xpose.msra.mxu0 0.0
    %3533 = vmatprep.subr.mxu0 0.0
    %3534 = vmatpush1.xpose.msra.mxu0 0.0
    %3535 = vmatprep.subr.mxu0 0.0
    %3536 = vmatpush1.xpose.msra.mxu0 0.0
    %3537 = vmatprep.subr.mxu0 0.0
    %3538 = vmatpush1.xpose.msra.mxu0 0.0
    %3539 = vmatprep.subr.mxu0 0.0
    %3540 = vmatpush1.xpose.msra.mxu0 0.0
    %3541 = vmatprep.subr.mxu0 0.0
    %3542 = vmatpush1.xpose.msra.mxu0 0.0
    %3543 = vmatprep.subr.mxu0 0.0
    %3544 = vmatpush1.xpose.msra.mxu0 0.0
    %3545 = vmatprep.subr.mxu0 0.0
    %3546 = vmatpush1.xpose.msra.mxu0 0.0
    %3547 = vmatprep.subr.mxu0 0.0
    %3548 = vmatpush1.xpose.msra.mxu0 0.0
    %3549 = vmatprep.subr.mxu0 0.0
    %3550 = vmatpush1.xpose.msra.mxu0 0.0
    %3551 = vmatprep.subr.mxu0 0.0
    %3552 = vmatpush1.xpose.msra.mxu0 0.0
    %3553 = vmatprep.subr.mxu0 0.0
    %3554 = vmatpush1.xpose.msra.mxu0 0.0
    %3555 = vmatprep.subr.mxu0 0.0
    %3556 = vmatpush1.xpose.msra.mxu0 0.0
    %3557 = vmatprep.subr.mxu0 0.0
    %3558 = vmatpush1.xpose.msra.mxu0 0.0
    %3559 = vmatprep.subr.mxu0 0.0
    %3560 = vmatpush1.xpose.msra.mxu0 0.0
    %3561 = vmatprep.subr.mxu0 0.0
    %3562 = vmatpush1.xpose.msra.mxu0 0.0
    %3563 = vmatprep.subr.mxu0 0.0
    %3564 = vmatpush1.xpose.msra.mxu0 0.0
    %3565 = vmatprep.subr.mxu0 0.0
    %3566 = vmatpush1.xpose.msra.mxu0 0.0
    %3567 = vmatprep.subr.mxu0 0.0
    %3568 = vmatpush1.xpose.msra.mxu0 0.0
    %3569 = vmatprep.subr.mxu0 0.0
    %3570 = vmatpush1.xpose.msra.mxu0 0.0
    %3571 = vmatprep.mubr.f32.mxu0 0.0
    %v3572 = vand.u32 %v3325, 4294901760
    %v3573 = vsub.f32 %v3325, %v3572
    %3574 = vmatmul.mubr.f32.gmra.mrb[0].mxu0 %v3573
    %v3575 = vpop.f32.mrb[0].mxu0
    %v3576 = vadd.f32 %v3494, %v3575
    %v3577 = vpop.f32.mrb[0].mxu0
    %3578 = vmatprep.mubr.f32.mxu0 0.0
    %v3579 = vand.u32 %v3327, 4294901760
    %v3580 = vsub.f32 %v3327, %v3579
    %3581 = vmatmul.mubr.f32.gmra.mrb[0].mxu0 %v3580
    %v3582 = vpop.f32.mrb[0].mxu0
    %v3583 = vadd.f32 %v3500, %v3582
    %v3584 = vpop.f32.mrb[0].mxu0
    %3585 = vdwg.mxu0
    %3586 = vmatprep.subr.mxu0 0.0
    %v3587 = vand.u32 %v3325, 4294901760
    %3588 = vmatpush1.xpose.msra.mxu0 %v3587
    %3589 = vmatprep.subr.mxu0 0.0
    %v3590 = vand.u32 %v3327, 4294901760
    %3591 = vmatpush1.xpose.msra.mxu0 %v3590
    %3592 = vmatprep.subr.mxu0 0.0
    %3593 = vmatpush1.xpose.msra.mxu0 0.0
    %3594 = vmatprep.subr.mxu0 0.0
    %3595 = vmatpush1.xpose.msra.mxu0 0.0
    %3596 = vmatprep.subr.mxu0 0.0
    %3597 = vmatpush1.xpose.msra.mxu0 0.0
    %3598 = vmatprep.subr.mxu0 0.0
    %3599 = vmatpush1.xpose.msra.mxu0 0.0
    %3600 = vmatprep.subr.mxu0 0.0
    %3601 = vmatpush1.xpose.msra.mxu0 0.0
    %3602 = vmatprep.subr.mxu0 0.0
    %3603 = vmatpush1.xpose.msra.mxu0 0.0
    %3604 = vmatprep.subr.mxu0 0.0
    %3605 = vmatpush1.xpose.msra.mxu0 0.0
    %3606 = vmatprep.subr.mxu0 0.0
    %3607 = vmatpush1.xpose.msra.mxu0 0.0
    %3608 = vmatprep.subr.mxu0 0.0
    %3609 = vmatpush1.xpose.msra.mxu0 0.0
    %3610 = vmatprep.subr.mxu0 0.0
    %3611 = vmatpush1.xpose.msra.mxu0 0.0
    %3612 = vmatprep.subr.mxu0 0.0
    %3613 = vmatpush1.xpose.msra.mxu0 0.0
    %3614 = vmatprep.subr.mxu0 0.0
    %3615 = vmatpush1.xpose.msra.mxu0 0.0
    %3616 = vmatprep.subr.mxu0 0.0
    %3617 = vmatpush1.xpose.msra.mxu0 0.0
    %3618 = vmatprep.subr.mxu0 0.0
    %3619 = vmatpush1.xpose.msra.mxu0 0.0
    %3620 = vmatprep.subr.mxu0 0.0
    %3621 = vmatpush1.xpose.msra.mxu0 0.0
    %3622 = vmatprep.subr.mxu0 0.0
    %3623 = vmatpush1.xpose.msra.mxu0 0.0
    %3624 = vmatprep.subr.mxu0 0.0
    %3625 = vmatpush1.xpose.msra.mxu0 0.0
    %3626 = vmatprep.subr.mxu0 0.0
    %3627 = vmatpush1.xpose.msra.mxu0 0.0
    %3628 = vmatprep.subr.mxu0 0.0
    %3629 = vmatpush1.xpose.msra.mxu0 0.0
    %3630 = vmatprep.subr.mxu0 0.0
    %3631 = vmatpush1.xpose.msra.mxu0 0.0
    %3632 = vmatprep.subr.mxu0 0.0
    %3633 = vmatpush1.xpose.msra.mxu0 0.0
    %3634 = vmatprep.subr.mxu0 0.0
    %3635 = vmatpush1.xpose.msra.mxu0 0.0
    %3636 = vmatprep.subr.mxu0 0.0
    %3637 = vmatpush1.xpose.msra.mxu0 0.0
    %3638 = vmatprep.subr.mxu0 0.0
    %3639 = vmatpush1.xpose.msra.mxu0 0.0
    %3640 = vmatprep.subr.mxu0 0.0
    %3641 = vmatpush1.xpose.msra.mxu0 0.0
    %3642 = vmatprep.subr.mxu0 0.0
    %3643 = vmatpush1.xpose.msra.mxu0 0.0
    %3644 = vmatprep.subr.mxu0 0.0
    %3645 = vmatpush1.xpose.msra.mxu0 0.0
    %3646 = vmatprep.subr.mxu0 0.0
    %3647 = vmatpush1.xpose.msra.mxu0 0.0
    %3648 = vmatprep.subr.mxu0 0.0
    %3649 = vmatpush1.xpose.msra.mxu0 0.0
    %3650 = vmatprep.subr.mxu0 0.0
    %3651 = vmatpush1.xpose.msra.mxu0 0.0
    %3652 = vmatprep.mubr.f32.mxu0 0.0
    %v3653 = vand.u32 %v3325, 4294901760
    %v3654 = vsub.f32 %v3325, %v3653
    %v3655 = vand.u32 %v3654, 4294901760
    %3656 = vmatmul.mubr.f32.gmra.mrb[0].mxu0 %v3655
    %v3657 = vpop.f32.mrb[0].mxu0
    %v3658 = vadd.f32 %v3576, %v3657
    %v3659 = vpop.f32.mrb[0].mxu0
    %3660 = vmatprep.mubr.f32.mxu0 0.0
    %v3661 = vand.u32 %v3327, 4294901760
    %v3662 = vsub.f32 %v3327, %v3661
    %v3663 = vand.u32 %v3662, 4294901760
    %3664 = vmatmul.mubr.f32.gmra.mrb[0].mxu0 %v3663
    %v3665 = vpop.f32.mrb[0].mxu0
    %v3666 = vadd.f32 %v3583, %v3665
    %v3667 = vpop.f32.mrb[0].mxu0
    %3668 = vdwg.mxu0
    %3669 = vmatprep.subr.mxu0 0.0
    %v3670 = vand.u32 %v3325, 4294901760
    %v3671 = vsub.f32 %v3325, %v3670
    %v3672 = vand.u32 %v3671, 4294901760
    %3673 = vmatpush1.xpose.msra.mxu0 %v3672
    %3674 = vmatprep.subr.mxu0 0.0
    %v3675 = vand.u32 %v3327, 4294901760
    %v3676 = vsub.f32 %v3327, %v3675
    %v3677 = vand.u32 %v3676, 4294901760
    %3678 = vmatpush1.xpose.msra.mxu0 %v3677
    %3679 = vmatprep.subr.mxu0 0.0
    %3680 = vmatpush1.xpose.msra.mxu0 0.0
    %3681 = vmatprep.subr.mxu0 0.0
    %3682 = vmatpush1.xpose.msra.mxu0 0.0
    %3683 = vmatprep.subr.mxu0 0.0
    %3684 = vmatpush1.xpose.msra.mxu0 0.0
    %3685 = vmatprep.subr.mxu0 0.0
    %3686 = vmatpush1.xpose.msra.mxu0 0.0
    %3687 = vmatprep.subr.mxu0 0.0
    %3688 = vmatpush1.xpose.msra.mxu0 0.0
    %3689 = vmatprep.subr.mxu0 0.0
    %3690 = vmatpush1.xpose.msra.mxu0 0.0
    %3691 = vmatprep.subr.mxu0 0.0
    %3692 = vmatpush1.xpose.msra.mxu0 0.0
    %3693 = vmatprep.subr.mxu0 0.0
    %3694 = vmatpush1.xpose.msra.mxu0 0.0
    %3695 = vmatprep.subr.mxu0 0.0
    %3696 = vmatpush1.xpose.msra.mxu0 0.0
    %3697 = vmatprep.subr.mxu0 0.0
    %3698 = vmatpush1.xpose.msra.mxu0 0.0
    %3699 = vmatprep.subr.mxu0 0.0
    %3700 = vmatpush1.xpose.msra.mxu0 0.0
    %3701 = vmatprep.subr.mxu0 0.0
    %3702 = vmatpush1.xpose.msra.mxu0 0.0
    %3703 = vmatprep.subr.mxu0 0.0
    %3704 = vmatpush1.xpose.msra.mxu0 0.0
    %3705 = vmatprep.subr.mxu0 0.0
    %3706 = vmatpush1.xpose.msra.mxu0 0.0
    %3707 = vmatprep.subr.mxu0 0.0
    %3708 = vmatpush1.xpose.msra.mxu0 0.0
    %3709 = vmatprep.subr.mxu0 0.0
    %3710 = vmatpush1.xpose.msra.mxu0 0.0
    %3711 = vmatprep.subr.mxu0 0.0
    %3712 = vmatpush1.xpose.msra.mxu0 0.0
    %3713 = vmatprep.subr.mxu0 0.0
    %3714 = vmatpush1.xpose.msra.mxu0 0.0
    %3715 = vmatprep.subr.mxu0 0.0
    %3716 = vmatpush1.xpose.msra.mxu0 0.0
    %3717 = vmatprep.subr.mxu0 0.0
    %3718 = vmatpush1.xpose.msra.mxu0 0.0
    %3719 = vmatprep.subr.mxu0 0.0
    %3720 = vmatpush1.xpose.msra.mxu0 0.0
    %3721 = vmatprep.subr.mxu0 0.0
    %3722 = vmatpush1.xpose.msra.mxu0 0.0
    %3723 = vmatprep.subr.mxu0 0.0
    %3724 = vmatpush1.xpose.msra.mxu0 0.0
    %3725 = vmatprep.subr.mxu0 0.0
    %3726 = vmatpush1.xpose.msra.mxu0 0.0
    %3727 = vmatprep.subr.mxu0 0.0
    %3728 = vmatpush1.xpose.msra.mxu0 0.0
    %3729 = vmatprep.subr.mxu0 0.0
    %3730 = vmatpush1.xpose.msra.mxu0 0.0
    %3731 = vmatprep.subr.mxu0 0.0
    %3732 = vmatpush1.xpose.msra.mxu0 0.0
    %3733 = vmatprep.subr.mxu0 0.0
    %3734 = vmatpush1.xpose.msra.mxu0 0.0
    %3735 = vmatprep.subr.mxu0 0.0
    %3736 = vmatpush1.xpose.msra.mxu0 0.0
    %3737 = vmatprep.subr.mxu0 0.0
    %3738 = vmatpush1.xpose.msra.mxu0 0.0
    %3739 = vmatprep.mubr.f32.mxu0 0.0
    %v3740 = vand.u32 %v3325, 4294901760
    %3741 = vmatmul.mubr.f32.gmra.mrb[0].mxu0 %v3740
    %v3742 = vpop.f32.mrb[0].mxu0
    %v3743 = vadd.f32 %v3658, %v3742
    %v3744 = vpop.f32.mrb[0].mxu0
    %3745 = vmatprep.mubr.f32.mxu0 0.0
    %v3746 = vand.u32 %v3327, 4294901760
    %3747 = vmatmul.mubr.f32.gmra.mrb[0].mxu0 %v3746
    %v3748 = vpop.f32.mrb[0].mxu0
    %v3749 = vadd.f32 %v3666, %v3748
    %v3750 = vpop.f32.mrb[0].mxu0
    %3751 = vdwg.mxu0
    %3752 = vmatprep.subr.mxu0 0.0
    %v3753 = vand.u32 %v3325, 4294901760
    %3754 = vmatpush1.xpose.msra.mxu0 %v3753
    %3755 = vmatprep.subr.mxu0 0.0
    %v3756 = vand.u32 %v3327, 4294901760
    %3757 = vmatpush1.xpose.msra.mxu0 %v3756
    %3758 = vmatprep.subr.mxu0 0.0
    %3759 = vmatpush1.xpose.msra.mxu0 0.0
    %3760 = vmatprep.subr.mxu0 0.0
    %3761 = vmatpush1.xpose.msra.mxu0 0.0
    %3762 = vmatprep.subr.mxu0 0.0
    %3763 = vmatpush1.xpose.msra.mxu0 0.0
    %3764 = vmatprep.subr.mxu0 0.0
    %3765 = vmatpush1.xpose.msra.mxu0 0.0
    %3766 = vmatprep.subr.mxu0 0.0
    %3767 = vmatpush1.xpose.msra.mxu0 0.0
    %3768 = vmatprep.subr.mxu0 0.0
    %3769 = vmatpush1.xpose.msra.mxu0 0.0
    %3770 = vmatprep.subr.mxu0 0.0
    %3771 = vmatpush1.xpose.msra.mxu0 0.0
    %3772 = vmatprep.subr.mxu0 0.0
    %3773 = vmatpush1.xpose.msra.mxu0 0.0
    %3774 = vmatprep.subr.mxu0 0.0
    %3775 = vmatpush1.xpose.msra.mxu0 0.0
    %3776 = vmatprep.subr.mxu0 0.0
    %3777 = vmatpush1.xpose.msra.mxu0 0.0
    %3778 = vmatprep.subr.mxu0 0.0
    %3779 = vmatpush1.xpose.msra.mxu0 0.0
    %3780 = vmatprep.subr.mxu0 0.0
    %3781 = vmatpush1.xpose.msra.mxu0 0.0
    %3782 = vmatprep.subr.mxu0 0.0
    %3783 = vmatpush1.xpose.msra.mxu0 0.0
    %3784 = vmatprep.subr.mxu0 0.0
    %3785 = vmatpush1.xpose.msra.mxu0 0.0
    %3786 = vmatprep.subr.mxu0 0.0
    %3787 = vmatpush1.xpose.msra.mxu0 0.0
    %3788 = vmatprep.subr.mxu0 0.0
    %3789 = vmatpush1.xpose.msra.mxu0 0.0
    %3790 = vmatprep.subr.mxu0 0.0
    %3791 = vmatpush1.xpose.msra.mxu0 0.0
    %3792 = vmatprep.subr.mxu0 0.0
    %3793 = vmatpush1.xpose.msra.mxu0 0.0
    %3794 = vmatprep.subr.mxu0 0.0
    %3795 = vmatpush1.xpose.msra.mxu0 0.0
    %3796 = vmatprep.subr.mxu0 0.0
    %3797 = vmatpush1.xpose.msra.mxu0 0.0
    %3798 = vmatprep.subr.mxu0 0.0
    %3799 = vmatpush1.xpose.msra.mxu0 0.0
    %3800 = vmatprep.subr.mxu0 0.0
    %3801 = vmatpush1.xpose.msra.mxu0 0.0
    %3802 = vmatprep.subr.mxu0 0.0
    %3803 = vmatpush1.xpose.msra.mxu0 0.0
    %3804 = vmatprep.subr.mxu0 0.0
    %3805 = vmatpush1.xpose.msra.mxu0 0.0
    %3806 = vmatprep.subr.mxu0 0.0
    %3807 = vmatpush1.xpose.msra.mxu0 0.0
    %3808 = vmatprep.subr.mxu0 0.0
    %3809 = vmatpush1.xpose.msra.mxu0 0.0
    %3810 = vmatprep.subr.mxu0 0.0
    %3811 = vmatpush1.xpose.msra.mxu0 0.0
    %3812 = vmatprep.subr.mxu0 0.0
    %3813 = vmatpush1.xpose.msra.mxu0 0.0
    %3814 = vmatprep.subr.mxu0 0.0
    %3815 = vmatpush1.xpose.msra.mxu0 0.0
    %3816 = vmatprep.subr.mxu0 0.0
    %3817 = vmatpush1.xpose.msra.mxu0 0.0
    %3818 = vmatprep.mubr.f32.mxu0 0.0
    %v3819 = vand.u32 %v3325, 4294901760
    %3820 = vmatmul.mubr.f32.gmra.mrb[0].mxu0 %v3819
    %v3821 = vpop.f32.mrb[0].mxu0
    %v3822 = vadd.f32 %v3743, %v3821
    %v3823 = vpop.f32.mrb[0].mxu0
    %3824 = vmatprep.mubr.f32.mxu0 0.0
    %v3825 = vand.u32 %v3327, 4294901760
    %3826 = vmatmul.mubr.f32.gmra.mrb[0].mxu0 %v3825
    %v3827 = vpop.f32.mrb[0].mxu0
    %v3828 = vadd.f32 %v3749, %v3827
    %v3829 = vpop.f32.mrb[0].mxu0
    %3830 = vdwg.mxu0
    %v3831 = vsel %vm1728, %v3822, -inf
    %3832 = vmax.xlane.f32.xlu0 %v3831
    %v3833 = vpop.xlane.xlu0 %3832
    %v3834 = vsel %vm1728, %v3828, -inf
    %3835 = vmax.xlane.f32.xlu0 %v3834
    %v3836 = vpop.xlane.xlu0 %3835
    %v3837 = vsub.f32 %v3822, %v3833
    %v3838 = vsub.f32 %v3828, %v3836
    %v3839 = vmul.f32 %v3837, 1.442695
    %v3840 = vpow.pop %v3839
    %v3841 = vmul.f32 %v3838, 1.442695
    %v3842 = vpow.pop %v3841
    %v3843 = vsel %vm1728, %v3840, 0.0
    %3844 = vadd.xlane.f32.xlu0 %v3843
    %v3845 = vpop.xlane.xlu0 %3844
    %v3846 = vsel %vm1728, %v3842, 0.0
    %3847 = vadd.xlane.f32.xlu0 %v3846
    %v3848 = vpop.xlane.xlu0 %3847
    %v3849 = vrcp.pop %v3845
    %v3850 = vmul.f32 %v3840, %v3849
    %v3851 = vrcp.pop %v3848
    %v3852 = vmul.f32 %v3842, %v3851
    %3853 = vrot.lane.b32.xlu0 %v133, 112
    %v3854 = vpop.permute.xlu0 %3853
    %3855 = vrot.lane.b32.xlu0 %v134, 112
    %v3856 = vpop.permute.xlu0 %3855
    %v3860 = vsel %vm1728, %v3850, 0
    %v3863 = vsel %vm1728, %v3852, 0
    %3865 = vmatprep.subr.mxu0 0.0
    %v3866 = vand.u32 %v3854, 4294901760
    %3867 = vmatpush1.msra.mxu0 %v3866
    %3868 = vmatprep.subr.mxu0 0.0
    %v3869 = vand.u32 %v3856, 4294901760
    %3870 = vmatpush1.msra.mxu0 %v3869
    %3871 = vmatprep.subr.mxu0 0.0
    %3872 = vmatpush1.msra.mxu0 0.0
    %3873 = vmatprep.subr.mxu0 0.0
    %3874 = vmatpush1.msra.mxu0 0.0
    %3875 = vmatprep.subr.mxu0 0.0
    %3876 = vmatpush1.msra.mxu0 0.0
    %3877 = vmatprep.subr.mxu0 0.0
    %3878 = vmatpush1.msra.mxu0 0.0
    %3879 = vmatprep.subr.mxu0 0.0
    %3880 = vmatpush1.msra.mxu0 0.0
    %3881 = vmatprep.subr.mxu0 0.0
    %3882 = vmatpush1.msra.mxu0 0.0
    %3883 = vmatprep.subr.mxu0 0.0
    %3884 = vmatpush1.msra.mxu0 0.0
    %3885 = vmatprep.subr.mxu0 0.0
    %3886 = vmatpush1.msra.mxu0 0.0
    %3887 = vmatprep.subr.mxu0 0.0
    %3888 = vmatpush1.msra.mxu0 0.0
    %3889 = vmatprep.subr.mxu0 0.0
    %3890 = vmatpush1.msra.mxu0 0.0
    %3891 = vmatprep.subr.mxu0 0.0
    %3892 = vmatpush1.msra.mxu0 0.0
    %3893 = vmatprep.subr.mxu0 0.0
    %3894 = vmatpush1.msra.mxu0 0.0
    %3895 = vmatprep.subr.mxu0 0.0
    %3896 = vmatpush1.msra.mxu0 0.0
    %3897 = vmatprep.subr.mxu0 0.0
    %3898 = vmatpush1.msra.mxu0 0.0
    %3899 = vmatprep.subr.mxu0 0.0
    %3900 = vmatpush1.msra.mxu0 0.0
    %3901 = vmatprep.subr.mxu0 0.0
    %3902 = vmatpush1.msra.mxu0 0.0
    %3903 = vmatprep.subr.mxu0 0.0
    %3904 = vmatpush1.msra.mxu0 0.0
    %3905 = vmatprep.subr.mxu0 0.0
    %3906 = vmatpush1.msra.mxu0 0.0
    %3907 = vmatprep.subr.mxu0 0.0
    %3908 = vmatpush1.msra.mxu0 0.0
    %3909 = vmatprep.subr.mxu0 0.0
    %3910 = vmatpush1.msra.mxu0 0.0
    %3911 = vmatprep.subr.mxu0 0.0
    %3912 = vmatpush1.msra.mxu0 0.0
    %3913 = vmatprep.subr.mxu0 0.0
    %3914 = vmatpush1.msra.mxu0 0.0
    %3915 = vmatprep.subr.mxu0 0.0
    %3916 = vmatpush1.msra.mxu0 0.0
    %3917 = vmatprep.subr.mxu0 0.0
    %3918 = vmatpush1.msra.mxu0 0.0
    %3919 = vmatprep.subr.mxu0 0.0
    %3920 = vmatpush1.msra.mxu0 0.0
    %3921 = vmatprep.subr.mxu0 0.0
    %3922 = vmatpush1.msra.mxu0 0.0
    %3923 = vmatprep.subr.mxu0 0.0
    %3924 = vmatpush1.msra.mxu0 0.0
    %3925 = vmatprep.subr.mxu0 0.0
    %3926 = vmatpush1.msra.mxu0 0.0
    %3927 = vmatprep.subr.mxu0 0.0
    %3928 = vmatpush1.msra.mxu0 0.0
    %3929 = vmatprep.subr.mxu0 0.0
    %3930 = vmatpush1.msra.mxu0 0.0
    %3931 = vmatprep.mubr.f32.mxu0 0.0
    %v3932 = vand.u32 %v3860, 4294901760
    %v3933 = vsub.f32 %v3860, %v3932
    %v3934 = vand.u32 %v3933, 4294901760
    %v3935 = vsub.f32 %v3933, %v3934
    %v3936 = vand.u32 %v3935, 4294901760
    %3937 = vmatmul.mubr.f32.gmra.mrb[0].mxu0 %v3936
    %v3938 = vpop.f32.mrb[0].mxu0
    %v3939 = vadd.f32 0.0, %v3938
    %v3940 = vpop.f32.mrb[0].mxu0
    %3941 = vmatprep.mubr.f32.mxu0 0.0
    %v3942 = vand.u32 %v3863, 4294901760
    %v3943 = vsub.f32 %v3863, %v3942
    %v3944 = vand.u32 %v3943, 4294901760
    %v3945 = vsub.f32 %v3943, %v3944
    %v3946 = vand.u32 %v3945, 4294901760
    %3947 = vmatmul.mubr.f32.gmra.mrb[0].mxu0 %v3946
    %v3948 = vpop.f32.mrb[0].mxu0
    %v3949 = vadd.f32 0.0, %v3948
    %v3950 = vpop.f32.mrb[0].mxu0
    %3951 = vdwg.mxu0
    %3952 = vmatprep.subr.mxu0 0.0
    %v3953 = vand.u32 %v3854, 4294901760
    %v3954 = vsub.f32 %v3854, %v3953
    %v3955 = vand.u32 %v3954, 4294901760
    %v3956 = vsub.f32 %v3954, %v3955
    %v3957 = vand.u32 %v3956, 4294901760
    %3958 = vmatpush1.msra.mxu0 %v3957
    %3959 = vmatprep.subr.mxu0 0.0
    %v3960 = vand.u32 %v3856, 4294901760
    %v3961 = vsub.f32 %v3856, %v3960
    %v3962 = vand.u32 %v3961, 4294901760
    %v3963 = vsub.f32 %v3961, %v3962
    %v3964 = vand.u32 %v3963, 4294901760
    %3965 = vmatpush1.msra.mxu0 %v3964
    %3966 = vmatprep.subr.mxu0 0.0
    %3967 = vmatpush1.msra.mxu0 0.0
    %3968 = vmatprep.subr.mxu0 0.0
    %3969 = vmatpush1.msra.mxu0 0.0
    %3970 = vmatprep.subr.mxu0 0.0
    %3971 = vmatpush1.msra.mxu0 0.0
    %3972 = vmatprep.subr.mxu0 0.0
    %3973 = vmatpush1.msra.mxu0 0.0
    %3974 = vmatprep.subr.mxu0 0.0
    %3975 = vmatpush1.msra.mxu0 0.0
    %3976 = vmatprep.subr.mxu0 0.0
    %3977 = vmatpush1.msra.mxu0 0.0
    %3978 = vmatprep.subr.mxu0 0.0
    %3979 = vmatpush1.msra.mxu0 0.0
    %3980 = vmatprep.subr.mxu0 0.0
    %3981 = vmatpush1.msra.mxu0 0.0
    %3982 = vmatprep.subr.mxu0 0.0
    %3983 = vmatpush1.msra.mxu0 0.0
    %3984 = vmatprep.subr.mxu0 0.0
    %3985 = vmatpush1.msra.mxu0 0.0
    %3986 = vmatprep.subr.mxu0 0.0
    %3987 = vmatpush1.msra.mxu0 0.0
    %3988 = vmatprep.subr.mxu0 0.0
    %3989 = vmatpush1.msra.mxu0 0.0
    %3990 = vmatprep.subr.mxu0 0.0
    %3991 = vmatpush1.msra.mxu0 0.0
    %3992 = vmatprep.subr.mxu0 0.0
    %3993 = vmatpush1.msra.mxu0 0.0
    %3994 = vmatprep.subr.mxu0 0.0
    %3995 = vmatpush1.msra.mxu0 0.0
    %3996 = vmatprep.subr.mxu0 0.0
    %3997 = vmatpush1.msra.mxu0 0.0
    %3998 = vmatprep.subr.mxu0 0.0
    %3999 = vmatpush1.msra.mxu0 0.0
    %4000 = vmatprep.subr.mxu0 0.0
    %4001 = vmatpush1.msra.mxu0 0.0
    %4002 = vmatprep.subr.mxu0 0.0
    %4003 = vmatpush1.msra.mxu0 0.0
    %4004 = vmatprep.subr.mxu0 0.0
    %4005 = vmatpush1.msra.mxu0 0.0
    %4006 = vmatprep.subr.mxu0 0.0
    %4007 = vmatpush1.msra.mxu0 0.0
    %4008 = vmatprep.subr.mxu0 0.0
    %4009 = vmatpush1.msra.mxu0 0.0
    %4010 = vmatprep.subr.mxu0 0.0
    %4011 = vmatpush1.msra.mxu0 0.0
    %4012 = vmatprep.subr.mxu0 0.0
    %4013 = vmatpush1.msra.mxu0 0.0
    %4014 = vmatprep.subr.mxu0 0.0
    %4015 = vmatpush1.msra.mxu0 0.0
    %4016 = vmatprep.subr.mxu0 0.0
    %4017 = vmatpush1.msra.mxu0 0.0
    %4018 = vmatprep.subr.mxu0 0.0
    %4019 = vmatpush1.msra.mxu0 0.0
    %4020 = vmatprep.subr.mxu0 0.0
    %4021 = vmatpush1.msra.mxu0 0.0
    %4022 = vmatprep.subr.mxu0 0.0
    %4023 = vmatpush1.msra.mxu0 0.0
    %4024 = vmatprep.subr.mxu0 0.0
    %4025 = vmatpush1.msra.mxu0 0.0
    %4026 = vmatprep.mubr.f32.mxu0 0.0
    %v4027 = vand.u32 %v3860, 4294901760
    %4028 = vmatmul.mubr.f32.gmra.mrb[0].mxu0 %v4027
    %v4029 = vpop.f32.mrb[0].mxu0
    %v4030 = vadd.f32 %v3939, %v4029
    %v4031 = vpop.f32.mrb[0].mxu0
    %4032 = vmatprep.mubr.f32.mxu0 0.0
    %v4033 = vand.u32 %v3863, 4294901760
    %4034 = vmatmul.mubr.f32.gmra.mrb[0].mxu0 %v4033
    %v4035 = vpop.f32.mrb[0].mxu0
    %v4036 = vadd.f32 %v3949, %v4035
    %v4037 = vpop.f32.mrb[0].mxu0
    %4038 = vdwg.mxu0
    %4039 = vmatprep.subr.mxu0 0.0
    %v4040 = vand.u32 %v3854, 4294901760
    %v4041 = vsub.f32 %v3854, %v4040
    %4042 = vmatpush1.msra.mxu0 %v4041
    %4043 = vmatprep.subr.mxu0 0.0
    %v4044 = vand.u32 %v3856, 4294901760
    %v4045 = vsub.f32 %v3856, %v4044
    %4046 = vmatpush1.msra.mxu0 %v4045
    %4047 = vmatprep.subr.mxu0 0.0
    %4048 = vmatpush1.msra.mxu0 0.0
    %4049 = vmatprep.subr.mxu0 0.0
    %4050 = vmatpush1.msra.mxu0 0.0
    %4051 = vmatprep.subr.mxu0 0.0
    %4052 = vmatpush1.msra.mxu0 0.0
    %4053 = vmatprep.subr.mxu0 0.0
    %4054 = vmatpush1.msra.mxu0 0.0
    %4055 = vmatprep.subr.mxu0 0.0
    %4056 = vmatpush1.msra.mxu0 0.0
    %4057 = vmatprep.subr.mxu0 0.0
    %4058 = vmatpush1.msra.mxu0 0.0
    %4059 = vmatprep.subr.mxu0 0.0
    %4060 = vmatpush1.msra.mxu0 0.0
    %4061 = vmatprep.subr.mxu0 0.0
    %4062 = vmatpush1.msra.mxu0 0.0
    %4063 = vmatprep.subr.mxu0 0.0
    %4064 = vmatpush1.msra.mxu0 0.0
    %4065 = vmatprep.subr.mxu0 0.0
    %4066 = vmatpush1.msra.mxu0 0.0
    %4067 = vmatprep.subr.mxu0 0.0
    %4068 = vmatpush1.msra.mxu0 0.0
    %4069 = vmatprep.subr.mxu0 0.0
    %4070 = vmatpush1.msra.mxu0 0.0
    %4071 = vmatprep.subr.mxu0 0.0
    %4072 = vmatpush1.msra.mxu0 0.0
    %4073 = vmatprep.subr.mxu0 0.0
    %4074 = vmatpush1.msra.mxu0 0.0
    %4075 = vmatprep.subr.mxu0 0.0
    %4076 = vmatpush1.msra.mxu0 0.0
    %4077 = vmatprep.subr.mxu0 0.0
    %4078 = vmatpush1.msra.mxu0 0.0
    %4079 = vmatprep.subr.mxu0 0.0
    %4080 = vmatpush1.msra.mxu0 0.0
    %4081 = vmatprep.subr.mxu0 0.0
    %4082 = vmatpush1.msra.mxu0 0.0
    %4083 = vmatprep.subr.mxu0 0.0
    %4084 = vmatpush1.msra.mxu0 0.0
    %4085 = vmatprep.subr.mxu0 0.0
    %4086 = vmatpush1.msra.mxu0 0.0
    %4087 = vmatprep.subr.mxu0 0.0
    %4088 = vmatpush1.msra.mxu0 0.0
    %4089 = vmatprep.subr.mxu0 0.0
    %4090 = vmatpush1.msra.mxu0 0.0
    %4091 = vmatprep.subr.mxu0 0.0
    %4092 = vmatpush1.msra.mxu0 0.0
    %4093 = vmatprep.subr.mxu0 0.0
    %4094 = vmatpush1.msra.mxu0 0.0
    %4095 = vmatprep.subr.mxu0 0.0
    %4096 = vmatpush1.msra.mxu0 0.0
    %4097 = vmatprep.subr.mxu0 0.0
    %4098 = vmatpush1.msra.mxu0 0.0
    %4099 = vmatprep.subr.mxu0 0.0
    %4100 = vmatpush1.msra.mxu0 0.0
    %4101 = vmatprep.subr.mxu0 0.0
    %4102 = vmatpush1.msra.mxu0 0.0
    %4103 = vmatprep.subr.mxu0 0.0
    %4104 = vmatpush1.msra.mxu0 0.0
    %4105 = vmatprep.subr.mxu0 0.0
    %4106 = vmatpush1.msra.mxu0 0.0
    %4107 = vmatprep.mubr.f32.mxu0 0.0
    %v4108 = vand.u32 %v3860, 4294901760
    %v4109 = vsub.f32 %v3860, %v4108
    %4110 = vmatmul.mubr.f32.gmra.mrb[0].mxu0 %v4109
    %v4111 = vpop.f32.mrb[0].mxu0
    %v4112 = vadd.f32 %v4030, %v4111
    %v4113 = vpop.f32.mrb[0].mxu0
    %4114 = vmatprep.mubr.f32.mxu0 0.0
    %v4115 = vand.u32 %v3863, 4294901760
    %v4116 = vsub.f32 %v3863, %v4115
    %4117 = vmatmul.mubr.f32.gmra.mrb[0].mxu0 %v4116
    %v4118 = vpop.f32.mrb[0].mxu0
    %v4119 = vadd.f32 %v4036, %v4118
    %v4120 = vpop.f32.mrb[0].mxu0
    %4121 = vdwg.mxu0
    %4122 = vmatprep.subr.mxu0 0.0
    %v4123 = vand.u32 %v3854, 4294901760
    %4124 = vmatpush1.msra.mxu0 %v4123
    %4125 = vmatprep.subr.mxu0 0.0
    %v4126 = vand.u32 %v3856, 4294901760
    %4127 = vmatpush1.msra.mxu0 %v4126
    %4128 = vmatprep.subr.mxu0 0.0
    %4129 = vmatpush1.msra.mxu0 0.0
    %4130 = vmatprep.subr.mxu0 0.0
    %4131 = vmatpush1.msra.mxu0 0.0
    %4132 = vmatprep.subr.mxu0 0.0
    %4133 = vmatpush1.msra.mxu0 0.0
    %4134 = vmatprep.subr.mxu0 0.0
    %4135 = vmatpush1.msra.mxu0 0.0
    %4136 = vmatprep.subr.mxu0 0.0
    %4137 = vmatpush1.msra.mxu0 0.0
    %4138 = vmatprep.subr.mxu0 0.0
    %4139 = vmatpush1.msra.mxu0 0.0
    %4140 = vmatprep.subr.mxu0 0.0
    %4141 = vmatpush1.msra.mxu0 0.0
    %4142 = vmatprep.subr.mxu0 0.0
    %4143 = vmatpush1.msra.mxu0 0.0
    %4144 = vmatprep.subr.mxu0 0.0
    %4145 = vmatpush1.msra.mxu0 0.0
    %4146 = vmatprep.subr.mxu0 0.0
    %4147 = vmatpush1.msra.mxu0 0.0
    %4148 = vmatprep.subr.mxu0 0.0
    %4149 = vmatpush1.msra.mxu0 0.0
    %4150 = vmatprep.subr.mxu0 0.0
    %4151 = vmatpush1.msra.mxu0 0.0
    %4152 = vmatprep.subr.mxu0 0.0
    %4153 = vmatpush1.msra.mxu0 0.0
    %4154 = vmatprep.subr.mxu0 0.0
    %4155 = vmatpush1.msra.mxu0 0.0
    %4156 = vmatprep.subr.mxu0 0.0
    %4157 = vmatpush1.msra.mxu0 0.0
    %4158 = vmatprep.subr.mxu0 0.0
    %4159 = vmatpush1.msra.mxu0 0.0
    %4160 = vmatprep.subr.mxu0 0.0
    %4161 = vmatpush1.msra.mxu0 0.0
    %4162 = vmatprep.subr.mxu0 0.0
    %4163 = vmatpush1.msra.mxu0 0.0
    %4164 = vmatprep.subr.mxu0 0.0
    %4165 = vmatpush1.msra.mxu0 0.0
    %4166 = vmatprep.subr.mxu0 0.0
    %4167 = vmatpush1.msra.mxu0 0.0
    %4168 = vmatprep.subr.mxu0 0.0
    %4169 = vmatpush1.msra.mxu0 0.0
    %4170 = vmatprep.subr.mxu0 0.0
    %4171 = vmatpush1.msra.mxu0 0.0
    %4172 = vmatprep.subr.mxu0 0.0
    %4173 = vmatpush1.msra.mxu0 0.0
    %4174 = vmatprep.subr.mxu0 0.0
    %4175 = vmatpush1.msra.mxu0 0.0
    %4176 = vmatprep.subr.mxu0 0.0
    %4177 = vmatpush1.msra.mxu0 0.0
    %4178 = vmatprep.subr.mxu0 0.0
    %4179 = vmatpush1.msra.mxu0 0.0
    %4180 = vmatprep.subr.mxu0 0.0
    %4181 = vmatpush1.msra.mxu0 0.0
    %4182 = vmatprep.subr.mxu0 0.0
    %4183 = vmatpush1.msra.mxu0 0.0
    %4184 = vmatprep.subr.mxu0 0.0
    %4185 = vmatpush1.msra.mxu0 0.0
    %4186 = vmatprep.subr.mxu0 0.0
    %4187 = vmatpush1.msra.mxu0 0.0
    %4188 = vmatprep.mubr.f32.mxu0 0.0
    %v4189 = vand.u32 %v3860, 4294901760
    %v4190 = vsub.f32 %v3860, %v4189
    %v4191 = vand.u32 %v4190, 4294901760
    %4192 = vmatmul.mubr.f32.gmra.mrb[0].mxu0 %v4191
    %v4193 = vpop.f32.mrb[0].mxu0
    %v4194 = vadd.f32 %v4112, %v4193
    %v4195 = vpop.f32.mrb[0].mxu0
    %4196 = vmatprep.mubr.f32.mxu0 0.0
    %v4197 = vand.u32 %v3863, 4294901760
    %v4198 = vsub.f32 %v3863, %v4197
    %v4199 = vand.u32 %v4198, 4294901760
    %4200 = vmatmul.mubr.f32.gmra.mrb[0].mxu0 %v4199
    %v4201 = vpop.f32.mrb[0].mxu0
    %v4202 = vadd.f32 %v4119, %v4201
    %v4203 = vpop.f32.mrb[0].mxu0
    %4204 = vdwg.mxu0
    %4205 = vmatprep.subr.mxu0 0.0
    %v4206 = vand.u32 %v3854, 4294901760
    %v4207 = vsub.f32 %v3854, %v4206
    %v4208 = vand.u32 %v4207, 4294901760
    %4209 = vmatpush1.msra.mxu0 %v4208
    %4210 = vmatprep.subr.mxu0 0.0
    %v4211 = vand.u32 %v3856, 4294901760
    %v4212 = vsub.f32 %v3856, %v4211
    %v4213 = vand.u32 %v4212, 4294901760
    %4214 = vmatpush1.msra.mxu0 %v4213
    %4215 = vmatprep.subr.mxu0 0.0
    %4216 = vmatpush1.msra.mxu0 0.0
    %4217 = vmatprep.subr.mxu0 0.0
    %4218 = vmatpush1.msra.mxu0 0.0
    %4219 = vmatprep.subr.mxu0 0.0
    %4220 = vmatpush1.msra.mxu0 0.0
    %4221 = vmatprep.subr.mxu0 0.0
    %4222 = vmatpush1.msra.mxu0 0.0
    %4223 = vmatprep.subr.mxu0 0.0
    %4224 = vmatpush1.msra.mxu0 0.0
    %4225 = vmatprep.subr.mxu0 0.0
    %4226 = vmatpush1.msra.mxu0 0.0
    %4227 = vmatprep.subr.mxu0 0.0
    %4228 = vmatpush1.msra.mxu0 0.0
    %4229 = vmatprep.subr.mxu0 0.0
    %4230 = vmatpush1.msra.mxu0 0.0
    %4231 = vmatprep.subr.mxu0 0.0
    %4232 = vmatpush1.msra.mxu0 0.0
    %4233 = vmatprep.subr.mxu0 0.0
    %4234 = vmatpush1.msra.mxu0 0.0
    %4235 = vmatprep.subr.mxu0 0.0
    %4236 = vmatpush1.msra.mxu0 0.0
    %4237 = vmatprep.subr.mxu0 0.0
    %4238 = vmatpush1.msra.mxu0 0.0
    %4239 = vmatprep.subr.mxu0 0.0
    %4240 = vmatpush1.msra.mxu0 0.0
    %4241 = vmatprep.subr.mxu0 0.0
    %4242 = vmatpush1.msra.mxu0 0.0
    %4243 = vmatprep.subr.mxu0 0.0
    %4244 = vmatpush1.msra.mxu0 0.0
    %4245 = vmatprep.subr.mxu0 0.0
    %4246 = vmatpush1.msra.mxu0 0.0
    %4247 = vmatprep.subr.mxu0 0.0
    %4248 = vmatpush1.msra.mxu0 0.0
    %4249 = vmatprep.subr.mxu0 0.0
    %4250 = vmatpush1.msra.mxu0 0.0
    %4251 = vmatprep.subr.mxu0 0.0
    %4252 = vmatpush1.msra.mxu0 0.0
    %4253 = vmatprep.subr.mxu0 0.0
    %4254 = vmatpush1.msra.mxu0 0.0
    %4255 = vmatprep.subr.mxu0 0.0
    %4256 = vmatpush1.msra.mxu0 0.0
    %4257 = vmatprep.subr.mxu0 0.0
    %4258 = vmatpush1.msra.mxu0 0.0
    %4259 = vmatprep.subr.mxu0 0.0
    %4260 = vmatpush1.msra.mxu0 0.0
    %4261 = vmatprep.subr.mxu0 0.0
    %4262 = vmatpush1.msra.mxu0 0.0
    %4263 = vmatprep.subr.mxu0 0.0
    %4264 = vmatpush1.msra.mxu0 0.0
    %4265 = vmatprep.subr.mxu0 0.0
    %4266 = vmatpush1.msra.mxu0 0.0
    %4267 = vmatprep.subr.mxu0 0.0
    %4268 = vmatpush1.msra.mxu0 0.0
    %4269 = vmatprep.subr.mxu0 0.0
    %4270 = vmatpush1.msra.mxu0 0.0
    %4271 = vmatprep.subr.mxu0 0.0
    %4272 = vmatpush1.msra.mxu0 0.0
    %4273 = vmatprep.subr.mxu0 0.0
    %4274 = vmatpush1.msra.mxu0 0.0
    %4275 = vmatprep.mubr.f32.mxu0 0.0
    %v4276 = vand.u32 %v3860, 4294901760
    %4277 = vmatmul.mubr.f32.gmra.mrb[0].mxu0 %v4276
    %v4278 = vpop.f32.mrb[0].mxu0
    %v4279 = vadd.f32 %v4194, %v4278
    %v4280 = vpop.f32.mrb[0].mxu0
    %4281 = vmatprep.mubr.f32.mxu0 0.0
    %v4282 = vand.u32 %v3863, 4294901760
    %4283 = vmatmul.mubr.f32.gmra.mrb[0].mxu0 %v4282
    %v4284 = vpop.f32.mrb[0].mxu0
    %v4285 = vadd.f32 %v4202, %v4284
    %v4286 = vpop.f32.mrb[0].mxu0
    %4287 = vdwg.mxu0
    %4288 = vmatprep.subr.mxu0 0.0
    %v4289 = vand.u32 %v3854, 4294901760
    %4290 = vmatpush1.msra.mxu0 %v4289
    %4291 = vmatprep.subr.mxu0 0.0
    %v4292 = vand.u32 %v3856, 4294901760
    %4293 = vmatpush1.msra.mxu0 %v4292
    %4294 = vmatprep.subr.mxu0 0.0
    %4295 = vmatpush1.msra.mxu0 0.0
    %4296 = vmatprep.subr.mxu0 0.0
    %4297 = vmatpush1.msra.mxu0 0.0
    %4298 = vmatprep.subr.mxu0 0.0
    %4299 = vmatpush1.msra.mxu0 0.0
    %4300 = vmatprep.subr.mxu0 0.0
    %4301 = vmatpush1.msra.mxu0 0.0
    %4302 = vmatprep.subr.mxu0 0.0
    %4303 = vmatpush1.msra.mxu0 0.0
    %4304 = vmatprep.subr.mxu0 0.0
    %4305 = vmatpush1.msra.mxu0 0.0
    %4306 = vmatprep.subr.mxu0 0.0
    %4307 = vmatpush1.msra.mxu0 0.0
    %4308 = vmatprep.subr.mxu0 0.0
    %4309 = vmatpush1.msra.mxu0 0.0
    %4310 = vmatprep.subr.mxu0 0.0
    %4311 = vmatpush1.msra.mxu0 0.0
    %4312 = vmatprep.subr.mxu0 0.0
    %4313 = vmatpush1.msra.mxu0 0.0
    %4314 = vmatprep.subr.mxu0 0.0
    %4315 = vmatpush1.msra.mxu0 0.0
    %4316 = vmatprep.subr.mxu0 0.0
    %4317 = vmatpush1.msra.mxu0 0.0
    %4318 = vmatprep.subr.mxu0 0.0
    %4319 = vmatpush1.msra.mxu0 0.0
    %4320 = vmatprep.subr.mxu0 0.0
    %4321 = vmatpush1.msra.mxu0 0.0
    %4322 = vmatprep.subr.mxu0 0.0
    %4323 = vmatpush1.msra.mxu0 0.0
    %4324 = vmatprep.subr.mxu0 0.0
    %4325 = vmatpush1.msra.mxu0 0.0
    %4326 = vmatprep.subr.mxu0 0.0
    %4327 = vmatpush1.msra.mxu0 0.0
    %4328 = vmatprep.subr.mxu0 0.0
    %4329 = vmatpush1.msra.mxu0 0.0
    %4330 = vmatprep.subr.mxu0 0.0
    %4331 = vmatpush1.msra.mxu0 0.0
    %4332 = vmatprep.subr.mxu0 0.0
    %4333 = vmatpush1.msra.mxu0 0.0
    %4334 = vmatprep.subr.mxu0 0.0
    %4335 = vmatpush1.msra.mxu0 0.0
    %4336 = vmatprep.subr.mxu0 0.0
    %4337 = vmatpush1.msra.mxu0 0.0
    %4338 = vmatprep.subr.mxu0 0.0
    %4339 = vmatpush1.msra.mxu0 0.0
    %4340 = vmatprep.subr.mxu0 0.0
    %4341 = vmatpush1.msra.mxu0 0.0
    %4342 = vmatprep.subr.mxu0 0.0
    %4343 = vmatpush1.msra.mxu0 0.0
    %4344 = vmatprep.subr.mxu0 0.0
    %4345 = vmatpush1.msra.mxu0 0.0
    %4346 = vmatprep.subr.mxu0 0.0
    %4347 = vmatpush1.msra.mxu0 0.0
    %4348 = vmatprep.subr.mxu0 0.0
    %4349 = vmatpush1.msra.mxu0 0.0
    %4350 = vmatprep.subr.mxu0 0.0
    %4351 = vmatpush1.msra.mxu0 0.0
    %4352 = vmatprep.subr.mxu0 0.0
    %4353 = vmatpush1.msra.mxu0 0.0
    %4354 = vmatprep.mubr.f32.mxu0 0.0
    %v4355 = vand.u32 %v3860, 4294901760
    %4356 = vmatmul.mubr.f32.gmra.mrb[0].mxu0 %v4355
    %v4357 = vpop.f32.mrb[0].mxu0
    %v4358 = vadd.f32 %v4279, %v4357
    %v4359 = vpop.f32.mrb[0].mxu0
    %4360 = vmatprep.mubr.f32.mxu0 0.0
    %v4361 = vand.u32 %v3863, 4294901760
    %4362 = vmatmul.mubr.f32.gmra.mrb[0].mxu0 %v4361
    %v4363 = vpop.f32.mrb[0].mxu0
    %v4364 = vadd.f32 %v4285, %v4363
    %v4365 = vpop.f32.mrb[0].mxu0
    %4366 = vdwg.mxu0
    %4369 = vrot.lane.b32.xlu0 %v4358, 16
    %v4370 = vpop.permute.xlu0 %4369
    %4371 = vrot.lane.b32.xlu0 %v4364, 16
    %v4372 = vpop.permute.xlu0 %4371
    %vm4375 = vcmask 195712
    %4376 = vst.msk [vmem:[#allocation2] sm:$0xff] %vm4375, %v4370
    %4377 = vst.msk [vmem:[#allocation2 + $0x8] sm:$0xff] %vm4375, %v4372
    %4378 = vrot.lane.b32.xlu0 %v1208, 116
    %v4379 = vpop.permute.xlu0 %4378
    %4380 = vrot.lane.b32.xlu0 %v1214, 116
    %v4381 = vpop.permute.xlu0 %4380
    %v4382 = vsel %vm1219, %v4379, 0
    %v4384 = vsel %vm1219, %v4381, 0
    %4386 = vmatprep.subr.mxu0 0.0
    %v4387 = vand.u32 %v4382, 4294901760
    %4388 = vmatpush1.xpose.msra.mxu0 %v4387
    %4389 = vmatprep.subr.mxu0 0.0
    %v4390 = vand.u32 %v4384, 4294901760
    %4391 = vmatpush1.xpose.msra.mxu0 %v4390
    %4392 = vmatprep.subr.mxu0 0.0
    %4393 = vmatpush1.xpose.msra.mxu0 0.0
    %4394 = vmatprep.subr.mxu0 0.0
    %4395 = vmatpush1.xpose.msra.mxu0 0.0
    %4396 = vmatprep.subr.mxu0 0.0
    %4397 = vmatpush1.xpose.msra.mxu0 0.0
    %4398 = vmatprep.subr.mxu0 0.0
    %4399 = vmatpush1.xpose.msra.mxu0 0.0
    %4400 = vmatprep.subr.mxu0 0.0
    %4401 = vmatpush1.xpose.msra.mxu0 0.0
    %4402 = vmatprep.subr.mxu0 0.0
    %4403 = vmatpush1.xpose.msra.mxu0 0.0
    %4404 = vmatprep.subr.mxu0 0.0
    %4405 = vmatpush1.xpose.msra.mxu0 0.0
    %4406 = vmatprep.subr.mxu0 0.0
    %4407 = vmatpush1.xpose.msra.mxu0 0.0
    %4408 = vmatprep.subr.mxu0 0.0
    %4409 = vmatpush1.xpose.msra.mxu0 0.0
    %4410 = vmatprep.subr.mxu0 0.0
    %4411 = vmatpush1.xpose.msra.mxu0 0.0
    %4412 = vmatprep.subr.mxu0 0.0
    %4413 = vmatpush1.xpose.msra.mxu0 0.0
    %4414 = vmatprep.subr.mxu0 0.0
    %4415 = vmatpush1.xpose.msra.mxu0 0.0
    %4416 = vmatprep.subr.mxu0 0.0
    %4417 = vmatpush1.xpose.msra.mxu0 0.0
    %4418 = vmatprep.subr.mxu0 0.0
    %4419 = vmatpush1.xpose.msra.mxu0 0.0
    %4420 = vmatprep.subr.mxu0 0.0
    %4421 = vmatpush1.xpose.msra.mxu0 0.0
    %4422 = vmatprep.subr.mxu0 0.0
    %4423 = vmatpush1.xpose.msra.mxu0 0.0
    %4424 = vmatprep.subr.mxu0 0.0
    %4425 = vmatpush1.xpose.msra.mxu0 0.0
    %4426 = vmatprep.subr.mxu0 0.0
    %4427 = vmatpush1.xpose.msra.mxu0 0.0
    %4428 = vmatprep.subr.mxu0 0.0
    %4429 = vmatpush1.xpose.msra.mxu0 0.0
    %4430 = vmatprep.subr.mxu0 0.0
    %4431 = vmatpush1.xpose.msra.mxu0 0.0
    %4432 = vmatprep.subr.mxu0 0.0
    %4433 = vmatpush1.xpose.msra.mxu0 0.0
    %4434 = vmatprep.subr.mxu0 0.0
    %4435 = vmatpush1.xpose.msra.mxu0 0.0
    %4436 = vmatprep.subr.mxu0 0.0
    %4437 = vmatpush1.xpose.msra.mxu0 0.0
    %4438 = vmatprep.subr.mxu0 0.0
    %4439 = vmatpush1.xpose.msra.mxu0 0.0
    %4440 = vmatprep.subr.mxu0 0.0
    %4441 = vmatpush1.xpose.msra.mxu0 0.0
    %4442 = vmatprep.subr.mxu0 0.0
    %4443 = vmatpush1.xpose.msra.mxu0 0.0
    %4444 = vmatprep.subr.mxu0 0.0
    %4445 = vmatpush1.xpose.msra.mxu0 0.0
    %4446 = vmatprep.subr.mxu0 0.0
    %4447 = vmatpush1.xpose.msra.mxu0 0.0
    %4448 = vmatprep.subr.mxu0 0.0
    %4449 = vmatpush1.xpose.msra.mxu0 0.0
    %4450 = vmatprep.subr.mxu0 0.0
    %4451 = vmatpush1.xpose.msra.mxu0 0.0
    %4452 = vmatprep.mubr.f32.mxu0 0.0
    %v4453 = vand.u32 %v4382, 4294901760
    %v4454 = vsub.f32 %v4382, %v4453
    %v4455 = vand.u32 %v4454, 4294901760
    %v4456 = vsub.f32 %v4454, %v4455
    %v4457 = vand.u32 %v4456, 4294901760
    %4458 = vmatmul.mubr.f32.gmra.mrb[0].mxu0 %v4457
    %v4459 = vpop.f32.mrb[0].mxu0
    %v4460 = vadd.f32 %v1217, %v4459
    %v4461 = vpop.f32.mrb[0].mxu0
    %4462 = vmatprep.mubr.f32.mxu0 0.0
    %v4463 = vand.u32 %v4384, 4294901760
    %v4464 = vsub.f32 %v4384, %v4463
    %v4465 = vand.u32 %v4464, 4294901760
    %v4466 = vsub.f32 %v4464, %v4465
    %v4467 = vand.u32 %v4466, 4294901760
    %4468 = vmatmul.mubr.f32.gmra.mrb[0].mxu0 %v4467
    %v4469 = vpop.f32.mrb[0].mxu0
    %v4470 = vadd.f32 %v1218, %v4469
    %v4471 = vpop.f32.mrb[0].mxu0
    %4472 = vdwg.mxu0
    %4473 = vmatprep.subr.mxu0 0.0
    %v4474 = vand.u32 %v4382, 4294901760
    %v4475 = vsub.f32 %v4382, %v4474
    %v4476 = vand.u32 %v4475, 4294901760
    %v4477 = vsub.f32 %v4475, %v4476
    %v4478 = vand.u32 %v4477, 4294901760
    %4479 = vmatpush1.xpose.msra.mxu0 %v4478
    %4480 = vmatprep.subr.mxu0 0.0
    %v4481 = vand.u32 %v4384, 4294901760
    %v4482 = vsub.f32 %v4384, %v4481
    %v4483 = vand.u32 %v4482, 4294901760
    %v4484 = vsub.f32 %v4482, %v4483
    %v4485 = vand.u32 %v4484, 4294901760
    %4486 = vmatpush1.xpose.msra.mxu0 %v4485
    %4487 = vmatprep.subr.mxu0 0.0
    %4488 = vmatpush1.xpose.msra.mxu0 0.0
    %4489 = vmatprep.subr.mxu0 0.0
    %4490 = vmatpush1.xpose.msra.mxu0 0.0
    %4491 = vmatprep.subr.mxu0 0.0
    %4492 = vmatpush1.xpose.msra.mxu0 0.0
    %4493 = vmatprep.subr.mxu0 0.0
    %4494 = vmatpush1.xpose.msra.mxu0 0.0
    %4495 = vmatprep.subr.mxu0 0.0
    %4496 = vmatpush1.xpose.msra.mxu0 0.0
    %4497 = vmatprep.subr.mxu0 0.0
    %4498 = vmatpush1.xpose.msra.mxu0 0.0
    %4499 = vmatprep.subr.mxu0 0.0
    %4500 = vmatpush1.xpose.msra.mxu0 0.0
    %4501 = vmatprep.subr.mxu0 0.0
    %4502 = vmatpush1.xpose.msra.mxu0 0.0
    %4503 = vmatprep.subr.mxu0 0.0
    %4504 = vmatpush1.xpose.msra.mxu0 0.0
    %4505 = vmatprep.subr.mxu0 0.0
    %4506 = vmatpush1.xpose.msra.mxu0 0.0
    %4507 = vmatprep.subr.mxu0 0.0
    %4508 = vmatpush1.xpose.msra.mxu0 0.0
    %4509 = vmatprep.subr.mxu0 0.0
    %4510 = vmatpush1.xpose.msra.mxu0 0.0
    %4511 = vmatprep.subr.mxu0 0.0
    %4512 = vmatpush1.xpose.msra.mxu0 0.0
    %4513 = vmatprep.subr.mxu0 0.0
    %4514 = vmatpush1.xpose.msra.mxu0 0.0
    %4515 = vmatprep.subr.mxu0 0.0
    %4516 = vmatpush1.xpose.msra.mxu0 0.0
    %4517 = vmatprep.subr.mxu0 0.0
    %4518 = vmatpush1.xpose.msra.mxu0 0.0
    %4519 = vmatprep.subr.mxu0 0.0
    %4520 = vmatpush1.xpose.msra.mxu0 0.0
    %4521 = vmatprep.subr.mxu0 0.0
    %4522 = vmatpush1.xpose.msra.mxu0 0.0
    %4523 = vmatprep.subr.mxu0 0.0
    %4524 = vmatpush1.xpose.msra.mxu0 0.0
    %4525 = vmatprep.subr.mxu0 0.0
    %4526 = vmatpush1.xpose.msra.mxu0 0.0
    %4527 = vmatprep.subr.mxu0 0.0
    %4528 = vmatpush1.xpose.msra.mxu0 0.0
    %4529 = vmatprep.subr.mxu0 0.0
    %4530 = vmatpush1.xpose.msra.mxu0 0.0
    %4531 = vmatprep.subr.mxu0 0.0
    %4532 = vmatpush1.xpose.msra.mxu0 0.0
    %4533 = vmatprep.subr.mxu0 0.0
    %4534 = vmatpush1.xpose.msra.mxu0 0.0
    %4535 = vmatprep.subr.mxu0 0.0
    %4536 = vmatpush1.xpose.msra.mxu0 0.0
    %4537 = vmatprep.subr.mxu0 0.0
    %4538 = vmatpush1.xpose.msra.mxu0 0.0
    %4539 = vmatprep.subr.mxu0 0.0
    %4540 = vmatpush1.xpose.msra.mxu0 0.0
    %4541 = vmatprep.subr.mxu0 0.0
    %4542 = vmatpush1.xpose.msra.mxu0 0.0
    %4543 = vmatprep.subr.mxu0 0.0
    %4544 = vmatpush1.xpose.msra.mxu0 0.0
    %4545 = vmatprep.subr.mxu0 0.0
    %4546 = vmatpush1.xpose.msra.mxu0 0.0
    %4547 = vmatprep.mubr.f32.mxu0 0.0
    %v4548 = vand.u32 %v4382, 4294901760
    %4549 = vmatmul.mubr.f32.gmra.mrb[0].mxu0 %v4548
    %v4550 = vpop.f32.mrb[0].mxu0
    %v4551 = vadd.f32 %v4460, %v4550
    %v4552 = vpop.f32.mrb[0].mxu0
    %4553 = vmatprep.mubr.f32.mxu0 0.0
    %v4554 = vand.u32 %v4384, 4294901760
    %4555 = vmatmul.mubr.f32.gmra.mrb[0].mxu0 %v4554
    %v4556 = vpop.f32.mrb[0].mxu0
    %v4557 = vadd.f32 %v4470, %v4556
    %v4558 = vpop.f32.mrb[0].mxu0
    %4559 = vdwg.mxu0
    %4560 = vmatprep.subr.mxu0 0.0
    %v4561 = vand.u32 %v4382, 4294901760
    %v4562 = vsub.f32 %v4382, %v4561
    %4563 = vmatpush1.xpose.msra.mxu0 %v4562
    %4564 = vmatprep.subr.mxu0 0.0
    %v4565 = vand.u32 %v4384, 4294901760
    %v4566 = vsub.f32 %v4384, %v4565
    %4567 = vmatpush1.xpose.msra.mxu0 %v4566
    %4568 = vmatprep.subr.mxu0 0.0
    %4569 = vmatpush1.xpose.msra.mxu0 0.0
    %4570 = vmatprep.subr.mxu0 0.0
    %4571 = vmatpush1.xpose.msra.mxu0 0.0
    %4572 = vmatprep.subr.mxu0 0.0
    %4573 = vmatpush1.xpose.msra.mxu0 0.0
    %4574 = vmatprep.subr.mxu0 0.0
    %4575 = vmatpush1.xpose.msra.mxu0 0.0
    %4576 = vmatprep.subr.mxu0 0.0
    %4577 = vmatpush1.xpose.msra.mxu0 0.0
    %4578 = vmatprep.subr.mxu0 0.0
    %4579 = vmatpush1.xpose.msra.mxu0 0.0
    %4580 = vmatprep.subr.mxu0 0.0
    %4581 = vmatpush1.xpose.msra.mxu0 0.0
    %4582 = vmatprep.subr.mxu0 0.0
    %4583 = vmatpush1.xpose.msra.mxu0 0.0
    %4584 = vmatprep.subr.mxu0 0.0
    %4585 = vmatpush1.xpose.msra.mxu0 0.0
    %4586 = vmatprep.subr.mxu0 0.0
    %4587 = vmatpush1.xpose.msra.mxu0 0.0
    %4588 = vmatprep.subr.mxu0 0.0
    %4589 = vmatpush1.xpose.msra.mxu0 0.0
    %4590 = vmatprep.subr.mxu0 0.0
    %4591 = vmatpush1.xpose.msra.mxu0 0.0
    %4592 = vmatprep.subr.mxu0 0.0
    %4593 = vmatpush1.xpose.msra.mxu0 0.0
    %4594 = vmatprep.subr.mxu0 0.0
    %4595 = vmatpush1.xpose.msra.mxu0 0.0
    %4596 = vmatprep.subr.mxu0 0.0
    %4597 = vmatpush1.xpose.msra.mxu0 0.0
    %4598 = vmatprep.subr.mxu0 0.0
    %4599 = vmatpush1.xpose.msra.mxu0 0.0
    %4600 = vmatprep.subr.mxu0 0.0
    %4601 = vmatpush1.xpose.msra.mxu0 0.0
    %4602 = vmatprep.subr.mxu0 0.0
    %4603 = vmatpush1.xpose.msra.mxu0 0.0
    %4604 = vmatprep.subr.mxu0 0.0
    %4605 = vmatpush1.xpose.msra.mxu0 0.0
    %4606 = vmatprep.subr.mxu0 0.0
    %4607 = vmatpush1.xpose.msra.mxu0 0.0
    %4608 = vmatprep.subr.mxu0 0.0
    %4609 = vmatpush1.xpose.msra.mxu0 0.0
    %4610 = vmatprep.subr.mxu0 0.0
    %4611 = vmatpush1.xpose.msra.mxu0 0.0
    %4612 = vmatprep.subr.mxu0 0.0
    %4613 = vmatpush1.xpose.msra.mxu0 0.0
    %4614 = vmatprep.subr.mxu0 0.0
    %4615 = vmatpush1.xpose.msra.mxu0 0.0
    %4616 = vmatprep.subr.mxu0 0.0
    %4617 = vmatpush1.xpose.msra.mxu0 0.0
    %4618 = vmatprep.subr.mxu0 0.0
    %4619 = vmatpush1.xpose.msra.mxu0 0.0
    %4620 = vmatprep.subr.mxu0 0.0
    %4621 = vmatpush1.xpose.msra.mxu0 0.0
    %4622 = vmatprep.subr.mxu0 0.0
    %4623 = vmatpush1.xpose.msra.mxu0 0.0
    %4624 = vmatprep.subr.mxu0 0.0
    %4625 = vmatpush1.xpose.msra.mxu0 0.0
    %4626 = vmatprep.subr.mxu0 0.0
    %4627 = vmatpush1.xpose.msra.mxu0 0.0
    %4628 = vmatprep.mubr.f32.mxu0 0.0
    %v4629 = vand.u32 %v4382, 4294901760
    %v4630 = vsub.f32 %v4382, %v4629
    %4631 = vmatmul.mubr.f32.gmra.mrb[0].mxu0 %v4630
    %v4632 = vpop.f32.mrb[0].mxu0
    %v4633 = vadd.f32 %v4551, %v4632
    %v4634 = vpop.f32.mrb[0].mxu0
    %4635 = vmatprep.mubr.f32.mxu0 0.0
    %v4636 = vand.u32 %v4384, 4294901760
    %v4637 = vsub.f32 %v4384, %v4636
    %4638 = vmatmul.mubr.f32.gmra.mrb[0].mxu0 %v4637
    %v4639 = vpop.f32.mrb[0].mxu0
    %v4640 = vadd.f32 %v4557, %v4639
    %v4641 = vpop.f32.mrb[0].mxu0
    %4642 = vdwg.mxu0
    %4643 = vmatprep.subr.mxu0 0.0
    %v4644 = vand.u32 %v4382, 4294901760
    %4645 = vmatpush1.xpose.msra.mxu0 %v4644
    %4646 = vmatprep.subr.mxu0 0.0
    %v4647 = vand.u32 %v4384, 4294901760
    %4648 = vmatpush1.xpose.msra.mxu0 %v4647
    %4649 = vmatprep.subr.mxu0 0.0
    %4650 = vmatpush1.xpose.msra.mxu0 0.0
    %4651 = vmatprep.subr.mxu0 0.0
    %4652 = vmatpush1.xpose.msra.mxu0 0.0
    %4653 = vmatprep.subr.mxu0 0.0
    %4654 = vmatpush1.xpose.msra.mxu0 0.0
    %4655 = vmatprep.subr.mxu0 0.0
    %4656 = vmatpush1.xpose.msra.mxu0 0.0
    %4657 = vmatprep.subr.mxu0 0.0
    %4658 = vmatpush1.xpose.msra.mxu0 0.0
    %4659 = vmatprep.subr.mxu0 0.0
    %4660 = vmatpush1.xpose.msra.mxu0 0.0
    %4661 = vmatprep.subr.mxu0 0.0
    %4662 = vmatpush1.xpose.msra.mxu0 0.0
    %4663 = vmatprep.subr.mxu0 0.0
    %4664 = vmatpush1.xpose.msra.mxu0 0.0
    %4665 = vmatprep.subr.mxu0 0.0
    %4666 = vmatpush1.xpose.msra.mxu0 0.0
    %4667 = vmatprep.subr.mxu0 0.0
    %4668 = vmatpush1.xpose.msra.mxu0 0.0
    %4669 = vmatprep.subr.mxu0 0.0
    %4670 = vmatpush1.xpose.msra.mxu0 0.0
    %4671 = vmatprep.subr.mxu0 0.0
    %4672 = vmatpush1.xpose.msra.mxu0 0.0
    %4673 = vmatprep.subr.mxu0 0.0
    %4674 = vmatpush1.xpose.msra.mxu0 0.0
    %4675 = vmatprep.subr.mxu0 0.0
    %4676 = vmatpush1.xpose.msra.mxu0 0.0
    %4677 = vmatprep.subr.mxu0 0.0
    %4678 = vmatpush1.xpose.msra.mxu0 0.0
    %4679 = vmatprep.subr.mxu0 0.0
    %4680 = vmatpush1.xpose.msra.mxu0 0.0
    %4681 = vmatprep.subr.mxu0 0.0
    %4682 = vmatpush1.xpose.msra.mxu0 0.0
    %4683 = vmatprep.subr.mxu0 0.0
    %4684 = vmatpush1.xpose.msra.mxu0 0.0
    %4685 = vmatprep.subr.mxu0 0.0
    %4686 = vmatpush1.xpose.msra.mxu0 0.0
    %4687 = vmatprep.subr.mxu0 0.0
    %4688 = vmatpush1.xpose.msra.mxu0 0.0
    %4689 = vmatprep.subr.mxu0 0.0
    %4690 = vmatpush1.xpose.msra.mxu0 0.0
    %4691 = vmatprep.subr.mxu0 0.0
    %4692 = vmatpush1.xpose.msra.mxu0 0.0
    %4693 = vmatprep.subr.mxu0 0.0
    %4694 = vmatpush1.xpose.msra.mxu0 0.0
    %4695 = vmatprep.subr.mxu0 0.0
    %4696 = vmatpush1.xpose.msra.mxu0 0.0
    %4697 = vmatprep.subr.mxu0 0.0
    %4698 = vmatpush1.xpose.msra.mxu0 0.0
    %4699 = vmatprep.subr.mxu0 0.0
    %4700 = vmatpush1.xpose.msra.mxu0 0.0
    %4701 = vmatprep.subr.mxu0 0.0
    %4702 = vmatpush1.xpose.msra.mxu0 0.0
    %4703 = vmatprep.subr.mxu0 0.0
    %4704 = vmatpush1.xpose.msra.mxu0 0.0
    %4705 = vmatprep.subr.mxu0 0.0
    %4706 = vmatpush1.xpose.msra.mxu0 0.0
    %4707 = vmatprep.subr.mxu0 0.0
    %4708 = vmatpush1.xpose.msra.mxu0 0.0
    %4709 = vmatprep.mubr.f32.mxu0 0.0
    %v4710 = vand.u32 %v4382, 4294901760
    %v4711 = vsub.f32 %v4382, %v4710
    %v4712 = vand.u32 %v4711, 4294901760
    %4713 = vmatmul.mubr.f32.gmra.mrb[0].mxu0 %v4712
    %v4714 = vpop.f32.mrb[0].mxu0
    %v4715 = vadd.f32 %v4633, %v4714
    %v4716 = vpop.f32.mrb[0].mxu0
    %4717 = vmatprep.mubr.f32.mxu0 0.0
    %v4718 = vand.u32 %v4384, 4294901760
    %v4719 = vsub.f32 %v4384, %v4718
    %v4720 = vand.u32 %v4719, 4294901760
    %4721 = vmatmul.mubr.f32.gmra.mrb[0].mxu0 %v4720
    %v4722 = vpop.f32.mrb[0].mxu0
    %v4723 = vadd.f32 %v4640, %v4722
    %v4724 = vpop.f32.mrb[0].mxu0
    %4725 = vdwg.mxu0
    %4726 = vmatprep.subr.mxu0 0.0
    %v4727 = vand.u32 %v4382, 4294901760
    %v4728 = vsub.f32 %v4382, %v4727
    %v4729 = vand.u32 %v4728, 4294901760
    %4730 = vmatpush1.xpose.msra.mxu0 %v4729
    %4731 = vmatprep.subr.mxu0 0.0
    %v4732 = vand.u32 %v4384, 4294901760
    %v4733 = vsub.f32 %v4384, %v4732
    %v4734 = vand.u32 %v4733, 4294901760
    %4735 = vmatpush1.xpose.msra.mxu0 %v4734
    %4736 = vmatprep.subr.mxu0 0.0
    %4737 = vmatpush1.xpose.msra.mxu0 0.0
    %4738 = vmatprep.subr.mxu0 0.0
    %4739 = vmatpush1.xpose.msra.mxu0 0.0
    %4740 = vmatprep.subr.mxu0 0.0
    %4741 = vmatpush1.xpose.msra.mxu0 0.0
    %4742 = vmatprep.subr.mxu0 0.0
    %4743 = vmatpush1.xpose.msra.mxu0 0.0
    %4744 = vmatprep.subr.mxu0 0.0
    %4745 = vmatpush1.xpose.msra.mxu0 0.0
    %4746 = vmatprep.subr.mxu0 0.0
    %4747 = vmatpush1.xpose.msra.mxu0 0.0
    %4748 = vmatprep.subr.mxu0 0.0
    %4749 = vmatpush1.xpose.msra.mxu0 0.0
    %4750 = vmatprep.subr.mxu0 0.0
    %4751 = vmatpush1.xpose.msra.mxu0 0.0
    %4752 = vmatprep.subr.mxu0 0.0
    %4753 = vmatpush1.xpose.msra.mxu0 0.0
    %4754 = vmatprep.subr.mxu0 0.0
    %4755 = vmatpush1.xpose.msra.mxu0 0.0
    %4756 = vmatprep.subr.mxu0 0.0
    %4757 = vmatpush1.xpose.msra.mxu0 0.0
    %4758 = vmatprep.subr.mxu0 0.0
    %4759 = vmatpush1.xpose.msra.mxu0 0.0
    %4760 = vmatprep.subr.mxu0 0.0
    %4761 = vmatpush1.xpose.msra.mxu0 0.0
    %4762 = vmatprep.subr.mxu0 0.0
    %4763 = vmatpush1.xpose.msra.mxu0 0.0
    %4764 = vmatprep.subr.mxu0 0.0
    %4765 = vmatpush1.xpose.msra.mxu0 0.0
    %4766 = vmatprep.subr.mxu0 0.0
    %4767 = vmatpush1.xpose.msra.mxu0 0.0
    %4768 = vmatprep.subr.mxu0 0.0
    %4769 = vmatpush1.xpose.msra.mxu0 0.0
    %4770 = vmatprep.subr.mxu0 0.0
    %4771 = vmatpush1.xpose.msra.mxu0 0.0
    %4772 = vmatprep.subr.mxu0 0.0
    %4773 = vmatpush1.xpose.msra.mxu0 0.0
    %4774 = vmatprep.subr.mxu0 0.0
    %4775 = vmatpush1.xpose.msra.mxu0 0.0
    %4776 = vmatprep.subr.mxu0 0.0
    %4777 = vmatpush1.xpose.msra.mxu0 0.0
    %4778 = vmatprep.subr.mxu0 0.0
    %4779 = vmatpush1.xpose.msra.mxu0 0.0
    %4780 = vmatprep.subr.mxu0 0.0
    %4781 = vmatpush1.xpose.msra.mxu0 0.0
    %4782 = vmatprep.subr.mxu0 0.0
    %4783 = vmatpush1.xpose.msra.mxu0 0.0
    %4784 = vmatprep.subr.mxu0 0.0
    %4785 = vmatpush1.xpose.msra.mxu0 0.0
    %4786 = vmatprep.subr.mxu0 0.0
    %4787 = vmatpush1.xpose.msra.mxu0 0.0
    %4788 = vmatprep.subr.mxu0 0.0
    %4789 = vmatpush1.xpose.msra.mxu0 0.0
    %4790 = vmatprep.subr.mxu0 0.0
    %4791 = vmatpush1.xpose.msra.mxu0 0.0
    %4792 = vmatprep.subr.mxu0 0.0
    %4793 = vmatpush1.xpose.msra.mxu0 0.0
    %4794 = vmatprep.subr.mxu0 0.0
    %4795 = vmatpush1.xpose.msra.mxu0 0.0
    %4796 = vmatprep.mubr.f32.mxu0 0.0
    %v4797 = vand.u32 %v4382, 4294901760
    %4798 = vmatmul.mubr.f32.gmra.mrb[0].mxu0 %v4797
    %v4799 = vpop.f32.mrb[0].mxu0
    %v4800 = vadd.f32 %v4715, %v4799
    %v4801 = vpop.f32.mrb[0].mxu0
    %4802 = vmatprep.mubr.f32.mxu0 0.0
    %v4803 = vand.u32 %v4384, 4294901760
    %4804 = vmatmul.mubr.f32.gmra.mrb[0].mxu0 %v4803
    %v4805 = vpop.f32.mrb[0].mxu0
    %v4806 = vadd.f32 %v4723, %v4805
    %v4807 = vpop.f32.mrb[0].mxu0
    %4808 = vdwg.mxu0
    %4809 = vmatprep.subr.mxu0 0.0
    %v4810 = vand.u32 %v4382, 4294901760
    %4811 = vmatpush1.xpose.msra.mxu0 %v4810
    %4812 = vmatprep.subr.mxu0 0.0
    %v4813 = vand.u32 %v4384, 4294901760
    %4814 = vmatpush1.xpose.msra.mxu0 %v4813
    %4815 = vmatprep.subr.mxu0 0.0
    %4816 = vmatpush1.xpose.msra.mxu0 0.0
    %4817 = vmatprep.subr.mxu0 0.0
    %4818 = vmatpush1.xpose.msra.mxu0 0.0
    %4819 = vmatprep.subr.mxu0 0.0
    %4820 = vmatpush1.xpose.msra.mxu0 0.0
    %4821 = vmatprep.subr.mxu0 0.0
    %4822 = vmatpush1.xpose.msra.mxu0 0.0
    %4823 = vmatprep.subr.mxu0 0.0
    %4824 = vmatpush1.xpose.msra.mxu0 0.0
    %4825 = vmatprep.subr.mxu0 0.0
    %4826 = vmatpush1.xpose.msra.mxu0 0.0
    %4827 = vmatprep.subr.mxu0 0.0
    %4828 = vmatpush1.xpose.msra.mxu0 0.0
    %4829 = vmatprep.subr.mxu0 0.0
    %4830 = vmatpush1.xpose.msra.mxu0 0.0
    %4831 = vmatprep.subr.mxu0 0.0
    %4832 = vmatpush1.xpose.msra.mxu0 0.0
    %4833 = vmatprep.subr.mxu0 0.0
    %4834 = vmatpush1.xpose.msra.mxu0 0.0
    %4835 = vmatprep.subr.mxu0 0.0
    %4836 = vmatpush1.xpose.msra.mxu0 0.0
    %4837 = vmatprep.subr.mxu0 0.0
    %4838 = vmatpush1.xpose.msra.mxu0 0.0
    %4839 = vmatprep.subr.mxu0 0.0
    %4840 = vmatpush1.xpose.msra.mxu0 0.0
    %4841 = vmatprep.subr.mxu0 0.0
    %4842 = vmatpush1.xpose.msra.mxu0 0.0
    %4843 = vmatprep.subr.mxu0 0.0
    %4844 = vmatpush1.xpose.msra.mxu0 0.0
    %4845 = vmatprep.subr.mxu0 0.0
    %4846 = vmatpush1.xpose.msra.mxu0 0.0
    %4847 = vmatprep.subr.mxu0 0.0
    %4848 = vmatpush1.xpose.msra.mxu0 0.0
    %4849 = vmatprep.subr.mxu0 0.0
    %4850 = vmatpush1.xpose.msra.mxu0 0.0
    %4851 = vmatprep.subr.mxu0 0.0
    %4852 = vmatpush1.xpose.msra.mxu0 0.0
    %4853 = vmatprep.subr.mxu0 0.0
    %4854 = vmatpush1.xpose.msra.mxu0 0.0
    %4855 = vmatprep.subr.mxu0 0.0
    %4856 = vmatpush1.xpose.msra.mxu0 0.0
    %4857 = vmatprep.subr.mxu0 0.0
    %4858 = vmatpush1.xpose.msra.mxu0 0.0
    %4859 = vmatprep.subr.mxu0 0.0
    %4860 = vmatpush1.xpose.msra.mxu0 0.0
    %4861 = vmatprep.subr.mxu0 0.0
    %4862 = vmatpush1.xpose.msra.mxu0 0.0
    %4863 = vmatprep.subr.mxu0 0.0
    %4864 = vmatpush1.xpose.msra.mxu0 0.0
    %4865 = vmatprep.subr.mxu0 0.0
    %4866 = vmatpush1.xpose.msra.mxu0 0.0
    %4867 = vmatprep.subr.mxu0 0.0
    %4868 = vmatpush1.xpose.msra.mxu0 0.0
    %4869 = vmatprep.subr.mxu0 0.0
    %4870 = vmatpush1.xpose.msra.mxu0 0.0
    %4871 = vmatprep.subr.mxu0 0.0
    %4872 = vmatpush1.xpose.msra.mxu0 0.0
    %4873 = vmatprep.subr.mxu0 0.0
    %4874 = vmatpush1.xpose.msra.mxu0 0.0
    %4875 = vmatprep.mubr.f32.mxu0 0.0
    %v4876 = vand.u32 %v4382, 4294901760
    %4877 = vmatmul.mubr.f32.gmra.mrb[0].mxu0 %v4876
    %v4878 = vpop.f32.mrb[0].mxu0
    %v4879 = vadd.f32 %v4800, %v4878
    %v4880 = vpop.f32.mrb[0].mxu0
    %4881 = vmatprep.mubr.f32.mxu0 0.0
    %v4882 = vand.u32 %v4384, 4294901760
    %4883 = vmatmul.mubr.f32.gmra.mrb[0].mxu0 %v4882
    %v4884 = vpop.f32.mrb[0].mxu0
    %v4885 = vadd.f32 %v4806, %v4884
    %v4886 = vpop.f32.mrb[0].mxu0
    %4887 = vdwg.mxu0
    %v4888 = vsel %vm1728, %v4879, -inf
    %4889 = vmax.xlane.f32.xlu0 %v4888
    %v4890 = vpop.xlane.xlu0 %4889
    %v4891 = vsel %vm1728, %v4885, -inf
    %4892 = vmax.xlane.f32.xlu0 %v4891
    %v4893 = vpop.xlane.xlu0 %4892
    %v4894 = vsub.f32 %v4879, %v4890
    %v4895 = vsub.f32 %v4885, %v4893
    %v4896 = vmul.f32 %v4894, 1.442695
    %v4897 = vpow.pop %v4896
    %v4898 = vmul.f32 %v4895, 1.442695
    %v4899 = vpow.pop %v4898
    %v4900 = vsel %vm1728, %v4897, 0.0
    %4901 = vadd.xlane.f32.xlu0 %v4900
    %v4902 = vpop.xlane.xlu0 %4901
    %v4903 = vsel %vm1728, %v4899, 0.0
    %4904 = vadd.xlane.f32.xlu0 %v4903
    %v4905 = vpop.xlane.xlu0 %4904
    %v4906 = vrcp.pop %v4902
    %v4907 = vmul.f32 %v4897, %v4906
    %v4908 = vrcp.pop %v4905
    %v4909 = vmul.f32 %v4899, %v4908
    %4910 = vrot.lane.b32.xlu0 %v133, 104
    %v4911 = vpop.permute.xlu0 %4910
    %4912 = vrot.lane.b32.xlu0 %v134, 104
    %v4913 = vpop.permute.xlu0 %4912
    %v4917 = vsel %vm1728, %v4907, 0
    %v4920 = vsel %vm1728, %v4909, 0
    %4922 = vmatprep.subr.mxu0 0.0
    %v4923 = vand.u32 %v4911, 4294901760
    %4924 = vmatpush1.msra.mxu0 %v4923
    %4925 = vmatprep.subr.mxu0 0.0
    %v4926 = vand.u32 %v4913, 4294901760
    %4927 = vmatpush1.msra.mxu0 %v4926
    %4928 = vmatprep.subr.mxu0 0.0
    %4929 = vmatpush1.msra.mxu0 0.0
    %4930 = vmatprep.subr.mxu0 0.0
    %4931 = vmatpush1.msra.mxu0 0.0
    %4932 = vmatprep.subr.mxu0 0.0
    %4933 = vmatpush1.msra.mxu0 0.0
    %4934 = vmatprep.subr.mxu0 0.0
    %4935 = vmatpush1.msra.mxu0 0.0
    %4936 = vmatprep.subr.mxu0 0.0
    %4937 = vmatpush1.msra.mxu0 0.0
    %4938 = vmatprep.subr.mxu0 0.0
    %4939 = vmatpush1.msra.mxu0 0.0
    %4940 = vmatprep.subr.mxu0 0.0
    %4941 = vmatpush1.msra.mxu0 0.0
    %4942 = vmatprep.subr.mxu0 0.0
    %4943 = vmatpush1.msra.mxu0 0.0
    %4944 = vmatprep.subr.mxu0 0.0
    %4945 = vmatpush1.msra.mxu0 0.0
    %4946 = vmatprep.subr.mxu0 0.0
    %4947 = vmatpush1.msra.mxu0 0.0
    %4948 = vmatprep.subr.mxu0 0.0
    %4949 = vmatpush1.msra.mxu0 0.0
    %4950 = vmatprep.subr.mxu0 0.0
    %4951 = vmatpush1.msra.mxu0 0.0
    %4952 = vmatprep.subr.mxu0 0.0
    %4953 = vmatpush1.msra.mxu0 0.0
    %4954 = vmatprep.subr.mxu0 0.0
    %4955 = vmatpush1.msra.mxu0 0.0
    %4956 = vmatprep.subr.mxu0 0.0
    %4957 = vmatpush1.msra.mxu0 0.0
    %4958 = vmatprep.subr.mxu0 0.0
    %4959 = vmatpush1.msra.mxu0 0.0
    %4960 = vmatprep.subr.mxu0 0.0
    %4961 = vmatpush1.msra.mxu0 0.0
    %4962 = vmatprep.subr.mxu0 0.0
    %4963 = vmatpush1.msra.mxu0 0.0
    %4964 = vmatprep.subr.mxu0 0.0
    %4965 = vmatpush1.msra.mxu0 0.0
    %4966 = vmatprep.subr.mxu0 0.0
    %4967 = vmatpush1.msra.mxu0 0.0
    %4968 = vmatprep.subr.mxu0 0.0
    %4969 = vmatpush1.msra.mxu0 0.0
    %4970 = vmatprep.subr.mxu0 0.0
    %4971 = vmatpush1.msra.mxu0 0.0
    %4972 = vmatprep.subr.mxu0 0.0
    %4973 = vmatpush1.msra.mxu0 0.0
    %4974 = vmatprep.subr.mxu0 0.0
    %4975 = vmatpush1.msra.mxu0 0.0
    %4976 = vmatprep.subr.mxu0 0.0
    %4977 = vmatpush1.msra.mxu0 0.0
    %4978 = vmatprep.subr.mxu0 0.0
    %4979 = vmatpush1.msra.mxu0 0.0
    %4980 = vmatprep.subr.mxu0 0.0
    %4981 = vmatpush1.msra.mxu0 0.0
    %4982 = vmatprep.subr.mxu0 0.0
    %4983 = vmatpush1.msra.mxu0 0.0
    %4984 = vmatprep.subr.mxu0 0.0
    %4985 = vmatpush1.msra.mxu0 0.0
    %4986 = vmatprep.subr.mxu0 0.0
    %4987 = vmatpush1.msra.mxu0 0.0
    %4988 = vmatprep.mubr.f32.mxu0 0.0
    %v4989 = vand.u32 %v4917, 4294901760
    %v4990 = vsub.f32 %v4917, %v4989
    %v4991 = vand.u32 %v4990, 4294901760
    %v4992 = vsub.f32 %v4990, %v4991
    %v4993 = vand.u32 %v4992, 4294901760
    %4994 = vmatmul.mubr.f32.gmra.mrb[0].mxu0 %v4993
    %v4995 = vpop.f32.mrb[0].mxu0
    %v4996 = vadd.f32 0.0, %v4995
    %v4997 = vpop.f32.mrb[0].mxu0
    %4998 = vmatprep.mubr.f32.mxu0 0.0
    %v4999 = vand.u32 %v4920, 4294901760
    %v5000 = vsub.f32 %v4920, %v4999
    %v5001 = vand.u32 %v5000, 4294901760
    %v5002 = vsub.f32 %v5000, %v5001
    %v5003 = vand.u32 %v5002, 4294901760
    %5004 = vmatmul.mubr.f32.gmra.mrb[0].mxu0 %v5003
    %v5005 = vpop.f32.mrb[0].mxu0
    %v5006 = vadd.f32 0.0, %v5005
    %v5007 = vpop.f32.mrb[0].mxu0
    %5008 = vdwg.mxu0
    %5009 = vmatprep.subr.mxu0 0.0
    %v5010 = vand.u32 %v4911, 4294901760
    %v5011 = vsub.f32 %v4911, %v5010
    %v5012 = vand.u32 %v5011, 4294901760
    %v5013 = vsub.f32 %v5011, %v5012
    %v5014 = vand.u32 %v5013, 4294901760
    %5015 = vmatpush1.msra.mxu0 %v5014
    %5016 = vmatprep.subr.mxu0 0.0
    %v5017 = vand.u32 %v4913, 4294901760
    %v5018 = vsub.f32 %v4913, %v5017
    %v5019 = vand.u32 %v5018, 4294901760
    %v5020 = vsub.f32 %v5018, %v5019
    %v5021 = vand.u32 %v5020, 4294901760
    %5022 = vmatpush1.msra.mxu0 %v5021
    %5023 = vmatprep.subr.mxu0 0.0
    %5024 = vmatpush1.msra.mxu0 0.0
    %5025 = vmatprep.subr.mxu0 0.0
    %5026 = vmatpush1.msra.mxu0 0.0
    %5027 = vmatprep.subr.mxu0 0.0
    %5028 = vmatpush1.msra.mxu0 0.0
    %5029 = vmatprep.subr.mxu0 0.0
    %5030 = vmatpush1.msra.mxu0 0.0
    %5031 = vmatprep.subr.mxu0 0.0
    %5032 = vmatpush1.msra.mxu0 0.0
    %5033 = vmatprep.subr.mxu0 0.0
    %5034 = vmatpush1.msra.mxu0 0.0
    %5035 = vmatprep.subr.mxu0 0.0
    %5036 = vmatpush1.msra.mxu0 0.0
    %5037 = vmatprep.subr.mxu0 0.0
    %5038 = vmatpush1.msra.mxu0 0.0
    %5039 = vmatprep.subr.mxu0 0.0
    %5040 = vmatpush1.msra.mxu0 0.0
    %5041 = vmatprep.subr.mxu0 0.0
    %5042 = vmatpush1.msra.mxu0 0.0
    %5043 = vmatprep.subr.mxu0 0.0
    %5044 = vmatpush1.msra.mxu0 0.0
    %5045 = vmatprep.subr.mxu0 0.0
    %5046 = vmatpush1.msra.mxu0 0.0
    %5047 = vmatprep.subr.mxu0 0.0
    %5048 = vmatpush1.msra.mxu0 0.0
    %5049 = vmatprep.subr.mxu0 0.0
    %5050 = vmatpush1.msra.mxu0 0.0
    %5051 = vmatprep.subr.mxu0 0.0
    %5052 = vmatpush1.msra.mxu0 0.0
    %5053 = vmatprep.subr.mxu0 0.0
    %5054 = vmatpush1.msra.mxu0 0.0
    %5055 = vmatprep.subr.mxu0 0.0
    %5056 = vmatpush1.msra.mxu0 0.0
    %5057 = vmatprep.subr.mxu0 0.0
    %5058 = vmatpush1.msra.mxu0 0.0
    %5059 = vmatprep.subr.mxu0 0.0
    %5060 = vmatpush1.msra.mxu0 0.0
    %5061 = vmatprep.subr.mxu0 0.0
    %5062 = vmatpush1.msra.mxu0 0.0
    %5063 = vmatprep.subr.mxu0 0.0
    %5064 = vmatpush1.msra.mxu0 0.0
    %5065 = vmatprep.subr.mxu0 0.0
    %5066 = vmatpush1.msra.mxu0 0.0
    %5067 = vmatprep.subr.mxu0 0.0
    %5068 = vmatpush1.msra.mxu0 0.0
    %5069 = vmatprep.subr.mxu0 0.0
    %5070 = vmatpush1.msra.mxu0 0.0
    %5071 = vmatprep.subr.mxu0 0.0
    %5072 = vmatpush1.msra.mxu0 0.0
    %5073 = vmatprep.subr.mxu0 0.0
    %5074 = vmatpush1.msra.mxu0 0.0
    %5075 = vmatprep.subr.mxu0 0.0
    %5076 = vmatpush1.msra.mxu0 0.0
    %5077 = vmatprep.subr.mxu0 0.0
    %5078 = vmatpush1.msra.mxu0 0.0
    %5079 = vmatprep.subr.mxu0 0.0
    %5080 = vmatpush1.msra.mxu0 0.0
    %5081 = vmatprep.subr.mxu0 0.0
    %5082 = vmatpush1.msra.mxu0 0.0
    %5083 = vmatprep.mubr.f32.mxu0 0.0
    %v5084 = vand.u32 %v4917, 4294901760
    %5085 = vmatmul.mubr.f32.gmra.mrb[0].mxu0 %v5084
    %v5086 = vpop.f32.mrb[0].mxu0
    %v5087 = vadd.f32 %v4996, %v5086
    %v5088 = vpop.f32.mrb[0].mxu0
    %5089 = vmatprep.mubr.f32.mxu0 0.0
    %v5090 = vand.u32 %v4920, 4294901760
    %5091 = vmatmul.mubr.f32.gmra.mrb[0].mxu0 %v5090
    %v5092 = vpop.f32.mrb[0].mxu0
    %v5093 = vadd.f32 %v5006, %v5092
    %v5094 = vpop.f32.mrb[0].mxu0
    %5095 = vdwg.mxu0
    %5096 = vmatprep.subr.mxu0 0.0
    %v5097 = vand.u32 %v4911, 4294901760
    %v5098 = vsub.f32 %v4911, %v5097
    %5099 = vmatpush1.msra.mxu0 %v5098
    %5100 = vmatprep.subr.mxu0 0.0
    %v5101 = vand.u32 %v4913, 4294901760
    %v5102 = vsub.f32 %v4913, %v5101
    %5103 = vmatpush1.msra.mxu0 %v5102
    %5104 = vmatprep.subr.mxu0 0.0
    %5105 = vmatpush1.msra.mxu0 0.0
    %5106 = vmatprep.subr.mxu0 0.0
    %5107 = vmatpush1.msra.mxu0 0.0
    %5108 = vmatprep.subr.mxu0 0.0
    %5109 = vmatpush1.msra.mxu0 0.0
    %5110 = vmatprep.subr.mxu0 0.0
    %5111 = vmatpush1.msra.mxu0 0.0
    %5112 = vmatprep.subr.mxu0 0.0
    %5113 = vmatpush1.msra.mxu0 0.0
    %5114 = vmatprep.subr.mxu0 0.0
    %5115 = vmatpush1.msra.mxu0 0.0
    %5116 = vmatprep.subr.mxu0 0.0
    %5117 = vmatpush1.msra.mxu0 0.0
    %5118 = vmatprep.subr.mxu0 0.0
    %5119 = vmatpush1.msra.mxu0 0.0
    %5120 = vmatprep.subr.mxu0 0.0
    %5121 = vmatpush1.msra.mxu0 0.0
    %5122 = vmatprep.subr.mxu0 0.0
    %5123 = vmatpush1.msra.mxu0 0.0
    %5124 = vmatprep.subr.mxu0 0.0
    %5125 = vmatpush1.msra.mxu0 0.0
    %5126 = vmatprep.subr.mxu0 0.0
    %5127 = vmatpush1.msra.mxu0 0.0
    %5128 = vmatprep.subr.mxu0 0.0
    %5129 = vmatpush1.msra.mxu0 0.0
    %5130 = vmatprep.subr.mxu0 0.0
    %5131 = vmatpush1.msra.mxu0 0.0
    %5132 = vmatprep.subr.mxu0 0.0
    %5133 = vmatpush1.msra.mxu0 0.0
    %5134 = vmatprep.subr.mxu0 0.0
    %5135 = vmatpush1.msra.mxu0 0.0
    %5136 = vmatprep.subr.mxu0 0.0
    %5137 = vmatpush1.msra.mxu0 0.0
    %5138 = vmatprep.subr.mxu0 0.0
    %5139 = vmatpush1.msra.mxu0 0.0
    %5140 = vmatprep.subr.mxu0 0.0
    %5141 = vmatpush1.msra.mxu0 0.0
    %5142 = vmatprep.subr.mxu0 0.0
    %5143 = vmatpush1.msra.mxu0 0.0
    %5144 = vmatprep.subr.mxu0 0.0
    %5145 = vmatpush1.msra.mxu0 0.0
    %5146 = vmatprep.subr.mxu0 0.0
    %5147 = vmatpush1.msra.mxu0 0.0
    %5148 = vmatprep.subr.mxu0 0.0
    %5149 = vmatpush1.msra.mxu0 0.0
    %5150 = vmatprep.subr.mxu0 0.0
    %5151 = vmatpush1.msra.mxu0 0.0
    %5152 = vmatprep.subr.mxu0 0.0
    %5153 = vmatpush1.msra.mxu0 0.0
    %5154 = vmatprep.subr.mxu0 0.0
    %5155 = vmatpush1.msra.mxu0 0.0
    %5156 = vmatprep.subr.mxu0 0.0
    %5157 = vmatpush1.msra.mxu0 0.0
    %5158 = vmatprep.subr.mxu0 0.0
    %5159 = vmatpush1.msra.mxu0 0.0
    %5160 = vmatprep.subr.mxu0 0.0
    %5161 = vmatpush1.msra.mxu0 0.0
    %5162 = vmatprep.subr.mxu0 0.0
    %5163 = vmatpush1.msra.mxu0 0.0
    %5164 = vmatprep.mubr.f32.mxu0 0.0
    %v5165 = vand.u32 %v4917, 4294901760
    %v5166 = vsub.f32 %v4917, %v5165
    %5167 = vmatmul.mubr.f32.gmra.mrb[0].mxu0 %v5166
    %v5168 = vpop.f32.mrb[0].mxu0
    %v5169 = vadd.f32 %v5087, %v5168
    %v5170 = vpop.f32.mrb[0].mxu0
    %5171 = vmatprep.mubr.f32.mxu0 0.0
    %v5172 = vand.u32 %v4920, 4294901760
    %v5173 = vsub.f32 %v4920, %v5172
    %5174 = vmatmul.mubr.f32.gmra.mrb[0].mxu0 %v5173
    %v5175 = vpop.f32.mrb[0].mxu0
    %v5176 = vadd.f32 %v5093, %v5175
    %v5177 = vpop.f32.mrb[0].mxu0
    %5178 = vdwg.mxu0
    %5179 = vmatprep.subr.mxu0 0.0
    %v5180 = vand.u32 %v4911, 4294901760
    %5181 = vmatpush1.msra.mxu0 %v5180
    %5182 = vmatprep.subr.mxu0 0.0
    %v5183 = vand.u32 %v4913, 4294901760
    %5184 = vmatpush1.msra.mxu0 %v5183
    %5185 = vmatprep.subr.mxu0 0.0
    %5186 = vmatpush1.msra.mxu0 0.0
    %5187 = vmatprep.subr.mxu0 0.0
    %5188 = vmatpush1.msra.mxu0 0.0
    %5189 = vmatprep.subr.mxu0 0.0
    %5190 = vmatpush1.msra.mxu0 0.0
    %5191 = vmatprep.subr.mxu0 0.0
    %5192 = vmatpush1.msra.mxu0 0.0
    %5193 = vmatprep.subr.mxu0 0.0
    %5194 = vmatpush1.msra.mxu0 0.0
    %5195 = vmatprep.subr.mxu0 0.0
    %5196 = vmatpush1.msra.mxu0 0.0
    %5197 = vmatprep.subr.mxu0 0.0
    %5198 = vmatpush1.msra.mxu0 0.0
    %5199 = vmatprep.subr.mxu0 0.0
    %5200 = vmatpush1.msra.mxu0 0.0
    %5201 = vmatprep.subr.mxu0 0.0
    %5202 = vmatpush1.msra.mxu0 0.0
    %5203 = vmatprep.subr.mxu0 0.0
    %5204 = vmatpush1.msra.mxu0 0.0
    %5205 = vmatprep.subr.mxu0 0.0
    %5206 = vmatpush1.msra.mxu0 0.0
    %5207 = vmatprep.subr.mxu0 0.0
    %5208 = vmatpush1.msra.mxu0 0.0
    %5209 = vmatprep.subr.mxu0 0.0
    %5210 = vmatpush1.msra.mxu0 0.0
    %5211 = vmatprep.subr.mxu0 0.0
    %5212 = vmatpush1.msra.mxu0 0.0
    %5213 = vmatprep.subr.mxu0 0.0
    %5214 = vmatpush1.msra.mxu0 0.0
    %5215 = vmatprep.subr.mxu0 0.0
    %5216 = vmatpush1.msra.mxu0 0.0
    %5217 = vmatprep.subr.mxu0 0.0
    %5218 = vmatpush1.msra.mxu0 0.0
    %5219 = vmatprep.subr.mxu0 0.0
    %5220 = vmatpush1.msra.mxu0 0.0
    %5221 = vmatprep.subr.mxu0 0.0
    %5222 = vmatpush1.msra.mxu0 0.0
    %5223 = vmatprep.subr.mxu0 0.0
    %5224 = vmatpush1.msra.mxu0 0.0
    %5225 = vmatprep.subr.mxu0 0.0
    %5226 = vmatpush1.msra.mxu0 0.0
    %5227 = vmatprep.subr.mxu0 0.0
    %5228 = vmatpush1.msra.mxu0 0.0
    %5229 = vmatprep.subr.mxu0 0.0
    %5230 = vmatpush1.msra.mxu0 0.0
    %5231 = vmatprep.subr.mxu0 0.0
    %5232 = vmatpush1.msra.mxu0 0.0
    %5233 = vmatprep.subr.mxu0 0.0
    %5234 = vmatpush1.msra.mxu0 0.0
    %5235 = vmatprep.subr.mxu0 0.0
    %5236 = vmatpush1.msra.mxu0 0.0
    %5237 = vmatprep.subr.mxu0 0.0
    %5238 = vmatpush1.msra.mxu0 0.0
    %5239 = vmatprep.subr.mxu0 0.0
    %5240 = vmatpush1.msra.mxu0 0.0
    %5241 = vmatprep.subr.mxu0 0.0
    %5242 = vmatpush1.msra.mxu0 0.0
    %5243 = vmatprep.subr.mxu0 0.0
    %5244 = vmatpush1.msra.mxu0 0.0
    %5245 = vmatprep.mubr.f32.mxu0 0.0
    %v5246 = vand.u32 %v4917, 4294901760
    %v5247 = vsub.f32 %v4917, %v5246
    %v5248 = vand.u32 %v5247, 4294901760
    %5249 = vmatmul.mubr.f32.gmra.mrb[0].mxu0 %v5248
    %v5250 = vpop.f32.mrb[0].mxu0
    %v5251 = vadd.f32 %v5169, %v5250
    %v5252 = vpop.f32.mrb[0].mxu0
    %5253 = vmatprep.mubr.f32.mxu0 0.0
    %v5254 = vand.u32 %v4920, 4294901760
    %v5255 = vsub.f32 %v4920, %v5254
    %v5256 = vand.u32 %v5255, 4294901760
    %5257 = vmatmul.mubr.f32.gmra.mrb[0].mxu0 %v5256
    %v5258 = vpop.f32.mrb[0].mxu0
    %v5259 = vadd.f32 %v5176, %v5258
    %v5260 = vpop.f32.mrb[0].mxu0
    %5261 = vdwg.mxu0
    %5262 = vmatprep.subr.mxu0 0.0
    %v5263 = vand.u32 %v4911, 4294901760
    %v5264 = vsub.f32 %v4911, %v5263
    %v5265 = vand.u32 %v5264, 4294901760
    %5266 = vmatpush1.msra.mxu0 %v5265
    %5267 = vmatprep.subr.mxu0 0.0
    %v5268 = vand.u32 %v4913, 4294901760
    %v5269 = vsub.f32 %v4913, %v5268
    %v5270 = vand.u32 %v5269, 4294901760
    %5271 = vmatpush1.msra.mxu0 %v5270
    %5272 = vmatprep.subr.mxu0 0.0
    %5273 = vmatpush1.msra.mxu0 0.0
    %5274 = vmatprep.subr.mxu0 0.0
    %5275 = vmatpush1.msra.mxu0 0.0
    %5276 = vmatprep.subr.mxu0 0.0
    %5277 = vmatpush1.msra.mxu0 0.0
    %5278 = vmatprep.subr.mxu0 0.0
    %5279 = vmatpush1.msra.mxu0 0.0
    %5280 = vmatprep.subr.mxu0 0.0
    %5281 = vmatpush1.msra.mxu0 0.0
    %5282 = vmatprep.subr.mxu0 0.0
    %5283 = vmatpush1.msra.mxu0 0.0
    %5284 = vmatprep.subr.mxu0 0.0
    %5285 = vmatpush1.msra.mxu0 0.0
    %5286 = vmatprep.subr.mxu0 0.0
    %5287 = vmatpush1.msra.mxu0 0.0
    %5288 = vmatprep.subr.mxu0 0.0
    %5289 = vmatpush1.msra.mxu0 0.0
    %5290 = vmatprep.subr.mxu0 0.0
    %5291 = vmatpush1.msra.mxu0 0.0
    %5292 = vmatprep.subr.mxu0 0.0
    %5293 = vmatpush1.msra.mxu0 0.0
    %5294 = vmatprep.subr.mxu0 0.0
    %5295 = vmatpush1.msra.mxu0 0.0
    %5296 = vmatprep.subr.mxu0 0.0
    %5297 = vmatpush1.msra.mxu0 0.0
    %5298 = vmatprep.subr.mxu0 0.0
    %5299 = vmatpush1.msra.mxu0 0.0
    %5300 = vmatprep.subr.mxu0 0.0
    %5301 = vmatpush1.msra.mxu0 0.0
    %5302 = vmatprep.subr.mxu0 0.0
    %5303 = vmatpush1.msra.mxu0 0.0
    %5304 = vmatprep.subr.mxu0 0.0
    %5305 = vmatpush1.msra.mxu0 0.0
    %5306 = vmatprep.subr.mxu0 0.0
    %5307 = vmatpush1.msra.mxu0 0.0
    %5308 = vmatprep.subr.mxu0 0.0
    %5309 = vmatpush1.msra.mxu0 0.0
    %5310 = vmatprep.subr.mxu0 0.0
    %5311 = vmatpush1.msra.mxu0 0.0
    %5312 = vmatprep.subr.mxu0 0.0
    %5313 = vmatpush1.msra.mxu0 0.0
    %5314 = vmatprep.subr.mxu0 0.0
    %5315 = vmatpush1.msra.mxu0 0.0
    %5316 = vmatprep.subr.mxu0 0.0
    %5317 = vmatpush1.msra.mxu0 0.0
    %5318 = vmatprep.subr.mxu0 0.0
    %5319 = vmatpush1.msra.mxu0 0.0
    %5320 = vmatprep.subr.mxu0 0.0
    %5321 = vmatpush1.msra.mxu0 0.0
    %5322 = vmatprep.subr.mxu0 0.0
    %5323 = vmatpush1.msra.mxu0 0.0
    %5324 = vmatprep.subr.mxu0 0.0
    %5325 = vmatpush1.msra.mxu0 0.0
    %5326 = vmatprep.subr.mxu0 0.0
    %5327 = vmatpush1.msra.mxu0 0.0
    %5328 = vmatprep.subr.mxu0 0.0
    %5329 = vmatpush1.msra.mxu0 0.0
    %5330 = vmatprep.subr.mxu0 0.0
    %5331 = vmatpush1.msra.mxu0 0.0
    %5332 = vmatprep.mubr.f32.mxu0 0.0
    %v5333 = vand.u32 %v4917, 4294901760
    %5334 = vmatmul.mubr.f32.gmra.mrb[0].mxu0 %v5333
    %v5335 = vpop.f32.mrb[0].mxu0
    %v5336 = vadd.f32 %v5251, %v5335
    %v5337 = vpop.f32.mrb[0].mxu0
    %5338 = vmatprep.mubr.f32.mxu0 0.0
    %v5339 = vand.u32 %v4920, 4294901760
    %5340 = vmatmul.mubr.f32.gmra.mrb[0].mxu0 %v5339
    %v5341 = vpop.f32.mrb[0].mxu0
    %v5342 = vadd.f32 %v5259, %v5341
    %v5343 = vpop.f32.mrb[0].mxu0
    %5344 = vdwg.mxu0
    %5345 = vmatprep.subr.mxu0 0.0
    %v5346 = vand.u32 %v4911, 4294901760
    %5347 = vmatpush1.msra.mxu0 %v5346
    %5348 = vmatprep.subr.mxu0 0.0
    %v5349 = vand.u32 %v4913, 4294901760
    %5350 = vmatpush1.msra.mxu0 %v5349
    %5351 = vmatprep.subr.mxu0 0.0
    %5352 = vmatpush1.msra.mxu0 0.0
    %5353 = vmatprep.subr.mxu0 0.0
    %5354 = vmatpush1.msra.mxu0 0.0
    %5355 = vmatprep.subr.mxu0 0.0
    %5356 = vmatpush1.msra.mxu0 0.0
    %5357 = vmatprep.subr.mxu0 0.0
    %5358 = vmatpush1.msra.mxu0 0.0
    %5359 = vmatprep.subr.mxu0 0.0
    %5360 = vmatpush1.msra.mxu0 0.0
    %5361 = vmatprep.subr.mxu0 0.0
    %5362 = vmatpush1.msra.mxu0 0.0
    %5363 = vmatprep.subr.mxu0 0.0
    %5364 = vmatpush1.msra.mxu0 0.0
    %5365 = vmatprep.subr.mxu0 0.0
    %5366 = vmatpush1.msra.mxu0 0.0
    %5367 = vmatprep.subr.mxu0 0.0
    %5368 = vmatpush1.msra.mxu0 0.0
    %5369 = vmatprep.subr.mxu0 0.0
    %5370 = vmatpush1.msra.mxu0 0.0
    %5371 = vmatprep.subr.mxu0 0.0
    %5372 = vmatpush1.msra.mxu0 0.0
    %5373 = vmatprep.subr.mxu0 0.0
    %5374 = vmatpush1.msra.mxu0 0.0
    %5375 = vmatprep.subr.mxu0 0.0
    %5376 = vmatpush1.msra.mxu0 0.0
    %5377 = vmatprep.subr.mxu0 0.0
    %5378 = vmatpush1.msra.mxu0 0.0
    %5379 = vmatprep.subr.mxu0 0.0
    %5380 = vmatpush1.msra.mxu0 0.0
    %5381 = vmatprep.subr.mxu0 0.0
    %5382 = vmatpush1.msra.mxu0 0.0
    %5383 = vmatprep.subr.mxu0 0.0
    %5384 = vmatpush1.msra.mxu0 0.0
    %5385 = vmatprep.subr.mxu0 0.0
    %5386 = vmatpush1.msra.mxu0 0.0
    %5387 = vmatprep.subr.mxu0 0.0
    %5388 = vmatpush1.msra.mxu0 0.0
    %5389 = vmatprep.subr.mxu0 0.0
    %5390 = vmatpush1.msra.mxu0 0.0
    %5391 = vmatprep.subr.mxu0 0.0
    %5392 = vmatpush1.msra.mxu0 0.0
    %5393 = vmatprep.subr.mxu0 0.0
    %5394 = vmatpush1.msra.mxu0 0.0
    %5395 = vmatprep.subr.mxu0 0.0
    %5396 = vmatpush1.msra.mxu0 0.0
    %5397 = vmatprep.subr.mxu0 0.0
    %5398 = vmatpush1.msra.mxu0 0.0
    %5399 = vmatprep.subr.mxu0 0.0
    %5400 = vmatpush1.msra.mxu0 0.0
    %5401 = vmatprep.subr.mxu0 0.0
    %5402 = vmatpush1.msra.mxu0 0.0
    %5403 = vmatprep.subr.mxu0 0.0
    %5404 = vmatpush1.msra.mxu0 0.0
    %5405 = vmatprep.subr.mxu0 0.0
    %5406 = vmatpush1.msra.mxu0 0.0
    %5407 = vmatprep.subr.mxu0 0.0
    %5408 = vmatpush1.msra.mxu0 0.0
    %5409 = vmatprep.subr.mxu0 0.0
    %5410 = vmatpush1.msra.mxu0 0.0
    %5411 = vmatprep.mubr.f32.mxu0 0.0
    %v5412 = vand.u32 %v4917, 4294901760
    %5413 = vmatmul.mubr.f32.gmra.mrb[0].mxu0 %v5412
    %v5414 = vpop.f32.mrb[0].mxu0
    %v5415 = vadd.f32 %v5336, %v5414
    %v5416 = vpop.f32.mrb[0].mxu0
    %5417 = vmatprep.mubr.f32.mxu0 0.0
    %v5418 = vand.u32 %v4920, 4294901760
    %5419 = vmatmul.mubr.f32.gmra.mrb[0].mxu0 %v5418
    %v5420 = vpop.f32.mrb[0].mxu0
    %v5421 = vadd.f32 %v5342, %v5420
    %v5422 = vpop.f32.mrb[0].mxu0
    %5423 = vdwg.mxu0
    %5426 = vrot.lane.b32.xlu0 %v5415, 24
    %v5427 = vpop.permute.xlu0 %5426
    %5428 = vrot.lane.b32.xlu0 %v5421, 24
    %v5429 = vpop.permute.xlu0 %5428
    %vm5432 = vcmask 261312
    %5433 = vst.msk [vmem:[#allocation2] sm:$0xff] %vm5432, %v5427
    %5434 = vst.msk [vmem:[#allocation2 + $0x8] sm:$0xff] %vm5432, %v5429
    %v5435 = vld [vmem:[#allocation2] sm:$0xff]
    %v5436 = vld [vmem:[#allocation2 + $0x8] sm:$0xff]
    %v5437 = vld [vmem:[%s1 + $0x10] sm:$0xf]
    %v5438 = vld [vmem:[%s1 + $0x14] sm:$0xf]
    %v5439 = vld [vmem:[%s1 + $0x18] sm:$0xf]
    %v5440 = vld [vmem:[%s1 + $0x1c] sm:$0xf]
    %v5441 = vld [vmem:[%s7 + $0x2] sm:$0x1]
    %v5442 = vand.u32 2147483647, %v5435
    %v5443 = vand.u32 2147483647, %v5436
    %v5444 = vsel %vm41, %v5442, -inf
    %5445 = vmax.xlane.f32.xlu0 %v5444
    %v5446 = vpop.xlane.xlu0 %5445
    %v5447 = vsel %vm41, %v5443, -inf
    %5448 = vmax.xlane.f32.xlu0 %v5447
    %v5449 = vpop.xlane.xlu0 %5448
    %v5450 = vmax.f32 %v5446, 1e-06
    %v5451 = vmax.f32 %v5449, 1e-06
    %v5452 = vrcp.pop %v5450
    %v5453 = vmul.f32 %v5435, %v5452
    %v5454 = vrcp.pop %v5451
    %v5455 = vmul.f32 %v5436, %v5454
    %v5456 = vmul.f32 %v5453, 7.0
    %v5457 = vmul.f32 %v5455, 7.0
    %v5458 = vround.ne.pseudo %v5456
    %v5459 = vround.ne.pseudo %v5457
    %v5460 = vmax.f32 %v5458, -8.0
    %v5461 = vmax.f32 %v5459, -8.0
    %v5462 = vmin.f32 %v5460, 7.0
    %v5463 = vmin.f32 %v5461, 7.0
    %v5464 = vpack.c.bf16 %v5463, %v5462
    %v5469 = vunpack.c.l.b16 %v5437
    %v5470 = vunpack.c.l.b16 %v5438
    %v5471 = vunpack.c.l.b16 %v5439
    %v5472 = vunpack.c.l.b16 %v5440
    %v5473 = vpack.c.b16 %v5470, %v5469
    %v5474 = vpack.c.b16 %v5472, %v5471
    %v5478 = vsel %vm41, %v5464, 0
    %5480 = vmatprep.subr.bf16.mxu0 0
    %5481 = vmatpush1.bf16.msra.mxu0 %v5473
    %5482 = vmatprep.subr.bf16.mxu0 0
    %5483 = vmatpush1.bf16.msra.mxu0 %v5474
    %5484 = vmatprep.subr.bf16.mxu0 0
    %5485 = vmatpush1.bf16.msra.mxu0 0
    %5486 = vmatprep.subr.bf16.mxu0 0
    %5487 = vmatpush1.bf16.msra.mxu0 0
    %5488 = vmatprep.subr.bf16.mxu0 0
    %5489 = vmatpush1.bf16.msra.mxu0 0
    %5490 = vmatprep.subr.bf16.mxu0 0
    %5491 = vmatpush1.bf16.msra.mxu0 0
    %5492 = vmatprep.subr.bf16.mxu0 0
    %5493 = vmatpush1.bf16.msra.mxu0 0
    %5494 = vmatprep.subr.bf16.mxu0 0
    %5495 = vmatpush1.bf16.msra.mxu0 0
    %5496 = vmatprep.subr.bf16.mxu0 0
    %5497 = vmatpush1.bf16.msra.mxu0 0
    %5498 = vmatprep.subr.bf16.mxu0 0
    %5499 = vmatpush1.bf16.msra.mxu0 0
    %5500 = vmatprep.subr.bf16.mxu0 0
    %5501 = vmatpush1.bf16.msra.mxu0 0
    %5502 = vmatprep.subr.bf16.mxu0 0
    %5503 = vmatpush1.bf16.msra.mxu0 0
    %5504 = vmatprep.subr.bf16.mxu0 0
    %5505 = vmatpush1.bf16.msra.mxu0 0
    %5506 = vmatprep.subr.bf16.mxu0 0
    %5507 = vmatpush1.bf16.msra.mxu0 0
    %5508 = vmatprep.subr.bf16.mxu0 0
    %5509 = vmatpush1.bf16.msra.mxu0 0
    %5510 = vmatprep.subr.bf16.mxu0 0
    %5511 = vmatpush1.bf16.msra.mxu0 0
    %5512 = vmatprep.mubr.bf16.mxu0 0
    %5513 = vmatmul.mubr.bf16.gmra.mrb[0].mxu0 %v5478
    %v5514 = vpop.f32.mrb[0].mxu0
    %v5515 = vadd.f32 0.0, %v5514
    %v5516 = vpop.f32.mrb[0].mxu0
    %v5517 = vpop.f32.mrb[0].mxu0
    %v5518 = vadd.f32 0.0, %v5517
    %v5519 = vpop.f32.mrb[0].mxu0
    %5520 = vdwg.mxu0
    %v5521 = vmul.f32 %v5450, 0.14285715
    %v5522 = vmul.f32 %v5451, 0.14285715
    %v5523 = vmul.f32 %v5515, %v5521
    %v5524 = vmul.f32 %v5518, %v5522
    %v5525 = vlaneseq
    %v5526 = vshrl.u32 %v5525, 7
    %v5527 = vsub.s32 0, %v5526
    %v5528 = vrot.slane %v5441, %v5527
    %v5529 = vmul.f32 %v5523, %v5528
    %v5530 = vmul.f32 %v5524, %v5528
    %v5531 = vadd.f32 %v31, %v5529
    %v5532 = vadd.f32 %v32, %v5530
    %v5533 = vld [vmem:[%s7 + $0x3] sm:$0x1]
    %v5534 = vld [vmem:[%s7 + $0x4] sm:$0x1]
    %v5535 = vsel %vm41, %v5531, 0.0
    %5536 = vadd.xlane.f32.xlu0 %v5535
    %v5537 = vpop.xlane.xlu0 %5536
    %v5538 = vsel %vm41, %v5532, 0.0
    %5539 = vadd.xlane.f32.xlu0 %v5538
    %v5540 = vpop.xlane.xlu0 %5539
    %v5541 = vrcp.pop 32.0
    %v5542 = vmul.f32 %v5537, %v5541
    %v5543 = vmul.f32 %v5540, %v5541
    %v5544 = vsub.f32 %v5531, %v5542
    %v5545 = vsub.f32 %v5532, %v5543
    %v5546 = vmul.f32 %v5544, %v5544
    %v5547 = vmul.f32 %v5545, %v5545
    %v5548 = vsel %vm41, %v5546, 0.0
    %5549 = vadd.xlane.f32.xlu0 %v5548
    %v5550 = vpop.xlane.xlu0 %5549
    %v5551 = vsel %vm41, %v5547, 0.0
    %5552 = vadd.xlane.f32.xlu0 %v5551
    %v5553 = vpop.xlane.xlu0 %5552
    %v5554 = vmul.f32 %v5550, %v5541
    %v5555 = vmul.f32 %v5553, %v5541
    %v5556 = vadd.f32 %v5554, 1e-05
    %v5557 = vadd.f32 %v5555, 1e-05
    %v5558 = vrsqrt.pop %v5556
    %v5559 = vrsqrt.pop %v5557
    %v5560 = vmul.f32 %v5544, %v5558
    %v5561 = vmul.f32 %v5545, %v5559
    %v5562 = vlaneseq
    %v5563 = vshrl.u32 %v5562, 7
    %v5564 = vsub.s32 0, %v5563
    %v5565 = vrot.slane %v5533, %v5564
    %v5566 = vmul.f32 %v5560, %v5565
    %v5567 = vmul.f32 %v5561, %v5565
    %v5568 = vlaneseq
    %v5569 = vshrl.u32 %v5568, 7
    %v5570 = vsub.s32 0, %v5569
    %v5571 = vrot.slane %v5534, %v5570
    %v5572 = vadd.f32 %v5566, %v5571
    %v5573 = vadd.f32 %v5567, %v5571
    %v5574 = vld [vmem:[%s2] sm:$0xf]
    %v5575 = vld [vmem:[%s2 + $0x4] sm:$0xf]
    %v5576 = vld [vmem:[%s2 + $0x8] sm:$0xf]
    %v5577 = vld [vmem:[%s2 + $0xc] sm:$0xf]
    %v5578 = vld [vmem:[%s7 + $0x5] sm:$0x1]
    %v5579 = vld [vmem:[%s7 + $0x6] sm:$0x1]
    %v5580 = vand.u32 2147483647, %v5572
    %v5581 = vand.u32 2147483647, %v5573
    %v5582 = vsel %vm41, %v5580, -inf
    %5583 = vmax.xlane.f32.xlu0 %v5582
    %v5584 = vpop.xlane.xlu0 %5583
    %v5585 = vsel %vm41, %v5581, -inf
    %5586 = vmax.xlane.f32.xlu0 %v5585
    %v5587 = vpop.xlane.xlu0 %5586
    %v5588 = vmax.f32 %v5584, 1e-06
    %v5589 = vmax.f32 %v5587, 1e-06
    %v5590 = vrcp.pop %v5588
    %v5591 = vmul.f32 %v5572, %v5590
    %v5592 = vrcp.pop %v5589
    %v5593 = vmul.f32 %v5573, %v5592
    %v5594 = vmul.f32 %v5591, 7.0
    %v5595 = vmul.f32 %v5593, 7.0
    %v5596 = vround.ne.pseudo %v5594
    %v5597 = vround.ne.pseudo %v5595
    %v5598 = vmax.f32 %v5596, -8.0
    %v5599 = vmax.f32 %v5597, -8.0
    %v5600 = vmin.f32 %v5598, 7.0
    %v5601 = vmin.f32 %v5599, 7.0
    %v5602 = vpack.c.bf16 %v5601, %v5600
    %v5607 = vunpack.c.l.b16 %v5574
    %v5608 = vunpack.c.l.b16 %v5575
    %v5609 = vunpack.c.l.b16 %v5576
    %v5610 = vunpack.c.l.b16 %v5577
    %v5611 = vpack.c.b16 %v5608, %v5607
    %v5612 = vpack.c.b16 %v5610, %v5609
    %v5616 = vsel %vm41, %v5602, 0
    %5618 = vmatprep.subr.bf16.mxu0 0
    %5619 = vmatpush1.bf16.msra.mxu0 %v5611
    %5620 = vmatprep.subr.bf16.mxu0 0
    %5621 = vmatpush1.bf16.msra.mxu0 %v5612
    %5622 = vmatprep.subr.bf16.mxu0 0
    %5623 = vmatpush1.bf16.msra.mxu0 0
    %5624 = vmatprep.subr.bf16.mxu0 0
    %5625 = vmatpush1.bf16.msra.mxu0 0
    %5626 = vmatprep.subr.bf16.mxu0 0
    %5627 = vmatpush1.bf16.msra.mxu0 0
    %5628 = vmatprep.subr.bf16.mxu0 0
    %5629 = vmatpush1.bf16.msra.mxu0 0
    %5630 = vmatprep.subr.bf16.mxu0 0
    %5631 = vmatpush1.bf16.msra.mxu0 0
    %5632 = vmatprep.subr.bf16.mxu0 0
    %5633 = vmatpush1.bf16.msra.mxu0 0
    %5634 = vmatprep.subr.bf16.mxu0 0
    %5635 = vmatpush1.bf16.msra.mxu0 0
    %5636 = vmatprep.subr.bf16.mxu0 0
    %5637 = vmatpush1.bf16.msra.mxu0 0
    %5638 = vmatprep.subr.bf16.mxu0 0
    %5639 = vmatpush1.bf16.msra.mxu0 0
    %5640 = vmatprep.subr.bf16.mxu0 0
    %5641 = vmatpush1.bf16.msra.mxu0 0
    %5642 = vmatprep.subr.bf16.mxu0 0
    %5643 = vmatpush1.bf16.msra.mxu0 0
    %5644 = vmatprep.subr.bf16.mxu0 0
    %5645 = vmatpush1.bf16.msra.mxu0 0
    %5646 = vmatprep.subr.bf16.mxu0 0
    %5647 = vmatpush1.bf16.msra.mxu0 0
    %5648 = vmatprep.subr.bf16.mxu0 0
    %5649 = vmatpush1.bf16.msra.mxu0 0
    %5650 = vmatprep.mubr.bf16.mxu0 0
    %5651 = vmatmul.mubr.bf16.gmra.mrb[0].mxu0 %v5616
    %v5652 = vpop.f32.mrb[0].mxu0
    %v5653 = vadd.f32 0.0, %v5652
    %v5654 = vpop.f32.mrb[0].mxu0
    %v5655 = vpop.f32.mrb[0].mxu0
    %v5656 = vadd.f32 0.0, %v5655
    %v5657 = vpop.f32.mrb[0].mxu0
    %5658 = vdwg.mxu0
    %v5659 = vmul.f32 %v5588, 0.14285715
    %v5660 = vmul.f32 %v5589, 0.14285715
    %v5661 = vmul.f32 %v5653, %v5659
    %v5662 = vmul.f32 %v5656, %v5660
    %v5663 = vlaneseq
    %v5664 = vshrl.u32 %v5663, 7
    %v5665 = vsub.s32 0, %v5664
    %v5666 = vrot.slane %v5578, %v5665
    %v5667 = vmul.f32 %v5661, %v5666
    %v5668 = vmul.f32 %v5662, %v5666
    %v5669 = vlaneseq
    %v5670 = vshrl.u32 %v5669, 7
    %v5671 = vsub.s32 0, %v5670
    %v5672 = vrot.slane %v5579, %v5671
    %v5673 = vadd.f32 %v5667, %v5672
    %v5674 = vadd.f32 %v5668, %v5672
    %v5675 = vmul.f32 %v5673, 0.5
    %v5676 = vmul.f32 %v5674, 0.5
    %v5677 = vmul.f32 %v5673, 0.70710677
    %v5678 = vmul.f32 %v5674, 0.70710677
    %v5679 = verf.f32.pop %v5677
    %v5680 = verf.f32.pop %v5678
    %v5681 = vadd.f32 %v5679, 1.0
    %v5682 = vadd.f32 %v5680, 1.0
    %v5683 = vmul.f32 %v5675, %v5681
    %v5684 = vmul.f32 %v5676, %v5682
    %v5685 = vld [vmem:[%s3] sm:$0xf]
    %v5686 = vld [vmem:[%s3 + $0x4] sm:$0xf]
    %v5687 = vld [vmem:[%s3 + $0x8] sm:$0xf]
    %v5688 = vld [vmem:[%s3 + $0xc] sm:$0xf]
    %v5689 = vld [vmem:[%s3 + $0x10] sm:$0xf]
    %v5690 = vld [vmem:[%s3 + $0x14] sm:$0xf]
    %v5691 = vld [vmem:[%s3 + $0x18] sm:$0xf]
    %v5692 = vld [vmem:[%s3 + $0x1c] sm:$0xf]
    %v5693 = vld [vmem:[%s3 + $0x20] sm:$0xf]
    %v5694 = vld [vmem:[%s3 + $0x24] sm:$0xf]
    %v5695 = vld [vmem:[%s3 + $0x28] sm:$0xf]
    %v5696 = vld [vmem:[%s3 + $0x2c] sm:$0xf]
    %v5697 = vld [vmem:[%s3 + $0x30] sm:$0xf]
    %v5698 = vld [vmem:[%s3 + $0x34] sm:$0xf]
    %v5699 = vld [vmem:[%s3 + $0x38] sm:$0xf]
    %v5700 = vld [vmem:[%s3 + $0x3c] sm:$0xf]
    %v5701 = vld [vmem:[%s7 + $0x7] sm:$0x1]
    %v5702 = vld [vmem:[%s7 + $0x8] sm:$0x1]
    %v5703 = vand.u32 2147483647, %v5683
    %v5704 = vand.u32 2147483647, %v5684
    %5705 = vmax.xlane.f32.xlu0 %v5703
    %v5706 = vpop.xlane.xlu0 %5705
    %5707 = vmax.xlane.f32.xlu0 %v5704
    %v5708 = vpop.xlane.xlu0 %5707
    %v5709 = vmax.f32 %v5706, 1e-06
    %v5710 = vmax.f32 %v5708, 1e-06
    %v5711 = vrcp.pop %v5709
    %v5712 = vmul.f32 %v5683, %v5711
    %v5713 = vrcp.pop %v5710
    %v5714 = vmul.f32 %v5684, %v5713
    %v5715 = vmul.f32 %v5712, 7.0
    %v5716 = vmul.f32 %v5714, 7.0
    %v5717 = vround.ne.pseudo %v5715
    %v5718 = vround.ne.pseudo %v5716
    %v5719 = vmax.f32 %v5717, -8.0
    %v5720 = vmax.f32 %v5718, -8.0
    %v5721 = vmin.f32 %v5719, 7.0
    %v5722 = vmin.f32 %v5720, 7.0
    %v5723 = vpack.c.bf16 %v5722, %v5721
    %v5740 = vunpack.c.l.b16 %v5685
    %v5741 = vunpack.c.l.b16 %v5686
    %v5742 = vunpack.c.l.b16 %v5687
    %v5743 = vunpack.c.l.b16 %v5688
    %v5744 = vunpack.c.l.b16 %v5689
    %v5745 = vunpack.c.l.b16 %v5690
    %v5746 = vunpack.c.l.b16 %v5691
    %v5747 = vunpack.c.l.b16 %v5692
    %v5748 = vunpack.c.l.b16 %v5693
    %v5749 = vunpack.c.l.b16 %v5694
    %v5750 = vunpack.c.l.b16 %v5695
    %v5751 = vunpack.c.l.b16 %v5696
    %v5752 = vunpack.c.l.b16 %v5697
    %v5753 = vunpack.c.l.b16 %v5698
    %v5754 = vunpack.c.l.b16 %v5699
    %v5755 = vunpack.c.l.b16 %v5700
    %v5756 = vpack.c.b16 %v5741, %v5740
    %v5757 = vpack.c.b16 %v5743, %v5742
    %v5758 = vpack.c.b16 %v5745, %v5744
    %v5759 = vpack.c.b16 %v5747, %v5746
    %v5760 = vpack.c.b16 %v5749, %v5748
    %v5761 = vpack.c.b16 %v5751, %v5750
    %v5762 = vpack.c.b16 %v5753, %v5752
    %v5763 = vpack.c.b16 %v5755, %v5754
    %5772 = vmatprep.subr.bf16.mxu0 0
    %5773 = vmatpush1.bf16.msra.mxu0 %v5756
    %5774 = vmatprep.subr.bf16.mxu0 0
    %5775 = vmatpush1.bf16.msra.mxu0 %v5757
    %5776 = vmatprep.subr.bf16.mxu0 0
    %5777 = vmatpush1.bf16.msra.mxu0 %v5758
    %5778 = vmatprep.subr.bf16.mxu0 0
    %5779 = vmatpush1.bf16.msra.mxu0 %v5759
    %5780 = vmatprep.subr.bf16.mxu0 0
    %5781 = vmatpush1.bf16.msra.mxu0 %v5760
    %5782 = vmatprep.subr.bf16.mxu0 0
    %5783 = vmatpush1.bf16.msra.mxu0 %v5761
    %5784 = vmatprep.subr.bf16.mxu0 0
    %5785 = vmatpush1.bf16.msra.mxu0 %v5762
    %5786 = vmatprep.subr.bf16.mxu0 0
    %5787 = vmatpush1.bf16.msra.mxu0 %v5763
    %5788 = vmatprep.subr.bf16.mxu0 0
    %5789 = vmatpush1.bf16.msra.mxu0 0
    %5790 = vmatprep.subr.bf16.mxu0 0
    %5791 = vmatpush1.bf16.msra.mxu0 0
    %5792 = vmatprep.subr.bf16.mxu0 0
    %5793 = vmatpush1.bf16.msra.mxu0 0
    %5794 = vmatprep.subr.bf16.mxu0 0
    %5795 = vmatpush1.bf16.msra.mxu0 0
    %5796 = vmatprep.subr.bf16.mxu0 0
    %5797 = vmatpush1.bf16.msra.mxu0 0
    %5798 = vmatprep.subr.bf16.mxu0 0
    %5799 = vmatpush1.bf16.msra.mxu0 0
    %5800 = vmatprep.subr.bf16.mxu0 0
    %5801 = vmatpush1.bf16.msra.mxu0 0
    %5802 = vmatprep.subr.bf16.mxu0 0
    %5803 = vmatpush1.bf16.msra.mxu0 0
    %5804 = vmatprep.mubr.bf16.mxu0 0
    %5805 = vmatmul.mubr.bf16.gmra.mrb[0].mxu0 %v5723
    %v5806 = vpop.f32.mrb[0].mxu0
    %v5807 = vadd.f32 0.0, %v5806
    %v5808 = vpop.f32.mrb[0].mxu0
    %v5809 = vpop.f32.mrb[0].mxu0
    %v5810 = vadd.f32 0.0, %v5809
    %v5811 = vpop.f32.mrb[0].mxu0
    %5812 = vdwg.mxu0
    %v5813 = vmul.f32 %v5709, 0.14285715
    %v5814 = vmul.f32 %v5710, 0.14285715
    %v5815 = vmul.f32 %v5807, %v5813
    %v5816 = vmul.f32 %v5810, %v5814
    %v5817 = vlaneseq
    %v5818 = vshrl.u32 %v5817, 7
    %v5819 = vsub.s32 0, %v5818
    %v5820 = vrot.slane %v5701, %v5819
    %v5821 = vmul.f32 %v5815, %v5820
    %v5822 = vmul.f32 %v5816, %v5820
    %v5823 = vlaneseq
    %v5824 = vshrl.u32 %v5823, 7
    %v5825 = vsub.s32 0, %v5824
    %v5826 = vrot.slane %v5702, %v5825
    %v5827 = vadd.f32 %v5821, %v5826
    %v5828 = vadd.f32 %v5822, %v5826
    %v5829 = vadd.f32 %v5572, %v5827
    %v5830 = vadd.f32 %v5573, %v5828
    %v5831 = vld [vmem:[%s7 + $0x9] sm:$0x1]
    %v5832 = vld [vmem:[%s7 + $0xa] sm:$0x1]
    %v5833 = vsel %vm41, %v5829, 0.0
    %5834 = vadd.xlane.f32.xlu0 %v5833
    %v5835 = vpop.xlane.xlu0 %5834
    %v5836 = vsel %vm41, %v5830, 0.0
    %5837 = vadd.xlane.f32.xlu0 %v5836
    %v5838 = vpop.xlane.xlu0 %5837
    %v5839 = vmul.f32 %v5835, %v5541
    %v5840 = vmul.f32 %v5838, %v5541
    %v5841 = vsub.f32 %v5829, %v5839
    %v5842 = vsub.f32 %v5830, %v5840
    %v5843 = vmul.f32 %v5841, %v5841
    %v5844 = vmul.f32 %v5842, %v5842
    %v5845 = vsel %vm41, %v5843, 0.0
    %5846 = vadd.xlane.f32.xlu0 %v5845
    %v5847 = vpop.xlane.xlu0 %5846
    %v5848 = vsel %vm41, %v5844, 0.0
    %5849 = vadd.xlane.f32.xlu0 %v5848
    %v5850 = vpop.xlane.xlu0 %5849
    %v5851 = vmul.f32 %v5847, %v5541
    %v5852 = vmul.f32 %v5850, %v5541
    %v5853 = vadd.f32 %v5851, 1e-05
    %v5854 = vadd.f32 %v5852, 1e-05
    %v5855 = vrsqrt.pop %v5853
    %v5856 = vrsqrt.pop %v5854
    %v5857 = vmul.f32 %v5841, %v5855
    %v5858 = vmul.f32 %v5842, %v5856
    %v5859 = vlaneseq
    %v5860 = vshrl.u32 %v5859, 7
    %v5861 = vsub.s32 0, %v5860
    %v5862 = vrot.slane %v5831, %v5861
    %v5863 = vmul.f32 %v5857, %v5862
    %v5864 = vmul.f32 %v5858, %v5862
    %v5865 = vlaneseq
    %v5866 = vshrl.u32 %v5865, 7
    %v5867 = vsub.s32 0, %v5866
    %v5868 = vrot.slane %v5832, %v5867
    %v5869 = vadd.f32 %v5863, %v5868
    %v5870 = vadd.f32 %v5864, %v5868
    %5871 = vst.msk [vmem:[#allocation3] sm:$0xff] %vm41, %v5869
    %5872 = vst.msk [vmem:[#allocation3 + $0x8] sm:$0xff] %vm41, %v5870
    // Predicated region
    $region34: #{_pallas_block_2d.1} parent=1 // pred_check
      _
    $region35: #{_pallas_block_2d.1} parent=1 // pred_check_branch
      %5874 = sbr.rel (0) target = $region37
    $region36: #{_pallas_block_2d.1} parent=1 // pred_region
      %s5876 = ssub.s32 256, 256
      %5877 = vsyncadd [#allocation4], %s5876
      %s5878 = sshll.u32 [#allocation3], 4
      %s5879 = int_to_ptr.vmem [resolvable:$true] %s5878
      %5884 = dma.vmem_to_hbm [thread:$0]  %s5879, 256, %s8, [#allocation4], 128, 128, 8
    $region37: #{_pallas_block_2d.1} parent=1 // pred_fallthru
      _
    // Predicated region
    $region38: #{_pallas_block_2d.1} parent=1 // pred_check
      _
    $region39: #{_pallas_block_2d.1} parent=1 // pred_check_branch
      %5886 = sbr.rel (0) target = $region41
    $region40: #{_pallas_block_2d.1} parent=1 // pred_region
      %5887 = dma.done [#allocation4], 256
    $region41: #{_pallas_block_2d.1} parent=1 // pred_fallthru
      _
    %5888 = vsyncpa [#allocation4], 1

</llo_original>
